<compile_context>
chip_gen: v5e
topology: v5e:2x2
jax: 0.10.0
libtpu: 0.0.40
codegen_flags: <defaults>
</compile_context>

<pallas_src>
import functools

import jax
import jax.numpy as jnp
from jax.experimental import pallas as pl
from jax.experimental.pallas import tpu as pltpu

# Explicit scoped-VMEM limit with headroom: safe on v5e/v6e (128 MiB physical)
# and on v7x (64 MiB physical).
_VMEM_LIMIT_BYTES = 32 * 1024 * 1024


def _round_up(x, m):
    return (x + m - 1) // m * m


# ----------------------------- Pallas kernels ------------------------------

def _matmul_bias_kernel(x_ref, w_ref, b_ref, o_ref):
    # (TM, K) bf16 @ (K, N) bf16 on the MXU, f32 accumulation, + (1, N) f32 bias.
    o_ref[...] = (
        jnp.dot(x_ref[...], w_ref[...], preferred_element_type=jnp.float32)
        + b_ref[...]
    )


def _refine_fused_kernel(x_ref, w4_ref, b4_ref, w3_ref, b3_ref, o_ref):
    # Fused refine stage:
    #   r4 = conv3x3(rec, w4, pad=1); r3 = conv3x3(r4, w3, pad=1)
    #   out = clip(rec[:, :, 4:-4, 4:-4] + r3[:, :, 4:-4, 4:-4], -1, 1)
    # Only the interior needed by the final crop is computed, so the zero
    # padding of the reference convs never influences the result (all reads
    # stay inside the (H+8, W+8) frame).
    #
    # x_ref : (1, 3, H+8, W+8) rec (pixel-shuffled reconstruction)      VMEM
    # w*_ref: (27,) flat, (cout, cin, ky, kx) order                      SMEM
    # b*_ref: (3,)                                                       SMEM
    # o_ref : (1, 3, H, W)                                               VMEM
    C = 3
    _, _, Hp, Wp = x_ref.shape
    H, W = Hp - 8, Wp - 8
    Hm, Wm = H + 2, W + 2            # r4 region needed by the cropped r3

    # ---- stage 1: refine4 ("valid" 3x3 on the interior) -> 3x(1,Hm,Wm) ----
    r4 = [jnp.zeros((1, Hm, Wm), jnp.float32) for _ in range(C)]
    for i in range(C):
        for ky in range(3):
            for kx in range(3):
                # shifted view loaded once and reused for every output channel
                v = x_ref[:, i, 2 + ky:2 + ky + Hm, 2 + kx:2 + kx + Wm]
                for o in range(C):
                    wv = w4_ref[(o * C + i) * 9 + ky * 3 + kx]
                    r4[o] = r4[o] + wv * v
    for o in range(C):
        r4[o] = r4[o] + b4_ref[o]

    # ---- stage 2: refine3 ("valid" 3x3) + residual + clip on the crop ----
    acc = [jnp.zeros((1, H, W), jnp.float32) for _ in range(C)]
    for i in range(C):
        ri = r4[i]
        for ky in range(3):
            for kx in range(3):
                v = ri[:, ky:ky + H, kx:kx + W]
                for o in range(C):
                    wv = w3_ref[(o * C + i) * 9 + ky * 3 + kx]
                    acc[o] = acc[o] + wv * v
    for o in range(C):
        rec_c = x_ref[:, o, 4:4 + H, 4:4 + W]
        # TODO(synk): smooth_clip is not defined in the provided source; its
        # forward value is assumed to equal clamp(x, -1, 1).
        o_ref[:, o, :, :] = jnp.clip(rec_c + acc[o] + b3_ref[o], -1.0, 1.0)


# ------------------------------- wrappers ----------------------------------

def matmul_bias(x, w, b, *, tm_max=512):
    """Tiled (M,K)@(K,N) + b.  bf16 operands on the MXU, f32 accumulation."""
    M, K = x.shape
    Kw, N = w.shape
    assert K == Kw
    tm = min(tm_max, _round_up(M, 16))      # sublane-aligned (bf16-friendly)
    Mp = _round_up(M, tm)
    xp = x if Mp == M else jnp.pad(x, ((0, Mp - M), (0, 0)))

    out = pl.pallas_call(
        _matmul_bias_kernel,
        out_shape=jax.ShapeDtypeStruct((Mp, N), jnp.float32),
        grid=(Mp // tm,),
        in_specs=[
            pl.BlockSpec((tm, K), lambda i: (i, 0)),
            pl.BlockSpec((K, N), lambda i: (0, 0)),
            pl.BlockSpec((1, N), lambda i: (0, 0)),
        ],
        out_specs=pl.BlockSpec((tm, N), lambda i: (i, 0)),
        compiler_params=pltpu.CompilerParams(
            dimension_semantics=("parallel",),
            vmem_limit_bytes=_VMEM_LIMIT_BYTES,
        ),
    )(xp.astype(jnp.bfloat16), w.astype(jnp.bfloat16),
      b.reshape(1, N).astype(jnp.float32))
    return out if Mp == M else out[:M]


def refine_fused(rec, w4_flat, b4, w3_flat, b3):
    """clip(rec[:,:,4:-4,4:-4] + conv3(conv3(rec,w4),w3)[:,:,4:-4,4:-4], -1, 1)."""
    N, C, Hp, Wp = rec.shape
    H, W = Hp - 8, Wp - 8
    # One batch element per grid step ("parallel" -> split across TCs on v7x).
    # TODO(synk): for large (non-toy) images, additionally tile over rows with
    # a 2-pixel halo to bound per-block VMEM.
    return pl.pallas_call(
        _refine_fused_kernel,
        out_shape=jax.ShapeDtypeStruct((N, C, H, W), jnp.float32),
        grid=(N,),
        in_specs=[
            pl.BlockSpec((1, C, Hp, Wp), lambda n: (n, 0, 0, 0)),
            pl.BlockSpec(memory_space=pltpu.MemorySpace.SMEM),
            pl.BlockSpec(memory_space=pltpu.MemorySpace.SMEM),
            pl.BlockSpec(memory_space=pltpu.MemorySpace.SMEM),
            pl.BlockSpec(memory_space=pltpu.MemorySpace.SMEM),
        ],
        out_specs=pl.BlockSpec((1, C, H, W), lambda n: (n, 0, 0, 0)),
        compiler_params=pltpu.CompilerParams(
            dimension_semantics=("parallel",),
            vmem_limit_bytes=_VMEM_LIMIT_BYTES,
        ),
    )(rec.astype(jnp.float32), w4_flat, b4, w3_flat, b3)


# ----------------------------- model forward -------------------------------

def fold_params(params):
    """One-time weight preparation (hoisted out of the per-call path)."""
    enc_w2d = params["enc_w"].reshape(16, 3 * 8 * 8).T.astype(jnp.float32)   # (192,16)
    dec_w2d = params["dec_w"].reshape(8 * 8 * 3, 16).T.astype(jnp.float32)   # (16,192)
    enc_b = params["enc_b"].astype(jnp.float32)
    dec_b = params["dec_b"].astype(jnp.float32)
    # decoder(encoder(patch)) is a composition of linear maps on each patch:
    w_comb = enc_w2d @ dec_w2d                        # (192, 192)
    b_comb = enc_b @ dec_w2d + dec_b                  # (192,)
    return {
        "w_comb": w_comb.astype(jnp.bfloat16),
        "b_comb": b_comb,
        "enc_w2d": enc_w2d.astype(jnp.bfloat16),      # only used for returnfeat
        "enc_b": enc_b,
        "r3_w": params["r3_w"].reshape(-1).astype(jnp.float32),
        "r3_b": params["r3_b"].astype(jnp.float32),
        "r4_w": params["r4_w"].reshape(-1).astype(jnp.float32),
        "r4_b": params["r4_b"].astype(jnp.float32),
    }


@functools.partial(jax.jit, static_argnames=("returnfeat",))
def naive_ae_4decode_forward(x, fp, returnfeat=False):
    N, C, H, W = x.shape
    assert C == 3 and H % 8 == 0 and W % 8 == 0

    # ReflectionPad2d(4)  (data-movement glue, fused by XLA under jit)
    padx = jnp.pad(x.astype(jnp.float32), ((0, 0), (0, 0), (4, 4), (4, 4)),
                   mode="reflect")
    Hp, Wp = H + 8, W + 8
    Ph, Pw = Hp // 8, Wp // 8

    # Non-overlapping 8x8x3 patch extraction (im2col of Conv2d(3,16,k=8,s=8))
    patches = (padx.reshape(N, 3, Ph, 8, Pw, 8)
                   .transpose(0, 2, 4, 1, 3, 5)
                   .reshape(N * Ph * Pw, 3 * 8 * 8))

    # encoder ∘ decoder folded into a single 192x192 MXU matmul
    dec_flat = matmul_bias(patches, fp["w_comb"], fp["b_comb"])     # (M, 192)

    # PixelShuffle(8): (M,192) == (N,Ph,Pw,3,8,8) -> (N,3,Ph*8,Pw*8)
    rec = (dec_flat.reshape(N, Ph, Pw, 3, 8, 8)
                   .transpose(0, 3, 1, 4, 2, 5)
                   .reshape(N, 3, Hp, Wp))

    # NOTE: the reference computes `rec + refine1(refine2(rec))` and then
    # immediately overwrites it with the refine3/refine4 branch (dead code),
    # so only refine4 -> refine3 is evaluated here.
    refine = refine_fused(rec, fp["r4_w"], fp["r4_b"], fp["r3_w"], fp["r3_b"])

    if returnfeat:
        feat_flat = matmul_bias(patches, fp["enc_w2d"], fp["enc_b"])  # (M, 16)
        feat = feat_flat.reshape(N, Ph, Pw, 16).transpose(0, 3, 1, 2)
        return refine, feat
    return refine


# ----------------------------- params init ---------------------------------

def init_params(key):
    ks = jax.random.split(key, 12)

    def u(k, shape, fan_in):
        bound = float(fan_in) ** -0.5
        return jax.random.uniform(k, shape, jnp.float32, -bound, bound)

    p = {}
    p["enc_w"] = u(ks[0], (16, 3, 8, 8), 3 * 8 * 8)
    p["enc_b"] = u(ks[1], (16,), 3 * 8 * 8)
    p["dec_w"] = u(ks[2], (192, 16, 1, 1), 16)
    p["dec_b"] = u(ks[3], (192,), 16)
    for name, kw, kb in [("r1", ks[4], ks[5]), ("r2", ks[6], ks[7]),
                         ("r3", ks[8], ks[9]), ("r4", ks[10], ks[11])]:
        p[f"{name}_w"] = u(kw, (3, 3, 3, 3), 3 * 3 * 3)
        p[f"{name}_b"] = u(kb, (3,), 3 * 3 * 3)
    return p


# ----------------------- pure-XLA reference (check) -------------------------

def _reference_forward(x, params):
    hi = jax.lax.Precision.HIGHEST

    def conv(a, w, b, stride=1, pad=0):
        out = jax.lax.conv_general_dilated(
            a, w, (stride, stride), [(pad, pad), (pad, pad)],
            dimension_numbers=("NCHW", "OIHW", "NCHW"), precision=hi)
        return out + b.reshape(1, -1, 1, 1)

    padx = jnp.pad(x, ((0, 0), (0, 0), (4, 4), (4, 4)), mode="reflect")
    feat = conv(padx, params["enc_w"], params["enc_b"], stride=8)
    dec = conv(feat, params["dec_w"], params["dec_b"])
    N, _, Ph, Pw = dec.shape
    rec = (dec.reshape(N, 3, 8, 8, Ph, Pw).transpose(0, 1, 4, 2, 5, 3)
              .reshape(N, 3, Ph * 8, Pw * 8))
    r4 = conv(rec, params["r4_w"], params["r4_b"], pad=1)
    r3 = conv(r4, params["r3_w"], params["r3_b"], pad=1)
    refine = jnp.clip((rec + r3)[:, :, 4:-4, 4:-4], -1.0, 1.0)
    return refine, feat


if __name__ == "__main__":
    key = jax.random.PRNGKey(0)
    pkey, xkey = jax.random.split(key)
    params = init_params(pkey)
    folded = fold_params(params)

    x = jax.random.normal(xkey, (2, 3, 16, 16), jnp.float32)

    out = naive_ae_4decode_forward(x, folded)
    out = jax.block_until_ready(out)
    assert out.shape == (2, 3, 16, 16)
    assert bool(jnp.all(jnp.isfinite(out)))

    out_f, feat = naive_ae_4decode_forward(x, folded, returnfeat=True)
    jax.block_until_ready((out_f, feat))
    assert feat.shape == (2, 16, 3, 3)

    ref_out, ref_feat = _reference_forward(x, params)
    assert float(jnp.max(jnp.abs(out - ref_out))) < 5e-2, "refine mismatch"
    assert float(jnp.max(jnp.abs(feat - ref_feat))) < 5e-2, "feat mismatch"

    print("KERNEL_OK")
</pallas_src>

<mosaic_0001>
module attributes {stable_mosaic.version = 11 : i64} {
  func.func @_matmul_bias_kernel(%arg0: i32, %arg1: memref<32x192xbf16, #tpu.memory_space<vmem>>, %arg2: memref<192x192xbf16, #tpu.memory_space<vmem>>, %arg3: memref<1x192xf32, #tpu.memory_space<vmem>>, %arg4: memref<32x192xf32, #tpu.memory_space<vmem>>) attributes {dimension_semantics = [#tpu.dimension_semantics<parallel>], iteration_bounds = array<i64: 1>, scalar_prefetch = 0 : i64, scratch_operands = 0 : i64, tpu.core_type = #tpu.core_type<tc>, window_params = [{transform_indices = @transform_0, window_bounds = array<i64: 32, 192>}, {pipeline_mode = #tpu.pipeline_mode<synchronous>, transform_indices = @transform_1, window_bounds = array<i64: 192, 192>}, {pipeline_mode = #tpu.pipeline_mode<synchronous>, transform_indices = @transform_2, window_bounds = array<i64: 1, 192>}, {transform_indices = @transform_3, window_bounds = array<i64: 32, 192>}]} {
    %c0 = arith.constant 0 : index
    %c0_0 = arith.constant 0 : index
    %0 = vector.load %arg1[%c0, %c0_0] : memref<32x192xbf16, #tpu.memory_space<vmem>>, vector<32x192xbf16>
    %c0_1 = arith.constant 0 : index
    %c0_2 = arith.constant 0 : index
    %1 = vector.load %arg2[%c0_1, %c0_2] : memref<192x192xbf16, #tpu.memory_space<vmem>>, vector<192x192xbf16>
    %cst = arith.constant dense<0.000000e+00> : vector<32x192xf32>
    %2 = tpu.matmul %0, %1, %cst {dimension_numbers = #tpu.dot_dimension_numbers<[1], [0], [0], [1], [0, 0, 1, 1], [], []>} : vector<32x192xbf16>, vector<192x192xbf16>, vector<32x192xf32> -> vector<32x192xf32>
    %c0_3 = arith.constant 0 : index
    %c0_4 = arith.constant 0 : index
    %3 = vector.load %arg3[%c0_3, %c0_4] : memref<1x192xf32, #tpu.memory_space<vmem>>, vector<1x192xf32>
    %4 = vector.broadcast %3 : vector<1x192xf32> to vector<32x192xf32>
    %5 = arith.addf %2, %4 : vector<32x192xf32>
    %c0_5 = arith.constant 0 : index
    %c0_6 = arith.constant 0 : index
    %6 = vector.load %arg4[%c0_5, %c0_6] : memref<32x192xf32, #tpu.memory_space<vmem>>, vector<32x192xf32>
    tpu.vector_store %arg4[%c0_5, %c0_6], %5 {strides = array<i32>} : memref<32x192xf32, #tpu.memory_space<vmem>>, vector<32x192xf32>,
    return
  }
  func.func @transform_0(%arg0: i32) -> (i32, i32) {
    %c0_i32 = arith.constant 0 : i32
    %c0_i32_0 = arith.constant 0 : i32
    return %arg0, %c0_i32 : i32, i32
  }
  func.func @transform_1(%arg0: i32) -> (i32, i32) {
    %c0_i32 = arith.constant 0 : i32
    %c0_i32_0 = arith.constant 0 : i32
    %c0_i32_1 = arith.constant 0 : i32
    return %c0_i32, %c0_i32_0 : i32, i32
  }
  func.func @transform_2(%arg0: i32) -> (i32, i32) {
    %c0_i32 = arith.constant 0 : i32
    %c0_i32_0 = arith.constant 0 : i32
    %c0_i32_1 = arith.constant 0 : i32
    return %c0_i32, %c0_i32_0 : i32, i32
  }
  func.func @transform_3(%arg0: i32) -> (i32, i32) {
    %c0_i32 = arith.constant 0 : i32
    %c0_i32_0 = arith.constant 0 : i32
    return %arg0, %c0_i32 : i32, i32
  }
}

module attributes {stable_mosaic.version = 11 : i64} {
  func.func @_refine_fused_kernel(%arg0: i32, %arg1: memref<1x3x24x24xf32, #tpu.memory_space<vmem>>, %arg2: memref<81xf32, #tpu.memory_space<smem>>, %arg3: memref<3xf32, #tpu.memory_space<smem>>, %arg4: memref<81xf32, #tpu.memory_space<smem>>, %arg5: memref<3xf32, #tpu.memory_space<smem>>, %arg6: memref<1x3x16x16xf32, #tpu.memory_space<vmem>>) attributes {dimension_semantics = [#tpu.dimension_semantics<parallel>], iteration_bounds = array<i64: 2>, scalar_prefetch = 0 : i64, scratch_operands = 0 : i64, tpu.core_type = #tpu.core_type<tc>, window_params = [{transform_indices = @transform_0, window_bounds = array<i64: 1, 3, 24, 24>}, {transform_indices = @transform_1, window_bounds = array<i64: 81>}, {transform_indices = @transform_2, window_bounds = array<i64: 3>}, {transform_indices = @transform_3, window_bounds = array<i64: 81>}, {transform_indices = @transform_4, window_bounds = array<i64: 3>}, {transform_indices = @transform_5, window_bounds = array<i64: 1, 3, 16, 16>}]} {
    %cst = arith.constant 0.000000e+00 : f32
    %0 = vector.broadcast %cst : f32 to vector<1x18x18xf32>
    %cst_0 = arith.constant 0.000000e+00 : f32
    %1 = vector.broadcast %cst_0 : f32 to vector<1x18x18xf32>
    %cst_1 = arith.constant 0.000000e+00 : f32
    %2 = vector.broadcast %cst_1 : f32 to vector<1x18x18xf32>
    %c0 = arith.constant 0 : index
    %c0_2 = arith.constant 0 : index
    %c2 = arith.constant 2 : index
    %c2_3 = arith.constant 2 : index
    %3 = vector.load %arg1[%c0, %c0_2, %c2, %c2_3] : memref<1x3x24x24xf32, #tpu.memory_space<vmem>>, vector<1x1x18x18xf32>
    %4 = vector.shape_cast %3 : vector<1x1x18x18xf32> to vector<1x18x18xf32>
    %c0_4 = arith.constant 0 : index
    %5 = memref.load %arg2[%c0_4] : memref<81xf32, #tpu.memory_space<smem>>
    %6 = vector.broadcast %5 : f32 to vector<1x18x18xf32>
    %7 = arith.mulf %6, %4 : vector<1x18x18xf32>
    %8 = arith.addf %0, %7 : vector<1x18x18xf32>
    %c27 = arith.constant 27 : index
    %9 = memref.load %arg2[%c27] : memref<81xf32, #tpu.memory_space<smem>>
    %10 = vector.broadcast %9 : f32 to vector<1x18x18xf32>
    %11 = arith.mulf %10, %4 : vector<1x18x18xf32>
    %12 = arith.addf %1, %11 : vector<1x18x18xf32>
    %c54 = arith.constant 54 : index
    %13 = memref.load %arg2[%c54] : memref<81xf32, #tpu.memory_space<smem>>
    %14 = vector.broadcast %13 : f32 to vector<1x18x18xf32>
    %15 = arith.mulf %14, %4 : vector<1x18x18xf32>
    %16 = arith.addf %2, %15 : vector<1x18x18xf32>
    %c0_5 = arith.constant 0 : index
    %c0_6 = arith.constant 0 : index
    %c2_7 = arith.constant 2 : index
    %c3 = arith.constant 3 : index
    %17 = vector.load %arg1[%c0_5, %c0_6, %c2_7, %c3] : memref<1x3x24x24xf32, #tpu.memory_space<vmem>>, vector<1x1x18x18xf32>
    %18 = vector.shape_cast %17 : vector<1x1x18x18xf32> to vector<1x18x18xf32>
    %c1 = arith.constant 1 : index
    %19 = memref.load %arg2[%c1] : memref<81xf32, #tpu.memory_space<smem>>
    %20 = vector.broadcast %19 : f32 to vector<1x18x18xf32>
    %21 = arith.mulf %20, %18 : vector<1x18x18xf32>
    %22 = arith.addf %8, %21 : vector<1x18x18xf32>
    %c28 = arith.constant 28 : index
    %23 = memref.load %arg2[%c28] : memref<81xf32, #tpu.memory_space<smem>>
    %24 = vector.broadcast %23 : f32 to vector<1x18x18xf32>
    %25 = arith.mulf %24, %18 : vector<1x18x18xf32>
    %26 = arith.addf %12, %25 : vector<1x18x18xf32>
    %c55 = arith.constant 55 : index
    %27 = memref.load %arg2[%c55] : memref<81xf32, #tpu.memory_space<smem>>
    %28 = vector.broadcast %27 : f32 to vector<1x18x18xf32>
    %29 = arith.mulf %28, %18 : vector<1x18x18xf32>
    %30 = arith.addf %16, %29 : vector<1x18x18xf32>
    %c0_8 = arith.constant 0 : index
    %c0_9 = arith.constant 0 : index
    %c2_10 = arith.constant 2 : index
    %c4 = arith.constant 4 : index
    %31 = vector.load %arg1[%c0_8, %c0_9, %c2_10, %c4] : memref<1x3x24x24xf32, #tpu.memory_space<vmem>>, vector<1x1x18x18xf32>
    %32 = vector.shape_cast %31 : vector<1x1x18x18xf32> to vector<1x18x18xf32>
    %c2_11 = arith.constant 2 : index
    %33 = memref.load %arg2[%c2_11] : memref<81xf32, #tpu.memory_space<smem>>
    %34 = vector.broadcast %33 : f32 to vector<1x18x18xf32>
    %35 = arith.mulf %34, %32 : vector<1x18x18xf32>
    %36 = arith.addf %22, %35 : vector<1x18x18xf32>
    %c29 = arith.constant 29 : index
    %37 = memref.load %arg2[%c29] : memref<81xf32, #tpu.memory_space<smem>>
    %38 = vector.broadcast %37 : f32 to vector<1x18x18xf32>
    %39 = arith.mulf %38, %32 : vector<1x18x18xf32>
    %40 = arith.addf %26, %39 : vector<1x18x18xf32>
    %c56 = arith.constant 56 : index
    %41 = memref.load %arg2[%c56] : memref<81xf32, #tpu.memory_space<smem>>
    %42 = vector.broadcast %41 : f32 to vector<1x18x18xf32>
    %43 = arith.mulf %42, %32 : vector<1x18x18xf32>
    %44 = arith.addf %30, %43 : vector<1x18x18xf32>
    %c0_12 = arith.constant 0 : index
    %c0_13 = arith.constant 0 : index
    %c3_14 = arith.constant 3 : index
    %c2_15 = arith.constant 2 : index
    %45 = vector.load %arg1[%c0_12, %c0_13, %c3_14, %c2_15] : memref<1x3x24x24xf32, #tpu.memory_space<vmem>>, vector<1x1x18x18xf32>
    %46 = vector.shape_cast %45 : vector<1x1x18x18xf32> to vector<1x18x18xf32>
    %c3_16 = arith.constant 3 : index
    %47 = memref.load %arg2[%c3_16] : memref<81xf32, #tpu.memory_space<smem>>
    %48 = vector.broadcast %47 : f32 to vector<1x18x18xf32>
    %49 = arith.mulf %48, %46 : vector<1x18x18xf32>
    %50 = arith.addf %36, %49 : vector<1x18x18xf32>
    %c30 = arith.constant 30 : index
    %51 = memref.load %arg2[%c30] : memref<81xf32, #tpu.memory_space<smem>>
    %52 = vector.broadcast %51 : f32 to vector<1x18x18xf32>
    %53 = arith.mulf %52, %46 : vector<1x18x18xf32>
    %54 = arith.addf %40, %53 : vector<1x18x18xf32>
    %c57 = arith.constant 57 : index
    %55 = memref.load %arg2[%c57] : memref<81xf32, #tpu.memory_space<smem>>
    %56 = vector.broadcast %55 : f32 to vector<1x18x18xf32>
    %57 = arith.mulf %56, %46 : vector<1x18x18xf32>
    %58 = arith.addf %44, %57 : vector<1x18x18xf32>
    %c0_17 = arith.constant 0 : index
    %c0_18 = arith.constant 0 : index
    %c3_19 = arith.constant 3 : index
    %c3_20 = arith.constant 3 : index
    %59 = vector.load %arg1[%c0_17, %c0_18, %c3_19, %c3_20] : memref<1x3x24x24xf32, #tpu.memory_space<vmem>>, vector<1x1x18x18xf32>
    %60 = vector.shape_cast %59 : vector<1x1x18x18xf32> to vector<1x18x18xf32>
    %c4_21 = arith.constant 4 : index
    %61 = memref.load %arg2[%c4_21] : memref<81xf32, #tpu.memory_space<smem>>
    %62 = vector.broadcast %61 : f32 to vector<1x18x18xf32>
    %63 = arith.mulf %62, %60 : vector<1x18x18xf32>
    %64 = arith.addf %50, %63 : vector<1x18x18xf32>
    %c31 = arith.constant 31 : index
    %65 = memref.load %arg2[%c31] : memref<81xf32, #tpu.memory_space<smem>>
    %66 = vector.broadcast %65 : f32 to vector<1x18x18xf32>
    %67 = arith.mulf %66, %60 : vector<1x18x18xf32>
    %68 = arith.addf %54, %67 : vector<1x18x18xf32>
    %c58 = arith.constant 58 : index
    %69 = memref.load %arg2[%c58] : memref<81xf32, #tpu.memory_space<smem>>
    %70 = vector.broadcast %69 : f32 to vector<1x18x18xf32>
    %71 = arith.mulf %70, %60 : vector<1x18x18xf32>
    %72 = arith.addf %58, %71 : vector<1x18x18xf32>
    %c0_22 = arith.constant 0 : index
    %c0_23 = arith.constant 0 : index
    %c3_24 = arith.constant 3 : index
    %c4_25 = arith.constant 4 : index
    %73 = vector.load %arg1[%c0_22, %c0_23, %c3_24, %c4_25] : memref<1x3x24x24xf32, #tpu.memory_space<vmem>>, vector<1x1x18x18xf32>
    %74 = vector.shape_cast %73 : vector<1x1x18x18xf32> to vector<1x18x18xf32>
    %c5 = arith.constant 5 : index
    %75 = memref.load %arg2[%c5] : memref<81xf32, #tpu.memory_space<smem>>
    %76 = vector.broadcast %75 : f32 to vector<1x18x18xf32>
    %77 = arith.mulf %76, %74 : vector<1x18x18xf32>
    %78 = arith.addf %64, %77 : vector<1x18x18xf32>
    %c32 = arith.constant 32 : index
    %79 = memref.load %arg2[%c32] : memref<81xf32, #tpu.memory_space<smem>>
    %80 = vector.broadcast %79 : f32 to vector<1x18x18xf32>
    %81 = arith.mulf %80, %74 : vector<1x18x18xf32>
    %82 = arith.addf %68, %81 : vector<1x18x18xf32>
    %c59 = arith.constant 59 : index
    %83 = memref.load %arg2[%c59] : memref<81xf32, #tpu.memory_space<smem>>
    %84 = vector.broadcast %83 : f32 to vector<1x18x18xf32>
    %85 = arith.mulf %84, %74 : vector<1x18x18xf32>
    %86 = arith.addf %72, %85 : vector<1x18x18xf32>
    %c0_26 = arith.constant 0 : index
    %c0_27 = arith.constant 0 : index
    %c4_28 = arith.constant 4 : index
    %c2_29 = arith.constant 2 : index
    %87 = vector.load %arg1[%c0_26, %c0_27, %c4_28, %c2_29] : memref<1x3x24x24xf32, #tpu.memory_space<vmem>>, vector<1x1x18x18xf32>
    %88 = vector.shape_cast %87 : vector<1x1x18x18xf32> to vector<1x18x18xf32>
    %c6 = arith.constant 6 : index
    %89 = memref.load %arg2[%c6] : memref<81xf32, #tpu.memory_space<smem>>
    %90 = vector.broadcast %89 : f32 to vector<1x18x18xf32>
    %91 = arith.mulf %90, %88 : vector<1x18x18xf32>
    %92 = arith.addf %78, %91 : vector<1x18x18xf32>
    %c33 = arith.constant 33 : index
    %93 = memref.load %arg2[%c33] : memref<81xf32, #tpu.memory_space<smem>>
    %94 = vector.broadcast %93 : f32 to vector<1x18x18xf32>
    %95 = arith.mulf %94, %88 : vector<1x18x18xf32>
    %96 = arith.addf %82, %95 : vector<1x18x18xf32>
    %c60 = arith.constant 60 : index
    %97 = memref.load %arg2[%c60] : memref<81xf32, #tpu.memory_space<smem>>
    %98 = vector.broadcast %97 : f32 to vector<1x18x18xf32>
    %99 = arith.mulf %98, %88 : vector<1x18x18xf32>
    %100 = arith.addf %86, %99 : vector<1x18x18xf32>
    %c0_30 = arith.constant 0 : index
    %c0_31 = arith.constant 0 : index
    %c4_32 = arith.constant 4 : index
    %c3_33 = arith.constant 3 : index
    %101 = vector.load %arg1[%c0_30, %c0_31, %c4_32, %c3_33] : memref<1x3x24x24xf32, #tpu.memory_space<vmem>>, vector<1x1x18x18xf32>
    %102 = vector.shape_cast %101 : vector<1x1x18x18xf32> to vector<1x18x18xf32>
    %c7 = arith.constant 7 : index
    %103 = memref.load %arg2[%c7] : memref<81xf32, #tpu.memory_space<smem>>
    %104 = vector.broadcast %103 : f32 to vector<1x18x18xf32>
    %105 = arith.mulf %104, %102 : vector<1x18x18xf32>
    %106 = arith.addf %92, %105 : vector<1x18x18xf32>
    %c34 = arith.constant 34 : index
    %107 = memref.load %arg2[%c34] : memref<81xf32, #tpu.memory_space<smem>>
    %108 = vector.broadcast %107 : f32 to vector<1x18x18xf32>
    %109 = arith.mulf %108, %102 : vector<1x18x18xf32>
    %110 = arith.addf %96, %109 : vector<1x18x18xf32>
    %c61 = arith.constant 61 : index
    %111 = memref.load %arg2[%c61] : memref<81xf32, #tpu.memory_space<smem>>
    %112 = vector.broadcast %111 : f32 to vector<1x18x18xf32>
    %113 = arith.mulf %112, %102 : vector<1x18x18xf32>
    %114 = arith.addf %100, %113 : vector<1x18x18xf32>
    %c0_34 = arith.constant 0 : index
    %c0_35 = arith.constant 0 : index
    %c4_36 = arith.constant 4 : index
    %c4_37 = arith.constant 4 : index
    %115 = vector.load %arg1[%c0_34, %c0_35, %c4_36, %c4_37] : memref<1x3x24x24xf32, #tpu.memory_space<vmem>>, vector<1x1x18x18xf32>
    %116 = vector.shape_cast %115 : vector<1x1x18x18xf32> to vector<1x18x18xf32>
    %c8 = arith.constant 8 : index
    %117 = memref.load %arg2[%c8] : memref<81xf32, #tpu.memory_space<smem>>
    %118 = vector.broadcast %117 : f32 to vector<1x18x18xf32>
    %119 = arith.mulf %118, %116 : vector<1x18x18xf32>
    %120 = arith.addf %106, %119 : vector<1x18x18xf32>
    %c35 = arith.constant 35 : index
    %121 = memref.load %arg2[%c35] : memref<81xf32, #tpu.memory_space<smem>>
    %122 = vector.broadcast %121 : f32 to vector<1x18x18xf32>
    %123 = arith.mulf %122, %116 : vector<1x18x18xf32>
    %124 = arith.addf %110, %123 : vector<1x18x18xf32>
    %c62 = arith.constant 62 : index
    %125 = memref.load %arg2[%c62] : memref<81xf32, #tpu.memory_space<smem>>
    %126 = vector.broadcast %125 : f32 to vector<1x18x18xf32>
    %127 = arith.mulf %126, %116 : vector<1x18x18xf32>
    %128 = arith.addf %114, %127 : vector<1x18x18xf32>
    %c0_38 = arith.constant 0 : index
    %c1_39 = arith.constant 1 : index
    %c2_40 = arith.constant 2 : index
    %c2_41 = arith.constant 2 : index
    %129 = vector.load %arg1[%c0_38, %c1_39, %c2_40, %c2_41] : memref<1x3x24x24xf32, #tpu.memory_space<vmem>>, vector<1x1x18x18xf32>
    %130 = vector.shape_cast %129 : vector<1x1x18x18xf32> to vector<1x18x18xf32>
    %c9 = arith.constant 9 : index
    %131 = memref.load %arg2[%c9] : memref<81xf32, #tpu.memory_space<smem>>
    %132 = vector.broadcast %131 : f32 to vector<1x18x18xf32>
    %133 = arith.mulf %132, %130 : vector<1x18x18xf32>
    %134 = arith.addf %120, %133 : vector<1x18x18xf32>
    %c36 = arith.constant 36 : index
    %135 = memref.load %arg2[%c36] : memref<81xf32, #tpu.memory_space<smem>>
    %136 = vector.broadcast %135 : f32 to vector<1x18x18xf32>
    %137 = arith.mulf %136, %130 : vector<1x18x18xf32>
    %138 = arith.addf %124, %137 : vector<1x18x18xf32>
    %c63 = arith.constant 63 : index
    %139 = memref.load %arg2[%c63] : memref<81xf32, #tpu.memory_space<smem>>
    %140 = vector.broadcast %139 : f32 to vector<1x18x18xf32>
    %141 = arith.mulf %140, %130 : vector<1x18x18xf32>
    %142 = arith.addf %128, %141 : vector<1x18x18xf32>
    %c0_42 = arith.constant 0 : index
    %c1_43 = arith.constant 1 : index
    %c2_44 = arith.constant 2 : index
    %c3_45 = arith.constant 3 : index
    %143 = vector.load %arg1[%c0_42, %c1_43, %c2_44, %c3_45] : memref<1x3x24x24xf32, #tpu.memory_space<vmem>>, vector<1x1x18x18xf32>
    %144 = vector.shape_cast %143 : vector<1x1x18x18xf32> to vector<1x18x18xf32>
    %c10 = arith.constant 10 : index
    %145 = memref.load %arg2[%c10] : memref<81xf32, #tpu.memory_space<smem>>
    %146 = vector.broadcast %145 : f32 to vector<1x18x18xf32>
    %147 = arith.mulf %146, %144 : vector<1x18x18xf32>
    %148 = arith.addf %134, %147 : vector<1x18x18xf32>
    %c37 = arith.constant 37 : index
    %149 = memref.load %arg2[%c37] : memref<81xf32, #tpu.memory_space<smem>>
    %150 = vector.broadcast %149 : f32 to vector<1x18x18xf32>
    %151 = arith.mulf %150, %144 : vector<1x18x18xf32>
    %152 = arith.addf %138, %151 : vector<1x18x18xf32>
    %c64 = arith.constant 64 : index
    %153 = memref.load %arg2[%c64] : memref<81xf32, #tpu.memory_space<smem>>
    %154 = vector.broadcast %153 : f32 to vector<1x18x18xf32>
    %155 = arith.mulf %154, %144 : vector<1x18x18xf32>
    %156 = arith.addf %142, %155 : vector<1x18x18xf32>
    %c0_46 = arith.constant 0 : index
    %c1_47 = arith.constant 1 : index
    %c2_48 = arith.constant 2 : index
    %c4_49 = arith.constant 4 : index
    %157 = vector.load %arg1[%c0_46, %c1_47, %c2_48, %c4_49] : memref<1x3x24x24xf32, #tpu.memory_space<vmem>>, vector<1x1x18x18xf32>
    %158 = vector.shape_cast %157 : vector<1x1x18x18xf32> to vector<1x18x18xf32>
    %c11 = arith.constant 11 : index
    %159 = memref.load %arg2[%c11] : memref<81xf32, #tpu.memory_space<smem>>
    %160 = vector.broadcast %159 : f32 to vector<1x18x18xf32>
    %161 = arith.mulf %160, %158 : vector<1x18x18xf32>
    %162 = arith.addf %148, %161 : vector<1x18x18xf32>
    %c38 = arith.constant 38 : index
    %163 = memref.load %arg2[%c38] : memref<81xf32, #tpu.memory_space<smem>>
    %164 = vector.broadcast %163 : f32 to vector<1x18x18xf32>
    %165 = arith.mulf %164, %158 : vector<1x18x18xf32>
    %166 = arith.addf %152, %165 : vector<1x18x18xf32>
    %c65 = arith.constant 65 : index
    %167 = memref.load %arg2[%c65] : memref<81xf32, #tpu.memory_space<smem>>
    %168 = vector.broadcast %167 : f32 to vector<1x18x18xf32>
    %169 = arith.mulf %168, %158 : vector<1x18x18xf32>
    %170 = arith.addf %156, %169 : vector<1x18x18xf32>
    %c0_50 = arith.constant 0 : index
    %c1_51 = arith.constant 1 : index
    %c3_52 = arith.constant 3 : index
    %c2_53 = arith.constant 2 : index
    %171 = vector.load %arg1[%c0_50, %c1_51, %c3_52, %c2_53] : memref<1x3x24x24xf32, #tpu.memory_space<vmem>>, vector<1x1x18x18xf32>
    %172 = vector.shape_cast %171 : vector<1x1x18x18xf32> to vector<1x18x18xf32>
    %c12 = arith.constant 12 : index
    %173 = memref.load %arg2[%c12] : memref<81xf32, #tpu.memory_space<smem>>
    %174 = vector.broadcast %173 : f32 to vector<1x18x18xf32>
    %175 = arith.mulf %174, %172 : vector<1x18x18xf32>
    %176 = arith.addf %162, %175 : vector<1x18x18xf32>
    %c39 = arith.constant 39 : index
    %177 = memref.load %arg2[%c39] : memref<81xf32, #tpu.memory_space<smem>>
    %178 = vector.broadcast %177 : f32 to vector<1x18x18xf32>
    %179 = arith.mulf %178, %172 : vector<1x18x18xf32>
    %180 = arith.addf %166, %179 : vector<1x18x18xf32>
    %c66 = arith.constant 66 : index
    %181 = memref.load %arg2[%c66] : memref<81xf32, #tpu.memory_space<smem>>
    %182 = vector.broadcast %181 : f32 to vector<1x18x18xf32>
    %183 = arith.mulf %182, %172 : vector<1x18x18xf32>
    %184 = arith.addf %170, %183 : vector<1x18x18xf32>
    %c0_54 = arith.constant 0 : index
    %c1_55 = arith.constant 1 : index
    %c3_56 = arith.constant 3 : index
    %c3_57 = arith.constant 3 : index
    %185 = vector.load %arg1[%c0_54, %c1_55, %c3_56, %c3_57] : memref<1x3x24x24xf32, #tpu.memory_space<vmem>>, vector<1x1x18x18xf32>
    %186 = vector.shape_cast %185 : vector<1x1x18x18xf32> to vector<1x18x18xf32>
    %c13 = arith.constant 13 : index
    %187 = memref.load %arg2[%c13] : memref<81xf32, #tpu.memory_space<smem>>
    %188 = vector.broadcast %187 : f32 to vector<1x18x18xf32>
    %189 = arith.mulf %188, %186 : vector<1x18x18xf32>
    %190 = arith.addf %176, %189 : vector<1x18x18xf32>
    %c40 = arith.constant 40 : index
    %191 = memref.load %arg2[%c40] : memref<81xf32, #tpu.memory_space<smem>>
    %192 = vector.broadcast %191 : f32 to vector<1x18x18xf32>
    %193 = arith.mulf %192, %186 : vector<1x18x18xf32>
    %194 = arith.addf %180, %193 : vector<1x18x18xf32>
    %c67 = arith.constant 67 : index
    %195 = memref.load %arg2[%c67] : memref<81xf32, #tpu.memory_space<smem>>
    %196 = vector.broadcast %195 : f32 to vector<1x18x18xf32>
    %197 = arith.mulf %196, %186 : vector<1x18x18xf32>
    %198 = arith.addf %184, %197 : vector<1x18x18xf32>
    %c0_58 = arith.constant 0 : index
    %c1_59 = arith.constant 1 : index
    %c3_60 = arith.constant 3 : index
    %c4_61 = arith.constant 4 : index
    %199 = vector.load %arg1[%c0_58, %c1_59, %c3_60, %c4_61] : memref<1x3x24x24xf32, #tpu.memory_space<vmem>>, vector<1x1x18x18xf32>
    %200 = vector.shape_cast %199 : vector<1x1x18x18xf32> to vector<1x18x18xf32>
    %c14 = arith.constant 14 : index
    %201 = memref.load %arg2[%c14] : memref<81xf32, #tpu.memory_space<smem>>
    %202 = vector.broadcast %201 : f32 to vector<1x18x18xf32>
    %203 = arith.mulf %202, %200 : vector<1x18x18xf32>
    %204 = arith.addf %190, %203 : vector<1x18x18xf32>
    %c41 = arith.constant 41 : index
    %205 = memref.load %arg2[%c41] : memref<81xf32, #tpu.memory_space<smem>>
    %206 = vector.broadcast %205 : f32 to vector<1x18x18xf32>
    %207 = arith.mulf %206, %200 : vector<1x18x18xf32>
    %208 = arith.addf %194, %207 : vector<1x18x18xf32>
    %c68 = arith.constant 68 : index
    %209 = memref.load %arg2[%c68] : memref<81xf32, #tpu.memory_space<smem>>
    %210 = vector.broadcast %209 : f32 to vector<1x18x18xf32>
    %211 = arith.mulf %210, %200 : vector<1x18x18xf32>
    %212 = arith.addf %198, %211 : vector<1x18x18xf32>
    %c0_62 = arith.constant 0 : index
    %c1_63 = arith.constant 1 : index
    %c4_64 = arith.constant 4 : index
    %c2_65 = arith.constant 2 : index
    %213 = vector.load %arg1[%c0_62, %c1_63, %c4_64, %c2_65] : memref<1x3x24x24xf32, #tpu.memory_space<vmem>>, vector<1x1x18x18xf32>
    %214 = vector.shape_cast %213 : vector<1x1x18x18xf32> to vector<1x18x18xf32>
    %c15 = arith.constant 15 : index
    %215 = memref.load %arg2[%c15] : memref<81xf32, #tpu.memory_space<smem>>
    %216 = vector.broadcast %215 : f32 to vector<1x18x18xf32>
    %217 = arith.mulf %216, %214 : vector<1x18x18xf32>
    %218 = arith.addf %204, %217 : vector<1x18x18xf32>
    %c42 = arith.constant 42 : index
    %219 = memref.load %arg2[%c42] : memref<81xf32, #tpu.memory_space<smem>>
    %220 = vector.broadcast %219 : f32 to vector<1x18x18xf32>
    %221 = arith.mulf %220, %214 : vector<1x18x18xf32>
    %222 = arith.addf %208, %221 : vector<1x18x18xf32>
    %c69 = arith.constant 69 : index
    %223 = memref.load %arg2[%c69] : memref<81xf32, #tpu.memory_space<smem>>
    %224 = vector.broadcast %223 : f32 to vector<1x18x18xf32>
    %225 = arith.mulf %224, %214 : vector<1x18x18xf32>
    %226 = arith.addf %212, %225 : vector<1x18x18xf32>
    %c0_66 = arith.constant 0 : index
    %c1_67 = arith.constant 1 : index
    %c4_68 = arith.constant 4 : index
    %c3_69 = arith.constant 3 : index
    %227 = vector.load %arg1[%c0_66, %c1_67, %c4_68, %c3_69] : memref<1x3x24x24xf32, #tpu.memory_space<vmem>>, vector<1x1x18x18xf32>
    %228 = vector.shape_cast %227 : vector<1x1x18x18xf32> to vector<1x18x18xf32>
    %c16 = arith.constant 16 : index
    %229 = memref.load %arg2[%c16] : memref<81xf32, #tpu.memory_space<smem>>
    %230 = vector.broadcast %229 : f32 to vector<1x18x18xf32>
    %231 = arith.mulf %230, %228 : vector<1x18x18xf32>
    %232 = arith.addf %218, %231 : vector<1x18x18xf32>
    %c43 = arith.constant 43 : index
    %233 = memref.load %arg2[%c43] : memref<81xf32, #tpu.memory_space<smem>>
    %234 = vector.broadcast %233 : f32 to vector<1x18x18xf32>
    %235 = arith.mulf %234, %228 : vector<1x18x18xf32>
    %236 = arith.addf %222, %235 : vector<1x18x18xf32>
    %c70 = arith.constant 70 : index
    %237 = memref.load %arg2[%c70] : memref<81xf32, #tpu.memory_space<smem>>
    %238 = vector.broadcast %237 : f32 to vector<1x18x18xf32>
    %239 = arith.mulf %238, %228 : vector<1x18x18xf32>
    %240 = arith.addf %226, %239 : vector<1x18x18xf32>
    %c0_70 = arith.constant 0 : index
    %c1_71 = arith.constant 1 : index
    %c4_72 = arith.constant 4 : index
    %c4_73 = arith.constant 4 : index
    %241 = vector.load %arg1[%c0_70, %c1_71, %c4_72, %c4_73] : memref<1x3x24x24xf32, #tpu.memory_space<vmem>>, vector<1x1x18x18xf32>
    %242 = vector.shape_cast %241 : vector<1x1x18x18xf32> to vector<1x18x18xf32>
    %c17 = arith.constant 17 : index
    %243 = memref.load %arg2[%c17] : memref<81xf32, #tpu.memory_space<smem>>
    %244 = vector.broadcast %243 : f32 to vector<1x18x18xf32>
    %245 = arith.mulf %244, %242 : vector<1x18x18xf32>
    %246 = arith.addf %232, %245 : vector<1x18x18xf32>
    %c44 = arith.constant 44 : index
    %247 = memref.load %arg2[%c44] : memref<81xf32, #tpu.memory_space<smem>>
    %248 = vector.broadcast %247 : f32 to vector<1x18x18xf32>
    %249 = arith.mulf %248, %242 : vector<1x18x18xf32>
    %250 = arith.addf %236, %249 : vector<1x18x18xf32>
    %c71 = arith.constant 71 : index
    %251 = memref.load %arg2[%c71] : memref<81xf32, #tpu.memory_space<smem>>
    %252 = vector.broadcast %251 : f32 to vector<1x18x18xf32>
    %253 = arith.mulf %252, %242 : vector<1x18x18xf32>
    %254 = arith.addf %240, %253 : vector<1x18x18xf32>
    %c0_74 = arith.constant 0 : index
    %c2_75 = arith.constant 2 : index
    %c2_76 = arith.constant 2 : index
    %c2_77 = arith.constant 2 : index
    %255 = vector.load %arg1[%c0_74, %c2_75, %c2_76, %c2_77] : memref<1x3x24x24xf32, #tpu.memory_space<vmem>>, vector<1x1x18x18xf32>
    %256 = vector.shape_cast %255 : vector<1x1x18x18xf32> to vector<1x18x18xf32>
    %c18 = arith.constant 18 : index
    %257 = memref.load %arg2[%c18] : memref<81xf32, #tpu.memory_space<smem>>
    %258 = vector.broadcast %257 : f32 to vector<1x18x18xf32>
    %259 = arith.mulf %258, %256 : vector<1x18x18xf32>
    %260 = arith.addf %246, %259 : vector<1x18x18xf32>
    %c45 = arith.constant 45 : index
    %261 = memref.load %arg2[%c45] : memref<81xf32, #tpu.memory_space<smem>>
    %262 = vector.broadcast %261 : f32 to vector<1x18x18xf32>
    %263 = arith.mulf %262, %256 : vector<1x18x18xf32>
    %264 = arith.addf %250, %263 : vector<1x18x18xf32>
    %c72 = arith.constant 72 : index
    %265 = memref.load %arg2[%c72] : memref<81xf32, #tpu.memory_space<smem>>
    %266 = vector.broadcast %265 : f32 to vector<1x18x18xf32>
    %267 = arith.mulf %266, %256 : vector<1x18x18xf32>
    %268 = arith.addf %254, %267 : vector<1x18x18xf32>
    %c0_78 = arith.constant 0 : index
    %c2_79 = arith.constant 2 : index
    %c2_80 = arith.constant 2 : index
    %c3_81 = arith.constant 3 : index
    %269 = vector.load %arg1[%c0_78, %c2_79, %c2_80, %c3_81] : memref<1x3x24x24xf32, #tpu.memory_space<vmem>>, vector<1x1x18x18xf32>
    %270 = vector.shape_cast %269 : vector<1x1x18x18xf32> to vector<1x18x18xf32>
    %c19 = arith.constant 19 : index
    %271 = memref.load %arg2[%c19] : memref<81xf32, #tpu.memory_space<smem>>
    %272 = vector.broadcast %271 : f32 to vector<1x18x18xf32>
    %273 = arith.mulf %272, %270 : vector<1x18x18xf32>
    %274 = arith.addf %260, %273 : vector<1x18x18xf32>
    %c46 = arith.constant 46 : index
    %275 = memref.load %arg2[%c46] : memref<81xf32, #tpu.memory_space<smem>>
    %276 = vector.broadcast %275 : f32 to vector<1x18x18xf32>
    %277 = arith.mulf %276, %270 : vector<1x18x18xf32>
    %278 = arith.addf %264, %277 : vector<1x18x18xf32>
    %c73 = arith.constant 73 : index
    %279 = memref.load %arg2[%c73] : memref<81xf32, #tpu.memory_space<smem>>
    %280 = vector.broadcast %279 : f32 to vector<1x18x18xf32>
    %281 = arith.mulf %280, %270 : vector<1x18x18xf32>
    %282 = arith.addf %268, %281 : vector<1x18x18xf32>
    %c0_82 = arith.constant 0 : index
    %c2_83 = arith.constant 2 : index
    %c2_84 = arith.constant 2 : index
    %c4_85 = arith.constant 4 : index
    %283 = vector.load %arg1[%c0_82, %c2_83, %c2_84, %c4_85] : memref<1x3x24x24xf32, #tpu.memory_space<vmem>>, vector<1x1x18x18xf32>
    %284 = vector.shape_cast %283 : vector<1x1x18x18xf32> to vector<1x18x18xf32>
    %c20 = arith.constant 20 : index
    %285 = memref.load %arg2[%c20] : memref<81xf32, #tpu.memory_space<smem>>
    %286 = vector.broadcast %285 : f32 to vector<1x18x18xf32>
    %287 = arith.mulf %286, %284 : vector<1x18x18xf32>
    %288 = arith.addf %274, %287 : vector<1x18x18xf32>
    %c47 = arith.constant 47 : index
    %289 = memref.load %arg2[%c47] : memref<81xf32, #tpu.memory_space<smem>>
    %290 = vector.broadcast %289 : f32 to vector<1x18x18xf32>
    %291 = arith.mulf %290, %284 : vector<1x18x18xf32>
    %292 = arith.addf %278, %291 : vector<1x18x18xf32>
    %c74 = arith.constant 74 : index
    %293 = memref.load %arg2[%c74] : memref<81xf32, #tpu.memory_space<smem>>
    %294 = vector.broadcast %293 : f32 to vector<1x18x18xf32>
    %295 = arith.mulf %294, %284 : vector<1x18x18xf32>
    %296 = arith.addf %282, %295 : vector<1x18x18xf32>
    %c0_86 = arith.constant 0 : index
    %c2_87 = arith.constant 2 : index
    %c3_88 = arith.constant 3 : index
    %c2_89 = arith.constant 2 : index
    %297 = vector.load %arg1[%c0_86, %c2_87, %c3_88, %c2_89] : memref<1x3x24x24xf32, #tpu.memory_space<vmem>>, vector<1x1x18x18xf32>
    %298 = vector.shape_cast %297 : vector<1x1x18x18xf32> to vector<1x18x18xf32>
    %c21 = arith.constant 21 : index
    %299 = memref.load %arg2[%c21] : memref<81xf32, #tpu.memory_space<smem>>
    %300 = vector.broadcast %299 : f32 to vector<1x18x18xf32>
    %301 = arith.mulf %300, %298 : vector<1x18x18xf32>
    %302 = arith.addf %288, %301 : vector<1x18x18xf32>
    %c48 = arith.constant 48 : index
    %303 = memref.load %arg2[%c48] : memref<81xf32, #tpu.memory_space<smem>>
    %304 = vector.broadcast %303 : f32 to vector<1x18x18xf32>
    %305 = arith.mulf %304, %298 : vector<1x18x18xf32>
    %306 = arith.addf %292, %305 : vector<1x18x18xf32>
    %c75 = arith.constant 75 : index
    %307 = memref.load %arg2[%c75] : memref<81xf32, #tpu.memory_space<smem>>
    %308 = vector.broadcast %307 : f32 to vector<1x18x18xf32>
    %309 = arith.mulf %308, %298 : vector<1x18x18xf32>
    %310 = arith.addf %296, %309 : vector<1x18x18xf32>
    %c0_90 = arith.constant 0 : index
    %c2_91 = arith.constant 2 : index
    %c3_92 = arith.constant 3 : index
    %c3_93 = arith.constant 3 : index
    %311 = vector.load %arg1[%c0_90, %c2_91, %c3_92, %c3_93] : memref<1x3x24x24xf32, #tpu.memory_space<vmem>>, vector<1x1x18x18xf32>
    %312 = vector.shape_cast %311 : vector<1x1x18x18xf32> to vector<1x18x18xf32>
    %c22 = arith.constant 22 : index
    %313 = memref.load %arg2[%c22] : memref<81xf32, #tpu.memory_space<smem>>
    %314 = vector.broadcast %313 : f32 to vector<1x18x18xf32>
    %315 = arith.mulf %314, %312 : vector<1x18x18xf32>
    %316 = arith.addf %302, %315 : vector<1x18x18xf32>
    %c49 = arith.constant 49 : index
    %317 = memref.load %arg2[%c49] : memref<81xf32, #tpu.memory_space<smem>>
    %318 = vector.broadcast %317 : f32 to vector<1x18x18xf32>
    %319 = arith.mulf %318, %312 : vector<1x18x18xf32>
    %320 = arith.addf %306, %319 : vector<1x18x18xf32>
    %c76 = arith.constant 76 : index
    %321 = memref.load %arg2[%c76] : memref<81xf32, #tpu.memory_space<smem>>
    %322 = vector.broadcast %321 : f32 to vector<1x18x18xf32>
    %323 = arith.mulf %322, %312 : vector<1x18x18xf32>
    %324 = arith.addf %310, %323 : vector<1x18x18xf32>
    %c0_94 = arith.constant 0 : index
    %c2_95 = arith.constant 2 : index
    %c3_96 = arith.constant 3 : index
    %c4_97 = arith.constant 4 : index
    %325 = vector.load %arg1[%c0_94, %c2_95, %c3_96, %c4_97] : memref<1x3x24x24xf32, #tpu.memory_space<vmem>>, vector<1x1x18x18xf32>
    %326 = vector.shape_cast %325 : vector<1x1x18x18xf32> to vector<1x18x18xf32>
    %c23 = arith.constant 23 : index
    %327 = memref.load %arg2[%c23] : memref<81xf32, #tpu.memory_space<smem>>
    %328 = vector.broadcast %327 : f32 to vector<1x18x18xf32>
    %329 = arith.mulf %328, %326 : vector<1x18x18xf32>
    %330 = arith.addf %316, %329 : vector<1x18x18xf32>
    %c50 = arith.constant 50 : index
    %331 = memref.load %arg2[%c50] : memref<81xf32, #tpu.memory_space<smem>>
    %332 = vector.broadcast %331 : f32 to vector<1x18x18xf32>
    %333 = arith.mulf %332, %326 : vector<1x18x18xf32>
    %334 = arith.addf %320, %333 : vector<1x18x18xf32>
    %c77 = arith.constant 77 : index
    %335 = memref.load %arg2[%c77] : memref<81xf32, #tpu.memory_space<smem>>
    %336 = vector.broadcast %335 : f32 to vector<1x18x18xf32>
    %337 = arith.mulf %336, %326 : vector<1x18x18xf32>
    %338 = arith.addf %324, %337 : vector<1x18x18xf32>
    %c0_98 = arith.constant 0 : index
    %c2_99 = arith.constant 2 : index
    %c4_100 = arith.constant 4 : index
    %c2_101 = arith.constant 2 : index
    %339 = vector.load %arg1[%c0_98, %c2_99, %c4_100, %c2_101] : memref<1x3x24x24xf32, #tpu.memory_space<vmem>>, vector<1x1x18x18xf32>
    %340 = vector.shape_cast %339 : vector<1x1x18x18xf32> to vector<1x18x18xf32>
    %c24 = arith.constant 24 : index
    %341 = memref.load %arg2[%c24] : memref<81xf32, #tpu.memory_space<smem>>
    %342 = vector.broadcast %341 : f32 to vector<1x18x18xf32>
    %343 = arith.mulf %342, %340 : vector<1x18x18xf32>
    %344 = arith.addf %330, %343 : vector<1x18x18xf32>
    %c51 = arith.constant 51 : index
    %345 = memref.load %arg2[%c51] : memref<81xf32, #tpu.memory_space<smem>>
    %346 = vector.broadcast %345 : f32 to vector<1x18x18xf32>
    %347 = arith.mulf %346, %340 : vector<1x18x18xf32>
    %348 = arith.addf %334, %347 : vector<1x18x18xf32>
    %c78 = arith.constant 78 : index
    %349 = memref.load %arg2[%c78] : memref<81xf32, #tpu.memory_space<smem>>
    %350 = vector.broadcast %349 : f32 to vector<1x18x18xf32>
    %351 = arith.mulf %350, %340 : vector<1x18x18xf32>
    %352 = arith.addf %338, %351 : vector<1x18x18xf32>
    %c0_102 = arith.constant 0 : index
    %c2_103 = arith.constant 2 : index
    %c4_104 = arith.constant 4 : index
    %c3_105 = arith.constant 3 : index
    %353 = vector.load %arg1[%c0_102, %c2_103, %c4_104, %c3_105] : memref<1x3x24x24xf32, #tpu.memory_space<vmem>>, vector<1x1x18x18xf32>
    %354 = vector.shape_cast %353 : vector<1x1x18x18xf32> to vector<1x18x18xf32>
    %c25 = arith.constant 25 : index
    %355 = memref.load %arg2[%c25] : memref<81xf32, #tpu.memory_space<smem>>
    %356 = vector.broadcast %355 : f32 to vector<1x18x18xf32>
    %357 = arith.mulf %356, %354 : vector<1x18x18xf32>
    %358 = arith.addf %344, %357 : vector<1x18x18xf32>
    %c52 = arith.constant 52 : index
    %359 = memref.load %arg2[%c52] : memref<81xf32, #tpu.memory_space<smem>>
    %360 = vector.broadcast %359 : f32 to vector<1x18x18xf32>
    %361 = arith.mulf %360, %354 : vector<1x18x18xf32>
    %362 = arith.addf %348, %361 : vector<1x18x18xf32>
    %c79 = arith.constant 79 : index
    %363 = memref.load %arg2[%c79] : memref<81xf32, #tpu.memory_space<smem>>
    %364 = vector.broadcast %363 : f32 to vector<1x18x18xf32>
    %365 = arith.mulf %364, %354 : vector<1x18x18xf32>
    %366 = arith.addf %352, %365 : vector<1x18x18xf32>
    %c0_106 = arith.constant 0 : index
    %c2_107 = arith.constant 2 : index
    %c4_108 = arith.constant 4 : index
    %c4_109 = arith.constant 4 : index
    %367 = vector.load %arg1[%c0_106, %c2_107, %c4_108, %c4_109] : memref<1x3x24x24xf32, #tpu.memory_space<vmem>>, vector<1x1x18x18xf32>
    %368 = vector.shape_cast %367 : vector<1x1x18x18xf32> to vector<1x18x18xf32>
    %c26 = arith.constant 26 : index
    %369 = memref.load %arg2[%c26] : memref<81xf32, #tpu.memory_space<smem>>
    %370 = vector.broadcast %369 : f32 to vector<1x18x18xf32>
    %371 = arith.mulf %370, %368 : vector<1x18x18xf32>
    %372 = arith.addf %358, %371 : vector<1x18x18xf32>
    %c53 = arith.constant 53 : index
    %373 = memref.load %arg2[%c53] : memref<81xf32, #tpu.memory_space<smem>>
    %374 = vector.broadcast %373 : f32 to vector<1x18x18xf32>
    %375 = arith.mulf %374, %368 : vector<1x18x18xf32>
    %376 = arith.addf %362, %375 : vector<1x18x18xf32>
    %c80 = arith.constant 80 : index
    %377 = memref.load %arg2[%c80] : memref<81xf32, #tpu.memory_space<smem>>
    %378 = vector.broadcast %377 : f32 to vector<1x18x18xf32>
    %379 = arith.mulf %378, %368 : vector<1x18x18xf32>
    %380 = arith.addf %366, %379 : vector<1x18x18xf32>
    %c0_110 = arith.constant 0 : index
    %381 = memref.load %arg3[%c0_110] : memref<3xf32, #tpu.memory_space<smem>>
    %382 = vector.broadcast %381 : f32 to vector<1x18x18xf32>
    %383 = arith.addf %372, %382 : vector<1x18x18xf32>
    %c1_111 = arith.constant 1 : index
    %384 = memref.load %arg3[%c1_111] : memref<3xf32, #tpu.memory_space<smem>>
    %385 = vector.broadcast %384 : f32 to vector<1x18x18xf32>
    %386 = arith.addf %376, %385 : vector<1x18x18xf32>
    %c2_112 = arith.constant 2 : index
    %387 = memref.load %arg3[%c2_112] : memref<3xf32, #tpu.memory_space<smem>>
    %388 = vector.broadcast %387 : f32 to vector<1x18x18xf32>
    %389 = arith.addf %380, %388 : vector<1x18x18xf32>
    %cst_113 = arith.constant 0.000000e+00 : f32
    %390 = vector.broadcast %cst_113 : f32 to vector<1x16x16xf32>
    %cst_114 = arith.constant 0.000000e+00 : f32
    %391 = vector.broadcast %cst_114 : f32 to vector<1x16x16xf32>
    %cst_115 = arith.constant 0.000000e+00 : f32
    %392 = vector.broadcast %cst_115 : f32 to vector<1x16x16xf32>
    %393 = vector.extract_strided_slice %383 {offsets = [0, 0, 0], sizes = [1, 16, 16], strides = [1, 1, 1]} : vector<1x18x18xf32> to vector<1x16x16xf32>
    %c0_116 = arith.constant 0 : index
    %394 = memref.load %arg4[%c0_116] : memref<81xf32, #tpu.memory_space<smem>>
    %395 = vector.broadcast %394 : f32 to vector<1x16x16xf32>
    %396 = arith.mulf %395, %393 : vector<1x16x16xf32>
    %397 = arith.addf %390, %396 : vector<1x16x16xf32>
    %c27_117 = arith.constant 27 : index
    %398 = memref.load %arg4[%c27_117] : memref<81xf32, #tpu.memory_space<smem>>
    %399 = vector.broadcast %398 : f32 to vector<1x16x16xf32>
    %400 = arith.mulf %399, %393 : vector<1x16x16xf32>
    %401 = arith.addf %391, %400 : vector<1x16x16xf32>
    %c54_118 = arith.constant 54 : index
    %402 = memref.load %arg4[%c54_118] : memref<81xf32, #tpu.memory_space<smem>>
    %403 = vector.broadcast %402 : f32 to vector<1x16x16xf32>
    %404 = arith.mulf %403, %393 : vector<1x16x16xf32>
    %405 = arith.addf %392, %404 : vector<1x16x16xf32>
    %406 = vector.extract_strided_slice %383 {offsets = [0, 0, 1], sizes = [1, 16, 16], strides = [1, 1, 1]} : vector<1x18x18xf32> to vector<1x16x16xf32>
    %c1_119 = arith.constant 1 : index
    %407 = memref.load %arg4[%c1_119] : memref<81xf32, #tpu.memory_space<smem>>
    %408 = vector.broadcast %407 : f32 to vector<1x16x16xf32>
    %409 = arith.mulf %408, %406 : vector<1x16x16xf32>
    %410 = arith.addf %397, %409 : vector<1x16x16xf32>
    %c28_120 = arith.constant 28 : index
    %411 = memref.load %arg4[%c28_120] : memref<81xf32, #tpu.memory_space<smem>>
    %412 = vector.broadcast %411 : f32 to vector<1x16x16xf32>
    %413 = arith.mulf %412, %406 : vector<1x16x16xf32>
    %414 = arith.addf %401, %413 : vector<1x16x16xf32>
    %c55_121 = arith.constant 55 : index
    %415 = memref.load %arg4[%c55_121] : memref<81xf32, #tpu.memory_space<smem>>
    %416 = vector.broadcast %415 : f32 to vector<1x16x16xf32>
    %417 = arith.mulf %416, %406 : vector<1x16x16xf32>
    %418 = arith.addf %405, %417 : vector<1x16x16xf32>
    %419 = vector.extract_strided_slice %383 {offsets = [0, 0, 2], sizes = [1, 16, 16], strides = [1, 1, 1]} : vector<1x18x18xf32> to vector<1x16x16xf32>
    %c2_122 = arith.constant 2 : index
    %420 = memref.load %arg4[%c2_122] : memref<81xf32, #tpu.memory_space<smem>>
    %421 = vector.broadcast %420 : f32 to vector<1x16x16xf32>
    %422 = arith.mulf %421, %419 : vector<1x16x16xf32>
    %423 = arith.addf %410, %422 : vector<1x16x16xf32>
    %c29_123 = arith.constant 29 : index
    %424 = memref.load %arg4[%c29_123] : memref<81xf32, #tpu.memory_space<smem>>
    %425 = vector.broadcast %424 : f32 to vector<1x16x16xf32>
    %426 = arith.mulf %425, %419 : vector<1x16x16xf32>
    %427 = arith.addf %414, %426 : vector<1x16x16xf32>
    %c56_124 = arith.constant 56 : index
    %428 = memref.load %arg4[%c56_124] : memref<81xf32, #tpu.memory_space<smem>>
    %429 = vector.broadcast %428 : f32 to vector<1x16x16xf32>
    %430 = arith.mulf %429, %419 : vector<1x16x16xf32>
    %431 = arith.addf %418, %430 : vector<1x16x16xf32>
    %432 = vector.extract_strided_slice %383 {offsets = [0, 1, 0], sizes = [1, 16, 16], strides = [1, 1, 1]} : vector<1x18x18xf32> to vector<1x16x16xf32>
    %c3_125 = arith.constant 3 : index
    %433 = memref.load %arg4[%c3_125] : memref<81xf32, #tpu.memory_space<smem>>
    %434 = vector.broadcast %433 : f32 to vector<1x16x16xf32>
    %435 = arith.mulf %434, %432 : vector<1x16x16xf32>
    %436 = arith.addf %423, %435 : vector<1x16x16xf32>
    %c30_126 = arith.constant 30 : index
    %437 = memref.load %arg4[%c30_126] : memref<81xf32, #tpu.memory_space<smem>>
    %438 = vector.broadcast %437 : f32 to vector<1x16x16xf32>
    %439 = arith.mulf %438, %432 : vector<1x16x16xf32>
    %440 = arith.addf %427, %439 : vector<1x16x16xf32>
    %c57_127 = arith.constant 57 : index
    %441 = memref.load %arg4[%c57_127] : memref<81xf32, #tpu.memory_space<smem>>
    %442 = vector.broadcast %441 : f32 to vector<1x16x16xf32>
    %443 = arith.mulf %442, %432 : vector<1x16x16xf32>
    %444 = arith.addf %431, %443 : vector<1x16x16xf32>
    %445 = vector.extract_strided_slice %383 {offsets = [0, 1, 1], sizes = [1, 16, 16], strides = [1, 1, 1]} : vector<1x18x18xf32> to vector<1x16x16xf32>
    %c4_128 = arith.constant 4 : index
    %446 = memref.load %arg4[%c4_128] : memref<81xf32, #tpu.memory_space<smem>>
    %447 = vector.broadcast %446 : f32 to vector<1x16x16xf32>
    %448 = arith.mulf %447, %445 : vector<1x16x16xf32>
    %449 = arith.addf %436, %448 : vector<1x16x16xf32>
    %c31_129 = arith.constant 31 : index
    %450 = memref.load %arg4[%c31_129] : memref<81xf32, #tpu.memory_space<smem>>
    %451 = vector.broadcast %450 : f32 to vector<1x16x16xf32>
    %452 = arith.mulf %451, %445 : vector<1x16x16xf32>
    %453 = arith.addf %440, %452 : vector<1x16x16xf32>
    %c58_130 = arith.constant 58 : index
    %454 = memref.load %arg4[%c58_130] : memref<81xf32, #tpu.memory_space<smem>>
    %455 = vector.broadcast %454 : f32 to vector<1x16x16xf32>
    %456 = arith.mulf %455, %445 : vector<1x16x16xf32>
    %457 = arith.addf %444, %456 : vector<1x16x16xf32>
    %458 = vector.extract_strided_slice %383 {offsets = [0, 1, 2], sizes = [1, 16, 16], strides = [1, 1, 1]} : vector<1x18x18xf32> to vector<1x16x16xf32>
    %c5_131 = arith.constant 5 : index
    %459 = memref.load %arg4[%c5_131] : memref<81xf32, #tpu.memory_space<smem>>
    %460 = vector.broadcast %459 : f32 to vector<1x16x16xf32>
    %461 = arith.mulf %460, %458 : vector<1x16x16xf32>
    %462 = arith.addf %449, %461 : vector<1x16x16xf32>
    %c32_132 = arith.constant 32 : index
    %463 = memref.load %arg4[%c32_132] : memref<81xf32, #tpu.memory_space<smem>>
    %464 = vector.broadcast %463 : f32 to vector<1x16x16xf32>
    %465 = arith.mulf %464, %458 : vector<1x16x16xf32>
    %466 = arith.addf %453, %465 : vector<1x16x16xf32>
    %c59_133 = arith.constant 59 : index
    %467 = memref.load %arg4[%c59_133] : memref<81xf32, #tpu.memory_space<smem>>
    %468 = vector.broadcast %467 : f32 to vector<1x16x16xf32>
    %469 = arith.mulf %468, %458 : vector<1x16x16xf32>
    %470 = arith.addf %457, %469 : vector<1x16x16xf32>
    %471 = vector.extract_strided_slice %383 {offsets = [0, 2, 0], sizes = [1, 16, 16], strides = [1, 1, 1]} : vector<1x18x18xf32> to vector<1x16x16xf32>
    %c6_134 = arith.constant 6 : index
    %472 = memref.load %arg4[%c6_134] : memref<81xf32, #tpu.memory_space<smem>>
    %473 = vector.broadcast %472 : f32 to vector<1x16x16xf32>
    %474 = arith.mulf %473, %471 : vector<1x16x16xf32>
    %475 = arith.addf %462, %474 : vector<1x16x16xf32>
    %c33_135 = arith.constant 33 : index
    %476 = memref.load %arg4[%c33_135] : memref<81xf32, #tpu.memory_space<smem>>
    %477 = vector.broadcast %476 : f32 to vector<1x16x16xf32>
    %478 = arith.mulf %477, %471 : vector<1x16x16xf32>
    %479 = arith.addf %466, %478 : vector<1x16x16xf32>
    %c60_136 = arith.constant 60 : index
    %480 = memref.load %arg4[%c60_136] : memref<81xf32, #tpu.memory_space<smem>>
    %481 = vector.broadcast %480 : f32 to vector<1x16x16xf32>
    %482 = arith.mulf %481, %471 : vector<1x16x16xf32>
    %483 = arith.addf %470, %482 : vector<1x16x16xf32>
    %484 = vector.extract_strided_slice %383 {offsets = [0, 2, 1], sizes = [1, 16, 16], strides = [1, 1, 1]} : vector<1x18x18xf32> to vector<1x16x16xf32>
    %c7_137 = arith.constant 7 : index
    %485 = memref.load %arg4[%c7_137] : memref<81xf32, #tpu.memory_space<smem>>
    %486 = vector.broadcast %485 : f32 to vector<1x16x16xf32>
    %487 = arith.mulf %486, %484 : vector<1x16x16xf32>
    %488 = arith.addf %475, %487 : vector<1x16x16xf32>
    %c34_138 = arith.constant 34 : index
    %489 = memref.load %arg4[%c34_138] : memref<81xf32, #tpu.memory_space<smem>>
    %490 = vector.broadcast %489 : f32 to vector<1x16x16xf32>
    %491 = arith.mulf %490, %484 : vector<1x16x16xf32>
    %492 = arith.addf %479, %491 : vector<1x16x16xf32>
    %c61_139 = arith.constant 61 : index
    %493 = memref.load %arg4[%c61_139] : memref<81xf32, #tpu.memory_space<smem>>
    %494 = vector.broadcast %493 : f32 to vector<1x16x16xf32>
    %495 = arith.mulf %494, %484 : vector<1x16x16xf32>
    %496 = arith.addf %483, %495 : vector<1x16x16xf32>
    %497 = vector.extract_strided_slice %383 {offsets = [0, 2, 2], sizes = [1, 16, 16], strides = [1, 1, 1]} : vector<1x18x18xf32> to vector<1x16x16xf32>
    %c8_140 = arith.constant 8 : index
    %498 = memref.load %arg4[%c8_140] : memref<81xf32, #tpu.memory_space<smem>>
    %499 = vector.broadcast %498 : f32 to vector<1x16x16xf32>
    %500 = arith.mulf %499, %497 : vector<1x16x16xf32>
    %501 = arith.addf %488, %500 : vector<1x16x16xf32>
    %c35_141 = arith.constant 35 : index
    %502 = memref.load %arg4[%c35_141] : memref<81xf32, #tpu.memory_space<smem>>
    %503 = vector.broadcast %502 : f32 to vector<1x16x16xf32>
    %504 = arith.mulf %503, %497 : vector<1x16x16xf32>
    %505 = arith.addf %492, %504 : vector<1x16x16xf32>
    %c62_142 = arith.constant 62 : index
    %506 = memref.load %arg4[%c62_142] : memref<81xf32, #tpu.memory_space<smem>>
    %507 = vector.broadcast %506 : f32 to vector<1x16x16xf32>
    %508 = arith.mulf %507, %497 : vector<1x16x16xf32>
    %509 = arith.addf %496, %508 : vector<1x16x16xf32>
    %510 = vector.extract_strided_slice %386 {offsets = [0, 0, 0], sizes = [1, 16, 16], strides = [1, 1, 1]} : vector<1x18x18xf32> to vector<1x16x16xf32>
    %c9_143 = arith.constant 9 : index
    %511 = memref.load %arg4[%c9_143] : memref<81xf32, #tpu.memory_space<smem>>
    %512 = vector.broadcast %511 : f32 to vector<1x16x16xf32>
    %513 = arith.mulf %512, %510 : vector<1x16x16xf32>
    %514 = arith.addf %501, %513 : vector<1x16x16xf32>
    %c36_144 = arith.constant 36 : index
    %515 = memref.load %arg4[%c36_144] : memref<81xf32, #tpu.memory_space<smem>>
    %516 = vector.broadcast %515 : f32 to vector<1x16x16xf32>
    %517 = arith.mulf %516, %510 : vector<1x16x16xf32>
    %518 = arith.addf %505, %517 : vector<1x16x16xf32>
    %c63_145 = arith.constant 63 : index
    %519 = memref.load %arg4[%c63_145] : memref<81xf32, #tpu.memory_space<smem>>
    %520 = vector.broadcast %519 : f32 to vector<1x16x16xf32>
    %521 = arith.mulf %520, %510 : vector<1x16x16xf32>
    %522 = arith.addf %509, %521 : vector<1x16x16xf32>
    %523 = vector.extract_strided_slice %386 {offsets = [0, 0, 1], sizes = [1, 16, 16], strides = [1, 1, 1]} : vector<1x18x18xf32> to vector<1x16x16xf32>
    %c10_146 = arith.constant 10 : index
    %524 = memref.load %arg4[%c10_146] : memref<81xf32, #tpu.memory_space<smem>>
    %525 = vector.broadcast %524 : f32 to vector<1x16x16xf32>
    %526 = arith.mulf %525, %523 : vector<1x16x16xf32>
    %527 = arith.addf %514, %526 : vector<1x16x16xf32>
    %c37_147 = arith.constant 37 : index
    %528 = memref.load %arg4[%c37_147] : memref<81xf32, #tpu.memory_space<smem>>
    %529 = vector.broadcast %528 : f32 to vector<1x16x16xf32>
    %530 = arith.mulf %529, %523 : vector<1x16x16xf32>
    %531 = arith.addf %518, %530 : vector<1x16x16xf32>
    %c64_148 = arith.constant 64 : index
    %532 = memref.load %arg4[%c64_148] : memref<81xf32, #tpu.memory_space<smem>>
    %533 = vector.broadcast %532 : f32 to vector<1x16x16xf32>
    %534 = arith.mulf %533, %523 : vector<1x16x16xf32>
    %535 = arith.addf %522, %534 : vector<1x16x16xf32>
    %536 = vector.extract_strided_slice %386 {offsets = [0, 0, 2], sizes = [1, 16, 16], strides = [1, 1, 1]} : vector<1x18x18xf32> to vector<1x16x16xf32>
    %c11_149 = arith.constant 11 : index
    %537 = memref.load %arg4[%c11_149] : memref<81xf32, #tpu.memory_space<smem>>
    %538 = vector.broadcast %537 : f32 to vector<1x16x16xf32>
    %539 = arith.mulf %538, %536 : vector<1x16x16xf32>
    %540 = arith.addf %527, %539 : vector<1x16x16xf32>
    %c38_150 = arith.constant 38 : index
    %541 = memref.load %arg4[%c38_150] : memref<81xf32, #tpu.memory_space<smem>>
    %542 = vector.broadcast %541 : f32 to vector<1x16x16xf32>
    %543 = arith.mulf %542, %536 : vector<1x16x16xf32>
    %544 = arith.addf %531, %543 : vector<1x16x16xf32>
    %c65_151 = arith.constant 65 : index
    %545 = memref.load %arg4[%c65_151] : memref<81xf32, #tpu.memory_space<smem>>
    %546 = vector.broadcast %545 : f32 to vector<1x16x16xf32>
    %547 = arith.mulf %546, %536 : vector<1x16x16xf32>
    %548 = arith.addf %535, %547 : vector<1x16x16xf32>
    %549 = vector.extract_strided_slice %386 {offsets = [0, 1, 0], sizes = [1, 16, 16], strides = [1, 1, 1]} : vector<1x18x18xf32> to vector<1x16x16xf32>
    %c12_152 = arith.constant 12 : index
    %550 = memref.load %arg4[%c12_152] : memref<81xf32, #tpu.memory_space<smem>>
    %551 = vector.broadcast %550 : f32 to vector<1x16x16xf32>
    %552 = arith.mulf %551, %549 : vector<1x16x16xf32>
    %553 = arith.addf %540, %552 : vector<1x16x16xf32>
    %c39_153 = arith.constant 39 : index
    %554 = memref.load %arg4[%c39_153] : memref<81xf32, #tpu.memory_space<smem>>
    %555 = vector.broadcast %554 : f32 to vector<1x16x16xf32>
    %556 = arith.mulf %555, %549 : vector<1x16x16xf32>
    %557 = arith.addf %544, %556 : vector<1x16x16xf32>
    %c66_154 = arith.constant 66 : index
    %558 = memref.load %arg4[%c66_154] : memref<81xf32, #tpu.memory_space<smem>>
    %559 = vector.broadcast %558 : f32 to vector<1x16x16xf32>
    %560 = arith.mulf %559, %549 : vector<1x16x16xf32>
    %561 = arith.addf %548, %560 : vector<1x16x16xf32>
    %562 = vector.extract_strided_slice %386 {offsets = [0, 1, 1], sizes = [1, 16, 16], strides = [1, 1, 1]} : vector<1x18x18xf32> to vector<1x16x16xf32>
    %c13_155 = arith.constant 13 : index
    %563 = memref.load %arg4[%c13_155] : memref<81xf32, #tpu.memory_space<smem>>
    %564 = vector.broadcast %563 : f32 to vector<1x16x16xf32>
    %565 = arith.mulf %564, %562 : vector<1x16x16xf32>
    %566 = arith.addf %553, %565 : vector<1x16x16xf32>
    %c40_156 = arith.constant 40 : index
    %567 = memref.load %arg4[%c40_156] : memref<81xf32, #tpu.memory_space<smem>>
    %568 = vector.broadcast %567 : f32 to vector<1x16x16xf32>
    %569 = arith.mulf %568, %562 : vector<1x16x16xf32>
    %570 = arith.addf %557, %569 : vector<1x16x16xf32>
    %c67_157 = arith.constant 67 : index
    %571 = memref.load %arg4[%c67_157] : memref<81xf32, #tpu.memory_space<smem>>
    %572 = vector.broadcast %571 : f32 to vector<1x16x16xf32>
    %573 = arith.mulf %572, %562 : vector<1x16x16xf32>
    %574 = arith.addf %561, %573 : vector<1x16x16xf32>
    %575 = vector.extract_strided_slice %386 {offsets = [0, 1, 2], sizes = [1, 16, 16], strides = [1, 1, 1]} : vector<1x18x18xf32> to vector<1x16x16xf32>
    %c14_158 = arith.constant 14 : index
    %576 = memref.load %arg4[%c14_158] : memref<81xf32, #tpu.memory_space<smem>>
    %577 = vector.broadcast %576 : f32 to vector<1x16x16xf32>
    %578 = arith.mulf %577, %575 : vector<1x16x16xf32>
    %579 = arith.addf %566, %578 : vector<1x16x16xf32>
    %c41_159 = arith.constant 41 : index
    %580 = memref.load %arg4[%c41_159] : memref<81xf32, #tpu.memory_space<smem>>
    %581 = vector.broadcast %580 : f32 to vector<1x16x16xf32>
    %582 = arith.mulf %581, %575 : vector<1x16x16xf32>
    %583 = arith.addf %570, %582 : vector<1x16x16xf32>
    %c68_160 = arith.constant 68 : index
    %584 = memref.load %arg4[%c68_160] : memref<81xf32, #tpu.memory_space<smem>>
    %585 = vector.broadcast %584 : f32 to vector<1x16x16xf32>
    %586 = arith.mulf %585, %575 : vector<1x16x16xf32>
    %587 = arith.addf %574, %586 : vector<1x16x16xf32>
    %588 = vector.extract_strided_slice %386 {offsets = [0, 2, 0], sizes = [1, 16, 16], strides = [1, 1, 1]} : vector<1x18x18xf32> to vector<1x16x16xf32>
    %c15_161 = arith.constant 15 : index
    %589 = memref.load %arg4[%c15_161] : memref<81xf32, #tpu.memory_space<smem>>
    %590 = vector.broadcast %589 : f32 to vector<1x16x16xf32>
    %591 = arith.mulf %590, %588 : vector<1x16x16xf32>
    %592 = arith.addf %579, %591 : vector<1x16x16xf32>
    %c42_162 = arith.constant 42 : index
    %593 = memref.load %arg4[%c42_162] : memref<81xf32, #tpu.memory_space<smem>>
    %594 = vector.broadcast %593 : f32 to vector<1x16x16xf32>
    %595 = arith.mulf %594, %588 : vector<1x16x16xf32>
    %596 = arith.addf %583, %595 : vector<1x16x16xf32>
    %c69_163 = arith.constant 69 : index
    %597 = memref.load %arg4[%c69_163] : memref<81xf32, #tpu.memory_space<smem>>
    %598 = vector.broadcast %597 : f32 to vector<1x16x16xf32>
    %599 = arith.mulf %598, %588 : vector<1x16x16xf32>
    %600 = arith.addf %587, %599 : vector<1x16x16xf32>
    %601 = vector.extract_strided_slice %386 {offsets = [0, 2, 1], sizes = [1, 16, 16], strides = [1, 1, 1]} : vector<1x18x18xf32> to vector<1x16x16xf32>
    %c16_164 = arith.constant 16 : index
    %602 = memref.load %arg4[%c16_164] : memref<81xf32, #tpu.memory_space<smem>>
    %603 = vector.broadcast %602 : f32 to vector<1x16x16xf32>
    %604 = arith.mulf %603, %601 : vector<1x16x16xf32>
    %605 = arith.addf %592, %604 : vector<1x16x16xf32>
    %c43_165 = arith.constant 43 : index
    %606 = memref.load %arg4[%c43_165] : memref<81xf32, #tpu.memory_space<smem>>
    %607 = vector.broadcast %606 : f32 to vector<1x16x16xf32>
    %608 = arith.mulf %607, %601 : vector<1x16x16xf32>
    %609 = arith.addf %596, %608 : vector<1x16x16xf32>
    %c70_166 = arith.constant 70 : index
    %610 = memref.load %arg4[%c70_166] : memref<81xf32, #tpu.memory_space<smem>>
    %611 = vector.broadcast %610 : f32 to vector<1x16x16xf32>
    %612 = arith.mulf %611, %601 : vector<1x16x16xf32>
    %613 = arith.addf %600, %612 : vector<1x16x16xf32>
    %614 = vector.extract_strided_slice %386 {offsets = [0, 2, 2], sizes = [1, 16, 16], strides = [1, 1, 1]} : vector<1x18x18xf32> to vector<1x16x16xf32>
    %c17_167 = arith.constant 17 : index
    %615 = memref.load %arg4[%c17_167] : memref<81xf32, #tpu.memory_space<smem>>
    %616 = vector.broadcast %615 : f32 to vector<1x16x16xf32>
    %617 = arith.mulf %616, %614 : vector<1x16x16xf32>
    %618 = arith.addf %605, %617 : vector<1x16x16xf32>
    %c44_168 = arith.constant 44 : index
    %619 = memref.load %arg4[%c44_168] : memref<81xf32, #tpu.memory_space<smem>>
    %620 = vector.broadcast %619 : f32 to vector<1x16x16xf32>
    %621 = arith.mulf %620, %614 : vector<1x16x16xf32>
    %622 = arith.addf %609, %621 : vector<1x16x16xf32>
    %c71_169 = arith.constant 71 : index
    %623 = memref.load %arg4[%c71_169] : memref<81xf32, #tpu.memory_space<smem>>
    %624 = vector.broadcast %623 : f32 to vector<1x16x16xf32>
    %625 = arith.mulf %624, %614 : vector<1x16x16xf32>
    %626 = arith.addf %613, %625 : vector<1x16x16xf32>
    %627 = vector.extract_strided_slice %389 {offsets = [0, 0, 0], sizes = [1, 16, 16], strides = [1, 1, 1]} : vector<1x18x18xf32> to vector<1x16x16xf32>
    %c18_170 = arith.constant 18 : index
    %628 = memref.load %arg4[%c18_170] : memref<81xf32, #tpu.memory_space<smem>>
    %629 = vector.broadcast %628 : f32 to vector<1x16x16xf32>
    %630 = arith.mulf %629, %627 : vector<1x16x16xf32>
    %631 = arith.addf %618, %630 : vector<1x16x16xf32>
    %c45_171 = arith.constant 45 : index
    %632 = memref.load %arg4[%c45_171] : memref<81xf32, #tpu.memory_space<smem>>
    %633 = vector.broadcast %632 : f32 to vector<1x16x16xf32>
    %634 = arith.mulf %633, %627 : vector<1x16x16xf32>
    %635 = arith.addf %622, %634 : vector<1x16x16xf32>
    %c72_172 = arith.constant 72 : index
    %636 = memref.load %arg4[%c72_172] : memref<81xf32, #tpu.memory_space<smem>>
    %637 = vector.broadcast %636 : f32 to vector<1x16x16xf32>
    %638 = arith.mulf %637, %627 : vector<1x16x16xf32>
    %639 = arith.addf %626, %638 : vector<1x16x16xf32>
    %640 = vector.extract_strided_slice %389 {offsets = [0, 0, 1], sizes = [1, 16, 16], strides = [1, 1, 1]} : vector<1x18x18xf32> to vector<1x16x16xf32>
    %c19_173 = arith.constant 19 : index
    %641 = memref.load %arg4[%c19_173] : memref<81xf32, #tpu.memory_space<smem>>
    %642 = vector.broadcast %641 : f32 to vector<1x16x16xf32>
    %643 = arith.mulf %642, %640 : vector<1x16x16xf32>
    %644 = arith.addf %631, %643 : vector<1x16x16xf32>
    %c46_174 = arith.constant 46 : index
    %645 = memref.load %arg4[%c46_174] : memref<81xf32, #tpu.memory_space<smem>>
    %646 = vector.broadcast %645 : f32 to vector<1x16x16xf32>
    %647 = arith.mulf %646, %640 : vector<1x16x16xf32>
    %648 = arith.addf %635, %647 : vector<1x16x16xf32>
    %c73_175 = arith.constant 73 : index
    %649 = memref.load %arg4[%c73_175] : memref<81xf32, #tpu.memory_space<smem>>
    %650 = vector.broadcast %649 : f32 to vector<1x16x16xf32>
    %651 = arith.mulf %650, %640 : vector<1x16x16xf32>
    %652 = arith.addf %639, %651 : vector<1x16x16xf32>
    %653 = vector.extract_strided_slice %389 {offsets = [0, 0, 2], sizes = [1, 16, 16], strides = [1, 1, 1]} : vector<1x18x18xf32> to vector<1x16x16xf32>
    %c20_176 = arith.constant 20 : index
    %654 = memref.load %arg4[%c20_176] : memref<81xf32, #tpu.memory_space<smem>>
    %655 = vector.broadcast %654 : f32 to vector<1x16x16xf32>
    %656 = arith.mulf %655, %653 : vector<1x16x16xf32>
    %657 = arith.addf %644, %656 : vector<1x16x16xf32>
    %c47_177 = arith.constant 47 : index
    %658 = memref.load %arg4[%c47_177] : memref<81xf32, #tpu.memory_space<smem>>
    %659 = vector.broadcast %658 : f32 to vector<1x16x16xf32>
    %660 = arith.mulf %659, %653 : vector<1x16x16xf32>
    %661 = arith.addf %648, %660 : vector<1x16x16xf32>
    %c74_178 = arith.constant 74 : index
    %662 = memref.load %arg4[%c74_178] : memref<81xf32, #tpu.memory_space<smem>>
    %663 = vector.broadcast %662 : f32 to vector<1x16x16xf32>
    %664 = arith.mulf %663, %653 : vector<1x16x16xf32>
    %665 = arith.addf %652, %664 : vector<1x16x16xf32>
    %666 = vector.extract_strided_slice %389 {offsets = [0, 1, 0], sizes = [1, 16, 16], strides = [1, 1, 1]} : vector<1x18x18xf32> to vector<1x16x16xf32>
    %c21_179 = arith.constant 21 : index
    %667 = memref.load %arg4[%c21_179] : memref<81xf32, #tpu.memory_space<smem>>
    %668 = vector.broadcast %667 : f32 to vector<1x16x16xf32>
    %669 = arith.mulf %668, %666 : vector<1x16x16xf32>
    %670 = arith.addf %657, %669 : vector<1x16x16xf32>
    %c48_180 = arith.constant 48 : index
    %671 = memref.load %arg4[%c48_180] : memref<81xf32, #tpu.memory_space<smem>>
    %672 = vector.broadcast %671 : f32 to vector<1x16x16xf32>
    %673 = arith.mulf %672, %666 : vector<1x16x16xf32>
    %674 = arith.addf %661, %673 : vector<1x16x16xf32>
    %c75_181 = arith.constant 75 : index
    %675 = memref.load %arg4[%c75_181] : memref<81xf32, #tpu.memory_space<smem>>
    %676 = vector.broadcast %675 : f32 to vector<1x16x16xf32>
    %677 = arith.mulf %676, %666 : vector<1x16x16xf32>
    %678 = arith.addf %665, %677 : vector<1x16x16xf32>
    %679 = vector.extract_strided_slice %389 {offsets = [0, 1, 1], sizes = [1, 16, 16], strides = [1, 1, 1]} : vector<1x18x18xf32> to vector<1x16x16xf32>
    %c22_182 = arith.constant 22 : index
    %680 = memref.load %arg4[%c22_182] : memref<81xf32, #tpu.memory_space<smem>>
    %681 = vector.broadcast %680 : f32 to vector<1x16x16xf32>
    %682 = arith.mulf %681, %679 : vector<1x16x16xf32>
    %683 = arith.addf %670, %682 : vector<1x16x16xf32>
    %c49_183 = arith.constant 49 : index
    %684 = memref.load %arg4[%c49_183] : memref<81xf32, #tpu.memory_space<smem>>
    %685 = vector.broadcast %684 : f32 to vector<1x16x16xf32>
    %686 = arith.mulf %685, %679 : vector<1x16x16xf32>
    %687 = arith.addf %674, %686 : vector<1x16x16xf32>
    %c76_184 = arith.constant 76 : index
    %688 = memref.load %arg4[%c76_184] : memref<81xf32, #tpu.memory_space<smem>>
    %689 = vector.broadcast %688 : f32 to vector<1x16x16xf32>
    %690 = arith.mulf %689, %679 : vector<1x16x16xf32>
    %691 = arith.addf %678, %690 : vector<1x16x16xf32>
    %692 = vector.extract_strided_slice %389 {offsets = [0, 1, 2], sizes = [1, 16, 16], strides = [1, 1, 1]} : vector<1x18x18xf32> to vector<1x16x16xf32>
    %c23_185 = arith.constant 23 : index
    %693 = memref.load %arg4[%c23_185] : memref<81xf32, #tpu.memory_space<smem>>
    %694 = vector.broadcast %693 : f32 to vector<1x16x16xf32>
    %695 = arith.mulf %694, %692 : vector<1x16x16xf32>
    %696 = arith.addf %683, %695 : vector<1x16x16xf32>
    %c50_186 = arith.constant 50 : index
    %697 = memref.load %arg4[%c50_186] : memref<81xf32, #tpu.memory_space<smem>>
    %698 = vector.broadcast %697 : f32 to vector<1x16x16xf32>
    %699 = arith.mulf %698, %692 : vector<1x16x16xf32>
    %700 = arith.addf %687, %699 : vector<1x16x16xf32>
    %c77_187 = arith.constant 77 : index
    %701 = memref.load %arg4[%c77_187] : memref<81xf32, #tpu.memory_space<smem>>
    %702 = vector.broadcast %701 : f32 to vector<1x16x16xf32>
    %703 = arith.mulf %702, %692 : vector<1x16x16xf32>
    %704 = arith.addf %691, %703 : vector<1x16x16xf32>
    %705 = vector.extract_strided_slice %389 {offsets = [0, 2, 0], sizes = [1, 16, 16], strides = [1, 1, 1]} : vector<1x18x18xf32> to vector<1x16x16xf32>
    %c24_188 = arith.constant 24 : index
    %706 = memref.load %arg4[%c24_188] : memref<81xf32, #tpu.memory_space<smem>>
    %707 = vector.broadcast %706 : f32 to vector<1x16x16xf32>
    %708 = arith.mulf %707, %705 : vector<1x16x16xf32>
    %709 = arith.addf %696, %708 : vector<1x16x16xf32>
    %c51_189 = arith.constant 51 : index
    %710 = memref.load %arg4[%c51_189] : memref<81xf32, #tpu.memory_space<smem>>
    %711 = vector.broadcast %710 : f32 to vector<1x16x16xf32>
    %712 = arith.mulf %711, %705 : vector<1x16x16xf32>
    %713 = arith.addf %700, %712 : vector<1x16x16xf32>
    %c78_190 = arith.constant 78 : index
    %714 = memref.load %arg4[%c78_190] : memref<81xf32, #tpu.memory_space<smem>>
    %715 = vector.broadcast %714 : f32 to vector<1x16x16xf32>
    %716 = arith.mulf %715, %705 : vector<1x16x16xf32>
    %717 = arith.addf %704, %716 : vector<1x16x16xf32>
    %718 = vector.extract_strided_slice %389 {offsets = [0, 2, 1], sizes = [1, 16, 16], strides = [1, 1, 1]} : vector<1x18x18xf32> to vector<1x16x16xf32>
    %c25_191 = arith.constant 25 : index
    %719 = memref.load %arg4[%c25_191] : memref<81xf32, #tpu.memory_space<smem>>
    %720 = vector.broadcast %719 : f32 to vector<1x16x16xf32>
    %721 = arith.mulf %720, %718 : vector<1x16x16xf32>
    %722 = arith.addf %709, %721 : vector<1x16x16xf32>
    %c52_192 = arith.constant 52 : index
    %723 = memref.load %arg4[%c52_192] : memref<81xf32, #tpu.memory_space<smem>>
    %724 = vector.broadcast %723 : f32 to vector<1x16x16xf32>
    %725 = arith.mulf %724, %718 : vector<1x16x16xf32>
    %726 = arith.addf %713, %725 : vector<1x16x16xf32>
    %c79_193 = arith.constant 79 : index
    %727 = memref.load %arg4[%c79_193] : memref<81xf32, #tpu.memory_space<smem>>
    %728 = vector.broadcast %727 : f32 to vector<1x16x16xf32>
    %729 = arith.mulf %728, %718 : vector<1x16x16xf32>
    %730 = arith.addf %717, %729 : vector<1x16x16xf32>
    %731 = vector.extract_strided_slice %389 {offsets = [0, 2, 2], sizes = [1, 16, 16], strides = [1, 1, 1]} : vector<1x18x18xf32> to vector<1x16x16xf32>
    %c26_194 = arith.constant 26 : index
    %732 = memref.load %arg4[%c26_194] : memref<81xf32, #tpu.memory_space<smem>>
    %733 = vector.broadcast %732 : f32 to vector<1x16x16xf32>
    %734 = arith.mulf %733, %731 : vector<1x16x16xf32>
    %735 = arith.addf %722, %734 : vector<1x16x16xf32>
    %c53_195 = arith.constant 53 : index
    %736 = memref.load %arg4[%c53_195] : memref<81xf32, #tpu.memory_space<smem>>
    %737 = vector.broadcast %736 : f32 to vector<1x16x16xf32>
    %738 = arith.mulf %737, %731 : vector<1x16x16xf32>
    %739 = arith.addf %726, %738 : vector<1x16x16xf32>
    %c80_196 = arith.constant 80 : index
    %740 = memref.load %arg4[%c80_196] : memref<81xf32, #tpu.memory_space<smem>>
    %741 = vector.broadcast %740 : f32 to vector<1x16x16xf32>
    %742 = arith.mulf %741, %731 : vector<1x16x16xf32>
    %743 = arith.addf %730, %742 : vector<1x16x16xf32>
    %c0_197 = arith.constant 0 : index
    %c0_198 = arith.constant 0 : index
    %c4_199 = arith.constant 4 : index
    %c4_200 = arith.constant 4 : index
    %744 = vector.load %arg1[%c0_197, %c0_198, %c4_199, %c4_200] : memref<1x3x24x24xf32, #tpu.memory_space<vmem>>, vector<1x1x16x16xf32>
    %745 = vector.shape_cast %744 : vector<1x1x16x16xf32> to vector<1x16x16xf32>
    %746 = arith.addf %745, %735 : vector<1x16x16xf32>
    %c0_201 = arith.constant 0 : index
    %747 = memref.load %arg5[%c0_201] : memref<3xf32, #tpu.memory_space<smem>>
    %748 = vector.broadcast %747 : f32 to vector<1x16x16xf32>
    %749 = arith.addf %746, %748 : vector<1x16x16xf32>
    %cst_202 = arith.constant -1.000000e+00 : f32
    %cst_203 = arith.constant 1.000000e+00 : f32
    %750 = vector.broadcast %cst_202 : f32 to vector<1x16x16xf32>
    %751 = arith.maximumf %750, %749 : vector<1x16x16xf32>
    %752 = vector.broadcast %cst_203 : f32 to vector<1x16x16xf32>
    %753 = arith.minimumf %752, %751 : vector<1x16x16xf32>
    %c0_204 = arith.constant 0 : index
    %c0_205 = arith.constant 0 : index
    %c0_206 = arith.constant 0 : index
    %c0_207 = arith.constant 0 : index
    %754 = vector.load %arg6[%c0_204, %c0_205, %c0_206, %c0_207] : memref<1x3x16x16xf32, #tpu.memory_space<vmem>>, vector<1x1x16x16xf32>
    %755 = vector.shape_cast %754 : vector<1x1x16x16xf32> to vector<1x16x16xf32>
    %756 = vector.shape_cast %753 : vector<1x16x16xf32> to vector<1x1x16x16xf32>
    tpu.vector_store %arg6[%c0_204, %c0_205, %c0_206, %c0_207], %756 {strides = array<i32>} : memref<1x3x16x16xf32, #tpu.memory_space<vmem>>, vector<1x1x16x16xf32>,
    %c0_208 = arith.constant 0 : index
    %c1_209 = arith.constant 1 : index
    %c4_210 = arith.constant 4 : index
    %c4_211 = arith.constant 4 : index
    %757 = vector.load %arg1[%c0_208, %c1_209, %c4_210, %c4_211] : memref<1x3x24x24xf32, #tpu.memory_space<vmem>>, vector<1x1x16x16xf32>
    %758 = vector.shape_cast %757 : vector<1x1x16x16xf32> to vector<1x16x16xf32>
    %759 = arith.addf %758, %739 : vector<1x16x16xf32>
    %c1_212 = arith.constant 1 : index
    %760 = memref.load %arg5[%c1_212] : memref<3xf32, #tpu.memory_space<smem>>
    %761 = vector.broadcast %760 : f32 to vector<1x16x16xf32>
    %762 = arith.addf %759, %761 : vector<1x16x16xf32>
    %cst_213 = arith.constant -1.000000e+00 : f32
    %cst_214 = arith.constant 1.000000e+00 : f32
    %763 = vector.broadcast %cst_213 : f32 to vector<1x16x16xf32>
    %764 = arith.maximumf %763, %762 : vector<1x16x16xf32>
    %765 = vector.broadcast %cst_214 : f32 to vector<1x16x16xf32>
    %766 = arith.minimumf %765, %764 : vector<1x16x16xf32>
    %c0_215 = arith.constant 0 : index
    %c1_216 = arith.constant 1 : index
    %c0_217 = arith.constant 0 : index
    %c0_218 = arith.constant 0 : index
    %767 = vector.load %arg6[%c0_215, %c1_216, %c0_217, %c0_218] : memref<1x3x16x16xf32, #tpu.memory_space<vmem>>, vector<1x1x16x16xf32>
    %768 = vector.shape_cast %767 : vector<1x1x16x16xf32> to vector<1x16x16xf32>
    %769 = vector.shape_cast %766 : vector<1x16x16xf32> to vector<1x1x16x16xf32>
    tpu.vector_store %arg6[%c0_215, %c1_216, %c0_217, %c0_218], %769 {strides = array<i32>} : memref<1x3x16x16xf32, #tpu.memory_space<vmem>>, vector<1x1x16x16xf32>,
    %c0_219 = arith.constant 0 : index
    %c2_220 = arith.constant 2 : index
    %c4_221 = arith.constant 4 : index
    %c4_222 = arith.constant 4 : index
    %770 = vector.load %arg1[%c0_219, %c2_220, %c4_221, %c4_222] : memref<1x3x24x24xf32, #tpu.memory_space<vmem>>, vector<1x1x16x16xf32>
    %771 = vector.shape_cast %770 : vector<1x1x16x16xf32> to vector<1x16x16xf32>
    %772 = arith.addf %771, %743 : vector<1x16x16xf32>
    %c2_223 = arith.constant 2 : index
    %773 = memref.load %arg5[%c2_223] : memref<3xf32, #tpu.memory_space<smem>>
    %774 = vector.broadcast %773 : f32 to vector<1x16x16xf32>
    %775 = arith.addf %772, %774 : vector<1x16x16xf32>
    %cst_224 = arith.constant -1.000000e+00 : f32
    %cst_225 = arith.constant 1.000000e+00 : f32
    %776 = vector.broadcast %cst_224 : f32 to vector<1x16x16xf32>
    %777 = arith.maximumf %776, %775 : vector<1x16x16xf32>
    %778 = vector.broadcast %cst_225 : f32 to vector<1x16x16xf32>
    %779 = arith.minimumf %778, %777 : vector<1x16x16xf32>
    %c0_226 = arith.constant 0 : index
    %c2_227 = arith.constant 2 : index
    %c0_228 = arith.constant 0 : index
    %c0_229 = arith.constant 0 : index
    %780 = vector.load %arg6[%c0_226, %c2_227, %c0_228, %c0_229] : memref<1x3x16x16xf32, #tpu.memory_space<vmem>>, vector<1x1x16x16xf32>
    %781 = vector.shape_cast %780 : vector<1x1x16x16xf32> to vector<1x16x16xf32>
    %782 = vector.shape_cast %779 : vector<1x16x16xf32> to vector<1x1x16x16xf32>
    tpu.vector_store %arg6[%c0_226, %c2_227, %c0_228, %c0_229], %782 {strides = array<i32>} : memref<1x3x16x16xf32, #tpu.memory_space<vmem>>, vector<1x1x16x16xf32>,
    return
  }
  func.func @transform_0(%arg0: i32) -> (i32, i32, i32, i32) {
    %c0_i32 = arith.constant 0 : i32
    %c0_i32_0 = arith.constant 0 : i32
    %c0_i32_1 = arith.constant 0 : i32
    %c0_i32_2 = arith.constant 0 : i32
    return %arg0, %c0_i32, %c0_i32_0, %c0_i32_1 : i32, i32, i32, i32
  }
  func.func @transform_1(%arg0: i32) -> i32 {
    %c0_i32 = arith.constant 0 : i32
    %c0_i32_0 = arith.constant 0 : i32
    return %c0_i32 : i32
  }
  func.func @transform_2(%arg0: i32) -> i32 {
    %c0_i32 = arith.constant 0 : i32
    %c0_i32_0 = arith.constant 0 : i32
    return %c0_i32 : i32
  }
  func.func @transform_3(%arg0: i32) -> i32 {
    %c0_i32 = arith.constant 0 : i32
    %c0_i32_0 = arith.constant 0 : i32
    return %c0_i32 : i32
  }
  func.func @transform_4(%arg0: i32) -> i32 {
    %c0_i32 = arith.constant 0 : i32
    %c0_i32_0 = arith.constant 0 : i32
    return %c0_i32 : i32
  }
  func.func @transform_5(%arg0: i32) -> (i32, i32, i32, i32) {
    %c0_i32 = arith.constant 0 : i32
    %c0_i32_0 = arith.constant 0 : i32
    %c0_i32_1 = arith.constant 0 : i32
    %c0_i32_2 = arith.constant 0 : i32
    return %arg0, %c0_i32, %c0_i32_0, %c0_i32_1 : i32, i32, i32, i32
  }
}

</mosaic_0001>

<llo_original>
// kernel: naive_ae_4decode_forward.2
$region0: #{naive_ae_4decode_forward.2}
  #allocation0 [shape = 'u32[]', space=smem, size = 0x4, offset = 0x4, fixed_abs, tag = 'smem constant byte address 0x4 - core index']
  #allocation1 [shape = 'u32[72,128]{1,0:T(1,128)}', space=vmem, size = 0x9000, scoped, tag = 'internal scratch']
  %s0 = inlined_call_operand.vmem [shape: bf16[32,192], index: 0, kind: input, shape index: {}]
  %s1 = inlined_call_operand.vmem [shape: bf16[192,192], index: 1, kind: input, shape index: {}]
  %s2 = inlined_call_operand.vmem [shape: f32[1,192], index: 2, kind: input, shape index: {}]
  %s3 = inlined_call_operand.vmem [shape: f32[32,192], index: 3, kind: output, shape index: {}]
  %s4 = sld [smem:[#allocation0]]
  $region22: #{naive_ae_4decode_forward.2} parent=0
    _
  %s6 = ssub.s32 1, %s4
  %s7 = scalar_select 0, %s6, %s4
  // Predicated region
  $region2: #{naive_ae_4decode_forward.2} parent=0 // pred_check
    _
  $region3: #{naive_ae_4decode_forward.2} parent=0 // pred_check_branch
    %9 = sbr.rel (0) target = $region5
  $region4: #{naive_ae_4decode_forward.2} parent=0 // pred_region
    _
  $region5: #{naive_ae_4decode_forward.2} parent=0 // pred_fallthru
    _
  // Predicated region
  $region6: #{naive_ae_4decode_forward.2} parent=0 // pred_check
    _
  $region7: #{naive_ae_4decode_forward.2} parent=0 // pred_check_branch
    %11 = sbr.rel (0) target = $region9
  $region8: #{naive_ae_4decode_forward.2} parent=0 // pred_region
    _
  $region9: #{naive_ae_4decode_forward.2} parent=0 // pred_fallthru
    _
  // Predicated region
  $region10: #{naive_ae_4decode_forward.2} parent=0 // pred_check
    _
  $region11: #{naive_ae_4decode_forward.2} parent=0 // pred_check_branch
    %13 = sbr.rel (0) target = $region13
  $region12: #{naive_ae_4decode_forward.2} parent=0 // pred_region
    _
  $region13: #{naive_ae_4decode_forward.2} parent=0 // pred_fallthru
    _
  %v15 = vld [vmem:[%s0] sm:$0xff]
  %v16 = vld [vmem:[%s0 + $0x8] sm:$0xff]
  %v17 = vld [vmem:[%s0 + $0x10] sm:$0xff]
  %v18 = vld [vmem:[%s0 + $0x18] sm:$0xff]
  %v19 = vld [vmem:[%s1] sm:$0xff]
  %v20 = vld [vmem:[%s1 + $0x8] sm:$0xff]
  %v21 = vld [vmem:[%s1 + $0x10] sm:$0xff]
  %v22 = vld [vmem:[%s1 + $0x18] sm:$0xff]
  %v23 = vld [vmem:[%s1 + $0x20] sm:$0xff]
  %v24 = vld [vmem:[%s1 + $0x28] sm:$0xff]
  %v25 = vld [vmem:[%s1 + $0x30] sm:$0xff]
  %v26 = vld [vmem:[%s1 + $0x38] sm:$0xff]
  %v27 = vld [vmem:[%s1 + $0x40] sm:$0xff]
  %v28 = vld [vmem:[%s1 + $0x48] sm:$0xff]
  %v29 = vld [vmem:[%s1 + $0x50] sm:$0xff]
  %v30 = vld [vmem:[%s1 + $0x58] sm:$0xff]
  %v31 = vld [vmem:[%s1 + $0x60] sm:$0xff]
  %v32 = vld [vmem:[%s1 + $0x68] sm:$0xff]
  %v33 = vld [vmem:[%s1 + $0x70] sm:$0xff]
  %v34 = vld [vmem:[%s1 + $0x78] sm:$0xff]
  %v35 = vld [vmem:[%s1 + $0x80] sm:$0xff]
  %v36 = vld [vmem:[%s1 + $0x88] sm:$0xff]
  %v37 = vld [vmem:[%s1 + $0x90] sm:$0xff]
  %v38 = vld [vmem:[%s1 + $0x98] sm:$0xff]
  %v39 = vld [vmem:[%s1 + $0xa0] sm:$0xff]
  %v40 = vld [vmem:[%s1 + $0xa8] sm:$0xff]
  %v41 = vld [vmem:[%s1 + $0xb0] sm:$0xff]
  %v42 = vld [vmem:[%s1 + $0xb8] sm:$0xff]
  %v43 = vld [vmem:[%s2] sm:$0x3]
  %v45 = vperm.slane %v43, 0
  %v46 = vperm.slane %v43, 1
  %v53 = vunpack.c.l.b16 %v15
  %v54 = vunpack.c.h.b16 %v15
  %v55 = vunpack.c.l.b16 %v16
  %v56 = vunpack.c.h.b16 %v16
  %v57 = vunpack.c.l.b16 %v17
  %v58 = vunpack.c.h.b16 %v17
  %v59 = vunpack.c.l.b16 %v18
  %v60 = vunpack.c.h.b16 %v18
  %v61 = vpack.c.b16 %v55, %v53
  %v62 = vpack.c.b16 %v56, %v54
  %v63 = vpack.c.b16 %v59, %v57
  %v64 = vpack.c.b16 %v60, %v58
  %v91 = vunpack.c.l.b16 %v19
  %v92 = vunpack.c.h.b16 %v19
  %v93 = vunpack.c.l.b16 %v20
  %v94 = vunpack.c.h.b16 %v20
  %v95 = vunpack.c.l.b16 %v21
  %v96 = vunpack.c.h.b16 %v21
  %v97 = vunpack.c.l.b16 %v22
  %v98 = vunpack.c.h.b16 %v22
  %v99 = vunpack.c.l.b16 %v23
  %v100 = vunpack.c.h.b16 %v23
  %v101 = vunpack.c.l.b16 %v24
  %v102 = vunpack.c.h.b16 %v24
  %v103 = vunpack.c.l.b16 %v25
  %v104 = vunpack.c.h.b16 %v25
  %v105 = vunpack.c.l.b16 %v26
  %v106 = vunpack.c.h.b16 %v26
  %v107 = vunpack.c.l.b16 %v27
  %v108 = vunpack.c.h.b16 %v27
  %v109 = vunpack.c.l.b16 %v28
  %v110 = vunpack.c.h.b16 %v28
  %v111 = vunpack.c.l.b16 %v29
  %v112 = vunpack.c.h.b16 %v29
  %v113 = vunpack.c.l.b16 %v30
  %v114 = vunpack.c.h.b16 %v30
  %v115 = vunpack.c.l.b16 %v31
  %v116 = vunpack.c.h.b16 %v31
  %v117 = vunpack.c.l.b16 %v32
  %v118 = vunpack.c.h.b16 %v32
  %v119 = vunpack.c.l.b16 %v33
  %v120 = vunpack.c.h.b16 %v33
  %v121 = vunpack.c.l.b16 %v34
  %v122 = vunpack.c.h.b16 %v34
  %v123 = vunpack.c.l.b16 %v35
  %v124 = vunpack.c.h.b16 %v35
  %v125 = vunpack.c.l.b16 %v36
  %v126 = vunpack.c.h.b16 %v36
  %v127 = vunpack.c.l.b16 %v37
  %v128 = vunpack.c.h.b16 %v37
  %v129 = vunpack.c.l.b16 %v38
  %v130 = vunpack.c.h.b16 %v38
  %v131 = vunpack.c.l.b16 %v39
  %v132 = vunpack.c.h.b16 %v39
  %v133 = vunpack.c.l.b16 %v40
  %v134 = vunpack.c.h.b16 %v40
  %v135 = vunpack.c.l.b16 %v41
  %v136 = vunpack.c.h.b16 %v41
  %v137 = vunpack.c.l.b16 %v42
  %v138 = vunpack.c.h.b16 %v42
  %v139 = vpack.c.b16 %v93, %v91
  %v140 = vpack.c.b16 %v94, %v92
  %v141 = vpack.c.b16 %v97, %v95
  %v142 = vpack.c.b16 %v98, %v96
  %v143 = vpack.c.b16 %v101, %v99
  %v144 = vpack.c.b16 %v102, %v100
  %v145 = vpack.c.b16 %v105, %v103
  %v146 = vpack.c.b16 %v106, %v104
  %v147 = vpack.c.b16 %v109, %v107
  %v148 = vpack.c.b16 %v110, %v108
  %v149 = vpack.c.b16 %v113, %v111
  %v150 = vpack.c.b16 %v114, %v112
  %v151 = vpack.c.b16 %v117, %v115
  %v152 = vpack.c.b16 %v118, %v116
  %v153 = vpack.c.b16 %v121, %v119
  %v154 = vpack.c.b16 %v122, %v120
  %v155 = vpack.c.b16 %v125, %v123
  %v156 = vpack.c.b16 %v126, %v124
  %v157 = vpack.c.b16 %v129, %v127
  %v158 = vpack.c.b16 %v130, %v128
  %v159 = vpack.c.b16 %v133, %v131
  %v160 = vpack.c.b16 %v134, %v132
  %v161 = vpack.c.b16 %v137, %v135
  %v162 = vpack.c.b16 %v138, %v136
  %vm187 = vcmask 523264
  %v189 = vsel %vm187, %v62, 0
  %v192 = vsel %vm187, %v64, 0
  %194 = vmatpush.bf16.msra.mxu0 %v153
  %195 = vmatpush.bf16.msra.mxu0 %v151
  %196 = vmatpush.bf16.msra.mxu0 %v149
  %197 = vmatpush.bf16.msra.mxu0 %v147
  %198 = vmatpush.bf16.msra.mxu0 %v145
  %199 = vmatpush.bf16.msra.mxu0 %v143
  %200 = vmatpush.bf16.msra.mxu0 %v141
  %201 = vmatpush.bf16.msra.mxu0 %v139
  %202 = vmatmul.bf16.gmra.mxu0 %v61
  %v203 = vpop.f32.mrf.mxu0
  %v204 = vadd.f32 %v45, %v203
  %v205 = vpop.f32.mrf.mxu0
  %v206 = vadd.f32 %v45, %v205
  %207 = vmatmul.bf16.gmra.mxu0 %v63
  %v208 = vpop.f32.mrf.mxu0
  %v209 = vadd.f32 %v45, %v208
  %v210 = vpop.f32.mrf.mxu0
  %v211 = vadd.f32 %v45, %v210
  %212 = vdwg.mxu0
  %213 = vmatpush.bf16.msra.mxu0 0
  %214 = vmatpush.bf16.msra.mxu0 0
  %215 = vmatpush.bf16.msra.mxu0 0
  %216 = vmatpush.bf16.msra.mxu0 0
  %217 = vmatpush.bf16.msra.mxu0 %v161
  %218 = vmatpush.bf16.msra.mxu0 %v159
  %219 = vmatpush.bf16.msra.mxu0 %v157
  %220 = vmatpush.bf16.msra.mxu0 %v155
  %221 = vmatmul.bf16.gmra.mxu0 %v189
  %v222 = vpop.f32.mrf.mxu0
  %v223 = vadd.f32 %v204, %v222
  %v224 = vpop.f32.mrf.mxu0
  %v225 = vadd.f32 %v206, %v224
  %226 = vmatmul.bf16.gmra.mxu0 %v192
  %v227 = vpop.f32.mrf.mxu0
  %v228 = vadd.f32 %v209, %v227
  %v229 = vpop.f32.mrf.mxu0
  %v230 = vadd.f32 %v211, %v229
  %231 = vdwg.mxu0
  %232 = vmatpush.bf16.msra.mxu0 %v154
  %233 = vmatpush.bf16.msra.mxu0 %v152
  %234 = vmatpush.bf16.msra.mxu0 %v150
  %235 = vmatpush.bf16.msra.mxu0 %v148
  %236 = vmatpush.bf16.msra.mxu0 %v146
  %237 = vmatpush.bf16.msra.mxu0 %v144
  %238 = vmatpush.bf16.msra.mxu0 %v142
  %239 = vmatpush.bf16.msra.mxu0 %v140
  %240 = vmatmul.bf16.gmra.mxu0 %v61
  %v241 = vpop.f32.mrf.mxu0
  %v242 = vadd.f32 %v46, %v241
  %v243 = vpop.f32.mrf.mxu0
  %v244 = vadd.f32 %v46, %v243
  %245 = vmatmul.bf16.gmra.mxu0 %v63
  %v246 = vpop.f32.mrf.mxu0
  %v247 = vadd.f32 %v46, %v246
  %v248 = vpop.f32.mrf.mxu0
  %v249 = vadd.f32 %v46, %v248
  %250 = vdwg.mxu0
  %251 = vmatpush.bf16.msra.mxu0 0
  %252 = vmatpush.bf16.msra.mxu0 0
  %253 = vmatpush.bf16.msra.mxu0 0
  %254 = vmatpush.bf16.msra.mxu0 0
  %255 = vmatpush.bf16.msra.mxu0 %v162
  %256 = vmatpush.bf16.msra.mxu0 %v160
  %257 = vmatpush.bf16.msra.mxu0 %v158
  %258 = vmatpush.bf16.msra.mxu0 %v156
  %259 = vmatmul.bf16.gmra.mxu0 %v189
  %v260 = vpop.f32.mrf.mxu0
  %v261 = vadd.f32 %v242, %v260
  %v262 = vpop.f32.mrf.mxu0
  %v263 = vadd.f32 %v244, %v262
  %264 = vmatmul.bf16.gmra.mxu0 %v192
  %v265 = vpop.f32.mrf.mxu0
  %v266 = vadd.f32 %v247, %v265
  %v267 = vpop.f32.mrf.mxu0
  %v268 = vadd.f32 %v249, %v267
  %269 = vdwg.mxu0
  %270 = vst [vmem:[%s3] sm:$0xff] %v223
  %271 = vst.msk [vmem:[%s3 + $0x8] sm:$0xff] %vm187, %v261
  %272 = vst [vmem:[%s3 + $0x10] sm:$0xff] %v225
  %273 = vst.msk [vmem:[%s3 + $0x18] sm:$0xff] %vm187, %v263
  %274 = vst [vmem:[%s3 + $0x20] sm:$0xff] %v228
  %275 = vst.msk [vmem:[%s3 + $0x28] sm:$0xff] %vm187, %v266
  %276 = vst [vmem:[%s3 + $0x30] sm:$0xff] %v230
  %277 = vst.msk [vmem:[%s3 + $0x38] sm:$0xff] %vm187, %v268
  // Predicated region
  $region14: #{naive_ae_4decode_forward.2} parent=0 // pred_check
    _
  $region15: #{naive_ae_4decode_forward.2} parent=0 // pred_check_branch
    %279 = sbr.rel (0) target = $region17
  $region16: #{naive_ae_4decode_forward.2} parent=0 // pred_region
    _
  $region17: #{naive_ae_4decode_forward.2} parent=0 // pred_fallthru
    _
  // Predicated region
  $region18: #{naive_ae_4decode_forward.2} parent=0 // pred_check
    _
  $region19: #{naive_ae_4decode_forward.2} parent=0 // pred_check_branch
    %281 = sbr.rel (0) target = $region21
  $region20: #{naive_ae_4decode_forward.2} parent=0 // pred_region
    _
  $region21: #{naive_ae_4decode_forward.2} parent=0 // pred_fallthru
    _

// kernel: naive_ae_4decode_forward.3
$region0: #{naive_ae_4decode_forward.3}
  #allocation0 [shape = 'u32[]', space=smem, size = 0x4, offset = 0x4, fixed_abs, tag = 'smem constant byte address 0x4 - core index']
  #allocation1 [shape = 'u32[72,128]{1,0:T(1,128)}', space=vmem, size = 0x9000, scoped, tag = 'internal scratch']
  %s0 = inlined_call_operand.vmem [shape: f32[2,3,24,24], index: 0, kind: input, shape index: {}]
  %s1 = inlined_call_operand.vmem [shape: f32[81], index: 1, kind: input, shape index: {}]
  %s2 = inlined_call_operand.vmem [shape: f32[3], index: 2, kind: input, shape index: {}]
  %s3 = inlined_call_operand.vmem [shape: f32[81], index: 3, kind: input, shape index: {}]
  %s4 = inlined_call_operand.vmem [shape: f32[3], index: 4, kind: input, shape index: {}]
  %s5 = inlined_call_operand.hbm [shape: f32[2,3,16,16], index: 5, kind: output, shape index: {}]
  %s6 = sld [smem:[#allocation0]]
  $region69: #{naive_ae_4decode_forward.3} parent=0
    _
  %s8 = ssub.s32 1, %s6
  %s9 = scalar_select 0, %s8, %s6
  $region1: #{naive_ae_4decode_forward.3} parent=0
    #allocation2 [shape = 'u8[512]{0}', space=smem, size = 0x200, scoped, tag = 'input window, operand 1, single buffered']
    #allocation3 [shape = 's32[2]{0}', space=sflag, size = 0x8, scoped, tag = 'scoped memory for naive_ae_4decode_forward.3']
    #allocation4 [shape = 's32[2]{0}', space=sflag, size = 0x8, scoped, tag = 'scoped memory for naive_ae_4decode_forward.3']
    #allocation5 [shape = 'u8[512]{0}', space=smem, size = 0x200, scoped, tag = 'input window, operand 2, single buffered']
    #allocation6 [shape = 's32[1]{0}', space=sflag, size = 0x4, scoped, tag = 'scoped memory for naive_ae_4decode_forward.3']
    #allocation7 [shape = 'u8[512]{0}', space=smem, size = 0x200, scoped, tag = 'input window, operand 3, single buffered']
    #allocation8 [shape = 'u8[512]{0}', space=smem, size = 0x200, scoped, tag = 'input window, operand 4, single buffered']
    #allocation9 [shape = 's32[1]{0}', space=sflag, size = 0x4, scoped, tag = 'scoped memory for naive_ae_4decode_forward.3']
    #allocation10 [shape = 'u8[49152]{0}', space=vmem, size = 0xc000, scoped, tag = 'output window, operand 0']
    %10 = vsyncpa [#allocation4], 0
    %11 = vsyncpa [#allocation6], 0
    %12 = vsyncpa [#allocation9], 0
    %13 = vsyncpa [#allocation3], 0
    %s14 = scalar_lea.sflag [#allocation3], 1
    %15 = vsyncpa %s14, 0
    loop: start=0, step=1, limit=4
    $region2: #{naive_ae_4decode_forward.3} parent=1 // loop_pre_header
      _
    $region3: #{naive_ae_4decode_forward.3} parent=1 // loop_header
      %s17 = sphi 0, %s21
      %p18 = scmp.ge.s32.totalorder %s17, 4
      %s27 = sphi 0, %s29
      %s30 = sphi 0, %s27
      %s31 = sphi 0, %s30
      %s47 = sphi 0, %s31
      %s51 = sphi 0, %s51
      %s53 = sphi 0, %s51
      %s54 = sphi 0, %s53
      %s68 = sphi 0, %s54
      %s72 = sphi 0, %s72
      %s74 = sphi 0, %s72
      %s75 = sphi 0, %s74
      %s89 = sphi 0, %s75
      %s93 = sphi 0, %s93
      %s95 = sphi 0, %s93
      %s96 = sphi 0, %s95
      %s110 = sphi 0, %s96
      %s114 = sphi 0, %s114
      %s116 = sphi 0, %s114
      %s117 = sphi 0, %s116
      %s131 = sphi 0, %s117
      %s137 = sphi 0, %s139
      %s140 = sphi 0, %s137
      %s141 = sphi 0, %s140
      %s157 = sphi 0, %s141
    $region4: #{naive_ae_4decode_forward.3} parent=1 // loop_header_branch
      %20 = sbr.rel (%p18) target = $region8
    $region5: #{naive_ae_4decode_forward.3} parent=1 // loop_body
      %s22 = ssub.s32 %s17, 1
      %s23 = ssub.s32 %s17, 2
      %s24 = sadd.s32 %s17, 1
      %s25 = ssub.s32 %s17, %s24
      %p26 = scmp.eq.s32.totalorder %s25, 0
      %s28 = sadd.s32 %s27, 1
      %s29 = scalar_select %p26, %s27, %s28
      %p32 = pneg %p26
      %p33 = scmp.eq.s32.totalorder %s17, 1
      %p34 = por %p32, %p33
      %p35 = scmp.ne.s32.totalorder %s27, %s30
      %p36 = scmp.eq.s32.totalorder %s17, 0
      %p37 = por %p35, %p36
      %p38 = scmp.ne.s32.totalorder %s27, %s30
      %p39 = scmp.eq.s32.totalorder %s22, 1
      %p40 = por %p38, %p39
      %p41 = scmp.ne.s32.totalorder %s30, %s31
      %p42 = scmp.eq.s32.totalorder %s22, 0
      %p43 = por %p41, %p42
      %p44 = scmp.ne.s32.totalorder %s30, %s31
      %p45 = scmp.eq.s32.totalorder %s23, 1
      %p46 = por %p44, %p45
      %p48 = scmp.ne.s32.totalorder %s31, %s47
      %p49 = scmp.eq.s32.totalorder %s23, 0
      %p50 = por %p48, %p49
      %s52 = sadd.s32 %s51, 1
      %p55 = scmp.eq.s32.totalorder %s17, 1
      %p56 = scmp.ne.s32.totalorder %s51, %s53
      %p57 = scmp.eq.s32.totalorder %s17, 0
      %p58 = por %p56, %p57
      %p59 = scmp.ne.s32.totalorder %s51, %s53
      %p60 = scmp.eq.s32.totalorder %s22, 1
      %p61 = por %p59, %p60
      %p62 = scmp.ne.s32.totalorder %s53, %s54
      %p63 = scmp.eq.s32.totalorder %s22, 0
      %p64 = por %p62, %p63
      %p65 = scmp.ne.s32.totalorder %s53, %s54
      %p66 = scmp.eq.s32.totalorder %s23, 1
      %p67 = por %p65, %p66
      %p69 = scmp.ne.s32.totalorder %s54, %s68
      %p70 = scmp.eq.s32.totalorder %s23, 0
      %p71 = por %p69, %p70
      %s73 = sadd.s32 %s72, 1
      %p76 = scmp.eq.s32.totalorder %s17, 1
      %p77 = scmp.ne.s32.totalorder %s72, %s74
      %p78 = scmp.eq.s32.totalorder %s17, 0
      %p79 = por %p77, %p78
      %p80 = scmp.ne.s32.totalorder %s72, %s74
      %p81 = scmp.eq.s32.totalorder %s22, 1
      %p82 = por %p80, %p81
      %p83 = scmp.ne.s32.totalorder %s74, %s75
      %p84 = scmp.eq.s32.totalorder %s22, 0
      %p85 = por %p83, %p84
      %p86 = scmp.ne.s32.totalorder %s74, %s75
      %p87 = scmp.eq.s32.totalorder %s23, 1
      %p88 = por %p86, %p87
      %p90 = scmp.ne.s32.totalorder %s75, %s89
      %p91 = scmp.eq.s32.totalorder %s23, 0
      %p92 = por %p90, %p91
      %s94 = sadd.s32 %s93, 1
      %p97 = scmp.eq.s32.totalorder %s17, 1
      %p98 = scmp.ne.s32.totalorder %s93, %s95
      %p99 = scmp.eq.s32.totalorder %s17, 0
      %p100 = por %p98, %p99
      %p101 = scmp.ne.s32.totalorder %s93, %s95
      %p102 = scmp.eq.s32.totalorder %s22, 1
      %p103 = por %p101, %p102
      %p104 = scmp.ne.s32.totalorder %s95, %s96
      %p105 = scmp.eq.s32.totalorder %s22, 0
      %p106 = por %p104, %p105
      %p107 = scmp.ne.s32.totalorder %s95, %s96
      %p108 = scmp.eq.s32.totalorder %s23, 1
      %p109 = por %p107, %p108
      %p111 = scmp.ne.s32.totalorder %s96, %s110
      %p112 = scmp.eq.s32.totalorder %s23, 0
      %p113 = por %p111, %p112
      %s115 = sadd.s32 %s114, 1
      %p118 = scmp.eq.s32.totalorder %s17, 1
      %p119 = scmp.ne.s32.totalorder %s114, %s116
      %p120 = scmp.eq.s32.totalorder %s17, 0
      %p121 = por %p119, %p120
      %p122 = scmp.ne.s32.totalorder %s114, %s116
      %p123 = scmp.eq.s32.totalorder %s22, 1
      %p124 = por %p122, %p123
      %p125 = scmp.ne.s32.totalorder %s116, %s117
      %p126 = scmp.eq.s32.totalorder %s22, 0
      %p127 = por %p125, %p126
      %p128 = scmp.ne.s32.totalorder %s116, %s117
      %p129 = scmp.eq.s32.totalorder %s23, 1
      %p130 = por %p128, %p129
      %p132 = scmp.ne.s32.totalorder %s117, %s131
      %p133 = scmp.eq.s32.totalorder %s23, 0
      %p134 = por %p132, %p133
      %s135 = ssub.s32 %s17, %s24
      %p136 = scmp.eq.s32.totalorder %s135, 0
      %s138 = sadd.s32 %s137, 1
      %s139 = scalar_select %p136, %s137, %s138
      %p142 = pneg %p136
      %p143 = scmp.eq.s32.totalorder %s17, 1
      %p144 = por %p142, %p143
      %p145 = scmp.ne.s32.totalorder %s137, %s140
      %p146 = scmp.eq.s32.totalorder %s17, 0
      %p147 = por %p145, %p146
      %p148 = scmp.ne.s32.totalorder %s137, %s140
      %p149 = scmp.eq.s32.totalorder %s22, 1
      %p150 = por %p148, %p149
      %p151 = scmp.ne.s32.totalorder %s140, %s141
      %p152 = scmp.eq.s32.totalorder %s22, 0
      %p153 = por %p151, %p152
      %p154 = scmp.ne.s32.totalorder %s140, %s141
      %p155 = scmp.eq.s32.totalorder %s23, 1
      %p156 = por %p154, %p155
      %p158 = scmp.ne.s32.totalorder %s141, %s157
      %p159 = scmp.eq.s32.totalorder %s23, 0
      %p160 = por %p158, %p159
      %p161 = scmp.le.s32.totalorder 1, %s17
      %p162 = scmp.lt.s32.totalorder %s17, 3
      %p163 = pnand %p161, %p162
      %p164 = pneg %p163
      // Predicated region
      $region9: #{naive_ae_4decode_forward.3} parent=5 // pred_check
        _
      $region10: #{naive_ae_4decode_forward.3} parent=5 // pred_check_branch
        %166 = sbr.rel (%p163) target = $region12
      $region11: #{naive_ae_4decode_forward.3} parent=5 // pred_region
        %s167 = ssub.s32 %s17, 1
        // Predicated region
        $region13: #{naive_ae_4decode_forward.3} parent=11 // pred_check
          %p168 = pneg %p64
        $region14: #{naive_ae_4decode_forward.3} parent=11 // pred_check_branch
          %170 = sbr.rel (%p168) target = $region16
        $region15: #{naive_ae_4decode_forward.3} parent=11 // pred_region
          %172 = vsyncadd [#allocation4], 0
          %s174 = sshll.u32 %s1, 4
          %s175 = int_to_ptr.vmem [resolvable:$true] %s174
          %177 = dma.vmem_to_smem %s175, 16, [#allocation2], [#allocation4]
        $region16: #{naive_ae_4decode_forward.3} parent=11 // pred_fallthru
          _
        // Predicated region
        $region17: #{naive_ae_4decode_forward.3} parent=11 // pred_check
          %p178 = pneg %p85
        $region18: #{naive_ae_4decode_forward.3} parent=11 // pred_check_branch
          %180 = sbr.rel (%p178) target = $region20
        $region19: #{naive_ae_4decode_forward.3} parent=11 // pred_region
          %182 = vsyncadd [#allocation6], 0
          %s184 = sshll.u32 %s2, 4
          %s185 = int_to_ptr.vmem [resolvable:$true] %s184
          %187 = dma.vmem_to_smem %s185, 16, [#allocation5], [#allocation6]
        $region20: #{naive_ae_4decode_forward.3} parent=11 // pred_fallthru
          _
        // Predicated region
        $region21: #{naive_ae_4decode_forward.3} parent=11 // pred_check
          %p188 = pneg %p106
        $region22: #{naive_ae_4decode_forward.3} parent=11 // pred_check_branch
          %190 = sbr.rel (%p188) target = $region24
        $region23: #{naive_ae_4decode_forward.3} parent=11 // pred_region
          %192 = vsyncadd [#allocation6], 0
          %s194 = sshll.u32 %s3, 4
          %s195 = int_to_ptr.vmem [resolvable:$true] %s194
          %197 = dma.vmem_to_smem %s195, 16, [#allocation7], [#allocation6]
        $region24: #{naive_ae_4decode_forward.3} parent=11 // pred_fallthru
          _
        // Predicated region
        $region25: #{naive_ae_4decode_forward.3} parent=11 // pred_check
          %p198 = pneg %p127
        $region26: #{naive_ae_4decode_forward.3} parent=11 // pred_check_branch
          %200 = sbr.rel (%p198) target = $region28
        $region27: #{naive_ae_4decode_forward.3} parent=11 // pred_region
          %202 = vsyncadd [#allocation9], 0
          %s204 = sshll.u32 %s4, 4
          %s205 = int_to_ptr.vmem [resolvable:$true] %s204
          %207 = dma.vmem_to_smem %s205, 16, [#allocation8], [#allocation9]
        $region28: #{naive_ae_4decode_forward.3} parent=11 // pred_fallthru
          _
      $region12: #{naive_ae_4decode_forward.3} parent=5 // pred_fallthru
        _
      %p208 = scmp.lt.s32.totalorder %s17, 2
      // Predicated region
      $region29: #{naive_ae_4decode_forward.3} parent=5 // pred_check
        %p209 = pneg %p208
      $region30: #{naive_ae_4decode_forward.3} parent=5 // pred_check_branch
        %211 = sbr.rel (%p209) target = $region32
      $region31: #{naive_ae_4decode_forward.3} parent=5 // pred_region
        // Predicated region
        $region33: #{naive_ae_4decode_forward.3} parent=31 // pred_check
          %p212 = pneg %p37
        $region34: #{naive_ae_4decode_forward.3} parent=31 // pred_check_branch
          %214 = sbr.rel (%p212) target = $region36
        $region35: #{naive_ae_4decode_forward.3} parent=31 // pred_region
          %p215 = scmp.lt.s32.totalorder %s17, 1
          %s216 = scalar_select %p215, %s17, 1
          %s217 = smul.addr %s216, 9
          %s218 = smul.addr %s217, 8
          %s219 = scalar_lea.vmem %s0, %s218
        $region36: #{naive_ae_4decode_forward.3} parent=31 // pred_fallthru
          _
      $region32: #{naive_ae_4decode_forward.3} parent=5 // pred_fallthru
        _
      %p220 = scmp.le.s32.totalorder 1, %s17
      %p221 = scmp.lt.s32.totalorder %s17, 3
      %p222 = pnand %p220, %p221
      %p223 = pneg %p222
      // Predicated region
      $region37: #{naive_ae_4decode_forward.3} parent=5 // pred_check
        _
      $region38: #{naive_ae_4decode_forward.3} parent=5 // pred_check_branch
        %225 = sbr.rel (%p222) target = $region40
      $region39: #{naive_ae_4decode_forward.3} parent=5 // pred_region
        %s226 = ssub.s32 %s17, 1
        // Predicated region
        $region41: #{naive_ae_4decode_forward.3} parent=39 // pred_check
          %p227 = pneg %p64
        $region42: #{naive_ae_4decode_forward.3} parent=39 // pred_check_branch
          %229 = sbr.rel (%p227) target = $region44
        $region43: #{naive_ae_4decode_forward.3} parent=39 // pred_region
          %231 = dma.done [#allocation4], 16
        $region44: #{naive_ae_4decode_forward.3} parent=39 // pred_fallthru
          _
        // Predicated region
        $region45: #{naive_ae_4decode_forward.3} parent=39 // pred_check
          %p232 = pneg %p85
        $region46: #{naive_ae_4decode_forward.3} parent=39 // pred_check_branch
          %234 = sbr.rel (%p232) target = $region48
        $region47: #{naive_ae_4decode_forward.3} parent=39 // pred_region
          %236 = dma.done [#allocation6], 16
        $region48: #{naive_ae_4decode_forward.3} parent=39 // pred_fallthru
          _
        // Predicated region
        $region49: #{naive_ae_4decode_forward.3} parent=39 // pred_check
          %p237 = pneg %p106
        $region50: #{naive_ae_4decode_forward.3} parent=39 // pred_check_branch
          %239 = sbr.rel (%p237) target = $region52
        $region51: #{naive_ae_4decode_forward.3} parent=39 // pred_region
          %241 = dma.done [#allocation6], 16
        $region52: #{naive_ae_4decode_forward.3} parent=39 // pred_fallthru
          _
        // Predicated region
        $region53: #{naive_ae_4decode_forward.3} parent=39 // pred_check
          %p242 = pneg %p127
        $region54: #{naive_ae_4decode_forward.3} parent=39 // pred_check_branch
          %244 = sbr.rel (%p242) target = $region56
        $region55: #{naive_ae_4decode_forward.3} parent=39 // pred_region
          %246 = dma.done [#allocation9], 16
        $region56: #{naive_ae_4decode_forward.3} parent=39 // pred_fallthru
          _
        %247 = sfence
        %p248 = scmp.lt.s32.totalorder %s22, 1
        %s249 = scalar_select %p248, %s22, 1
        %s250 = smul.addr %s249, 9
        %s251 = smul.addr %s250, 8
        %s252 = scalar_lea.vmem %s0, %s251
        %p253 = pneg %p43
        %p254 = pneg %p40
        %p255 = pneg %p64
        %p256 = pneg %p61
        %p257 = pneg %p85
        %p258 = pneg %p82
        %p259 = pneg %p106
        %p260 = pneg %p103
        %p261 = pneg %p127
        %p262 = pneg %p124
        %p263 = pneg %p153
        %p264 = pneg %p150
        %s265 = sand.u32 %s140, 1
        %s266 = scalar_lea.sflag [#allocation3], %s265
        %s267 = sand.u32 %s140, 1
        %s268 = smul.addr %s267, 48
        %s269 = scalar_lea.vmem [#allocation10], %s268
        %p270 = scmp.lt.s32.totalorder %s22, 1
        %s271 = scalar_select %p270, %s22, 1
        %s272 = smul.addr %s271, 9
        %s273 = smul.addr %s272, 8
        %s274 = scalar_lea.vmem %s0, %s273
        %v275 = vld [vmem:[%s274 + $0x2] sm:$0xff]
        %v276 = vld [vmem:[%s274 + $0xa] sm:$0xff]
        %v277 = vld [vmem:[%s274 + $0x12] sm:$0x3]
        %s278 = sld [smem:[#allocation2]]
        %v279 = vstv %s278
        %v280 = vmul.f32 %v279, %v275
        %v281 = vmul.f32 %v279, %v276
        %v282 = vmul.f32 %v279, %v277
        %v283 = vadd.f32 %v280, 0.0
        %v284 = vadd.f32 %v281, 0.0
        %v285 = vadd.f32 %v282, 0.0
        %s286 = sld [smem:[#allocation2 + $0x1b]]
        %v287 = vstv %s286
        %v288 = vmul.f32 %v287, %v275
        %v289 = vmul.f32 %v287, %v276
        %v290 = vmul.f32 %v287, %v277
        %v291 = vadd.f32 %v288, 0.0
        %v292 = vadd.f32 %v289, 0.0
        %v293 = vadd.f32 %v290, 0.0
        %s294 = sld [smem:[#allocation2 + $0x36]]
        %v295 = vstv %s294
        %v296 = vmul.f32 %v295, %v275
        %v297 = vmul.f32 %v295, %v276
        %v298 = vmul.f32 %v295, %v277
        %v299 = vadd.f32 %v296, 0.0
        %v300 = vadd.f32 %v297, 0.0
        %v301 = vadd.f32 %v298, 0.0
        %s302 = sld [smem:[#allocation2 + $0x1]]
        %v303 = vstv %s302
        %v304 = vmul.f32 %v303, %v275
        %v305 = vmul.f32 %v303, %v276
        %v306 = vmul.f32 %v303, %v277
        %310 = vrot.lane.b32.xlu0 %v304, 127
        %v311 = vpop.permute.xlu0 %310
        %312 = vrot.lane.b32.xlu0 %v305, 127
        %v313 = vpop.permute.xlu0 %312
        %314 = vrot.lane.b32.xlu0 %v306, 127
        %v315 = vpop.permute.xlu0 %314
        %v319 = vadd.f32 %v283, %v311
        %v320 = vadd.f32 %v284, %v313
        %v321 = vadd.f32 %v285, %v315
        %s322 = sld [smem:[#allocation2 + $0x1c]]
        %v323 = vstv %s322
        %v324 = vmul.f32 %v323, %v275
        %v325 = vmul.f32 %v323, %v276
        %v326 = vmul.f32 %v323, %v277
        %330 = vrot.lane.b32.xlu0 %v324, 127
        %v331 = vpop.permute.xlu0 %330
        %332 = vrot.lane.b32.xlu0 %v325, 127
        %v333 = vpop.permute.xlu0 %332
        %334 = vrot.lane.b32.xlu0 %v326, 127
        %v335 = vpop.permute.xlu0 %334
        %v339 = vadd.f32 %v291, %v331
        %v340 = vadd.f32 %v292, %v333
        %v341 = vadd.f32 %v293, %v335
        %s342 = sld [smem:[#allocation2 + $0x37]]
        %v343 = vstv %s342
        %v344 = vmul.f32 %v343, %v275
        %v345 = vmul.f32 %v343, %v276
        %v346 = vmul.f32 %v343, %v277
        %350 = vrot.lane.b32.xlu0 %v344, 127
        %v351 = vpop.permute.xlu0 %350
        %352 = vrot.lane.b32.xlu0 %v345, 127
        %v353 = vpop.permute.xlu0 %352
        %354 = vrot.lane.b32.xlu0 %v346, 127
        %v355 = vpop.permute.xlu0 %354
        %v359 = vadd.f32 %v299, %v351
        %v360 = vadd.f32 %v300, %v353
        %v361 = vadd.f32 %v301, %v355
        %s362 = sld [smem:[#allocation2 + $0x2]]
        %v363 = vstv %s362
        %v364 = vmul.f32 %v363, %v275
        %v365 = vmul.f32 %v363, %v276
        %v366 = vmul.f32 %v363, %v277
        %370 = vrot.lane.b32.xlu0 %v364, 126
        %v371 = vpop.permute.xlu0 %370
        %372 = vrot.lane.b32.xlu0 %v365, 126
        %v373 = vpop.permute.xlu0 %372
        %374 = vrot.lane.b32.xlu0 %v366, 126
        %v375 = vpop.permute.xlu0 %374
        %v379 = vadd.f32 %v319, %v371
        %v380 = vadd.f32 %v320, %v373
        %v381 = vadd.f32 %v321, %v375
        %s382 = sld [smem:[#allocation2 + $0x1d]]
        %v383 = vstv %s382
        %v384 = vmul.f32 %v383, %v275
        %v385 = vmul.f32 %v383, %v276
        %v386 = vmul.f32 %v383, %v277
        %390 = vrot.lane.b32.xlu0 %v384, 126
        %v391 = vpop.permute.xlu0 %390
        %392 = vrot.lane.b32.xlu0 %v385, 126
        %v393 = vpop.permute.xlu0 %392
        %394 = vrot.lane.b32.xlu0 %v386, 126
        %v395 = vpop.permute.xlu0 %394
        %v399 = vadd.f32 %v339, %v391
        %v400 = vadd.f32 %v340, %v393
        %v401 = vadd.f32 %v341, %v395
        %s402 = sld [smem:[#allocation2 + $0x38]]
        %v403 = vstv %s402
        %v404 = vmul.f32 %v403, %v275
        %v405 = vmul.f32 %v403, %v276
        %v406 = vmul.f32 %v403, %v277
        %410 = vrot.lane.b32.xlu0 %v404, 126
        %v411 = vpop.permute.xlu0 %410
        %412 = vrot.lane.b32.xlu0 %v405, 126
        %v413 = vpop.permute.xlu0 %412
        %414 = vrot.lane.b32.xlu0 %v406, 126
        %v415 = vpop.permute.xlu0 %414
        %v419 = vadd.f32 %v359, %v411
        %v420 = vadd.f32 %v360, %v413
        %v421 = vadd.f32 %v361, %v415
        %v422 = vld [vmem:[%s274 + $0x3] sm:$0xff]
        %v423 = vld [vmem:[%s274 + $0xb] sm:$0xff]
        %v424 = vld [vmem:[%s274 + $0x13] sm:$0x3]
        %s425 = sld [smem:[#allocation2 + $0x3]]
        %v426 = vstv %s425
        %v427 = vmul.f32 %v426, %v422
        %v428 = vmul.f32 %v426, %v423
        %v429 = vmul.f32 %v426, %v424
        %v430 = vadd.f32 %v379, %v427
        %v431 = vadd.f32 %v380, %v428
        %v432 = vadd.f32 %v381, %v429
        %s433 = sld [smem:[#allocation2 + $0x1e]]
        %v434 = vstv %s433
        %v435 = vmul.f32 %v434, %v422
        %v436 = vmul.f32 %v434, %v423
        %v437 = vmul.f32 %v434, %v424
        %v438 = vadd.f32 %v399, %v435
        %v439 = vadd.f32 %v400, %v436
        %v440 = vadd.f32 %v401, %v437
        %s441 = sld [smem:[#allocation2 + $0x39]]
        %v442 = vstv %s441
        %v443 = vmul.f32 %v442, %v422
        %v444 = vmul.f32 %v442, %v423
        %v445 = vmul.f32 %v442, %v424
        %v446 = vadd.f32 %v419, %v443
        %v447 = vadd.f32 %v420, %v444
        %v448 = vadd.f32 %v421, %v445
        %s449 = sld [smem:[#allocation2 + $0x4]]
        %v450 = vstv %s449
        %v451 = vmul.f32 %v450, %v422
        %v452 = vmul.f32 %v450, %v423
        %v453 = vmul.f32 %v450, %v424
        %457 = vrot.lane.b32.xlu0 %v451, 127
        %v458 = vpop.permute.xlu0 %457
        %459 = vrot.lane.b32.xlu0 %v452, 127
        %v460 = vpop.permute.xlu0 %459
        %461 = vrot.lane.b32.xlu0 %v453, 127
        %v462 = vpop.permute.xlu0 %461
        %v466 = vadd.f32 %v430, %v458
        %v467 = vadd.f32 %v431, %v460
        %v468 = vadd.f32 %v432, %v462
        %s469 = sld [smem:[#allocation2 + $0x1f]]
        %v470 = vstv %s469
        %v471 = vmul.f32 %v470, %v422
        %v472 = vmul.f32 %v470, %v423
        %v473 = vmul.f32 %v470, %v424
        %477 = vrot.lane.b32.xlu0 %v471, 127
        %v478 = vpop.permute.xlu0 %477
        %479 = vrot.lane.b32.xlu0 %v472, 127
        %v480 = vpop.permute.xlu0 %479
        %481 = vrot.lane.b32.xlu0 %v473, 127
        %v482 = vpop.permute.xlu0 %481
        %v486 = vadd.f32 %v438, %v478
        %v487 = vadd.f32 %v439, %v480
        %v488 = vadd.f32 %v440, %v482
        %s489 = sld [smem:[#allocation2 + $0x3a]]
        %v490 = vstv %s489
        %v491 = vmul.f32 %v490, %v422
        %v492 = vmul.f32 %v490, %v423
        %v493 = vmul.f32 %v490, %v424
        %497 = vrot.lane.b32.xlu0 %v491, 127
        %v498 = vpop.permute.xlu0 %497
        %499 = vrot.lane.b32.xlu0 %v492, 127
        %v500 = vpop.permute.xlu0 %499
        %501 = vrot.lane.b32.xlu0 %v493, 127
        %v502 = vpop.permute.xlu0 %501
        %v506 = vadd.f32 %v446, %v498
        %v507 = vadd.f32 %v447, %v500
        %v508 = vadd.f32 %v448, %v502
        %s509 = sld [smem:[#allocation2 + $0x5]]
        %v510 = vstv %s509
        %v511 = vmul.f32 %v510, %v422
        %v512 = vmul.f32 %v510, %v423
        %v513 = vmul.f32 %v510, %v424
        %517 = vrot.lane.b32.xlu0 %v511, 126
        %v518 = vpop.permute.xlu0 %517
        %519 = vrot.lane.b32.xlu0 %v512, 126
        %v520 = vpop.permute.xlu0 %519
        %521 = vrot.lane.b32.xlu0 %v513, 126
        %v522 = vpop.permute.xlu0 %521
        %v526 = vadd.f32 %v466, %v518
        %v527 = vadd.f32 %v467, %v520
        %v528 = vadd.f32 %v468, %v522
        %s529 = sld [smem:[#allocation2 + $0x20]]
        %v530 = vstv %s529
        %v531 = vmul.f32 %v530, %v422
        %v532 = vmul.f32 %v530, %v423
        %v533 = vmul.f32 %v530, %v424
        %537 = vrot.lane.b32.xlu0 %v531, 126
        %v538 = vpop.permute.xlu0 %537
        %539 = vrot.lane.b32.xlu0 %v532, 126
        %v540 = vpop.permute.xlu0 %539
        %541 = vrot.lane.b32.xlu0 %v533, 126
        %v542 = vpop.permute.xlu0 %541
        %v546 = vadd.f32 %v486, %v538
        %v547 = vadd.f32 %v487, %v540
        %v548 = vadd.f32 %v488, %v542
        %s549 = sld [smem:[#allocation2 + $0x3b]]
        %v550 = vstv %s549
        %v551 = vmul.f32 %v550, %v422
        %v552 = vmul.f32 %v550, %v423
        %v553 = vmul.f32 %v550, %v424
        %557 = vrot.lane.b32.xlu0 %v551, 126
        %v558 = vpop.permute.xlu0 %557
        %559 = vrot.lane.b32.xlu0 %v552, 126
        %v560 = vpop.permute.xlu0 %559
        %561 = vrot.lane.b32.xlu0 %v553, 126
        %v562 = vpop.permute.xlu0 %561
        %v566 = vadd.f32 %v506, %v558
        %v567 = vadd.f32 %v507, %v560
        %v568 = vadd.f32 %v508, %v562
        %v569 = vld [vmem:[%s274 + $0x4] sm:$0xff]
        %v570 = vld [vmem:[%s274 + $0xc] sm:$0xff]
        %v571 = vld [vmem:[%s274 + $0x14] sm:$0x3]
        %s572 = sld [smem:[#allocation2 + $0x6]]
        %v573 = vstv %s572
        %v574 = vmul.f32 %v573, %v569
        %v575 = vmul.f32 %v573, %v570
        %v576 = vmul.f32 %v573, %v571
        %v577 = vadd.f32 %v526, %v574
        %v578 = vadd.f32 %v527, %v575
        %v579 = vadd.f32 %v528, %v576
        %s580 = sld [smem:[#allocation2 + $0x21]]
        %v581 = vstv %s580
        %v582 = vmul.f32 %v581, %v569
        %v583 = vmul.f32 %v581, %v570
        %v584 = vmul.f32 %v581, %v571
        %v585 = vadd.f32 %v546, %v582
        %v586 = vadd.f32 %v547, %v583
        %v587 = vadd.f32 %v548, %v584
        %s588 = sld [smem:[#allocation2 + $0x3c]]
        %v589 = vstv %s588
        %v590 = vmul.f32 %v589, %v569
        %v591 = vmul.f32 %v589, %v570
        %v592 = vmul.f32 %v589, %v571
        %v593 = vadd.f32 %v566, %v590
        %v594 = vadd.f32 %v567, %v591
        %v595 = vadd.f32 %v568, %v592
        %s596 = sld [smem:[#allocation2 + $0x7]]
        %v597 = vstv %s596
        %v598 = vmul.f32 %v597, %v569
        %v599 = vmul.f32 %v597, %v570
        %v600 = vmul.f32 %v597, %v571
        %604 = vrot.lane.b32.xlu0 %v598, 127
        %v605 = vpop.permute.xlu0 %604
        %606 = vrot.lane.b32.xlu0 %v599, 127
        %v607 = vpop.permute.xlu0 %606
        %608 = vrot.lane.b32.xlu0 %v600, 127
        %v609 = vpop.permute.xlu0 %608
        %v613 = vadd.f32 %v577, %v605
        %v614 = vadd.f32 %v578, %v607
        %v615 = vadd.f32 %v579, %v609
        %s616 = sld [smem:[#allocation2 + $0x22]]
        %v617 = vstv %s616
        %v618 = vmul.f32 %v617, %v569
        %v619 = vmul.f32 %v617, %v570
        %v620 = vmul.f32 %v617, %v571
        %624 = vrot.lane.b32.xlu0 %v618, 127
        %v625 = vpop.permute.xlu0 %624
        %626 = vrot.lane.b32.xlu0 %v619, 127
        %v627 = vpop.permute.xlu0 %626
        %628 = vrot.lane.b32.xlu0 %v620, 127
        %v629 = vpop.permute.xlu0 %628
        %v633 = vadd.f32 %v585, %v625
        %v634 = vadd.f32 %v586, %v627
        %v635 = vadd.f32 %v587, %v629
        %s636 = sld [smem:[#allocation2 + $0x3d]]
        %v637 = vstv %s636
        %v638 = vmul.f32 %v637, %v569
        %v639 = vmul.f32 %v637, %v570
        %v640 = vmul.f32 %v637, %v571
        %644 = vrot.lane.b32.xlu0 %v638, 127
        %v645 = vpop.permute.xlu0 %644
        %646 = vrot.lane.b32.xlu0 %v639, 127
        %v647 = vpop.permute.xlu0 %646
        %648 = vrot.lane.b32.xlu0 %v640, 127
        %v649 = vpop.permute.xlu0 %648
        %v653 = vadd.f32 %v593, %v645
        %v654 = vadd.f32 %v594, %v647
        %v655 = vadd.f32 %v595, %v649
        %s656 = sld [smem:[#allocation2 + $0x8]]
        %v657 = vstv %s656
        %v658 = vmul.f32 %v657, %v569
        %v659 = vmul.f32 %v657, %v570
        %v660 = vmul.f32 %v657, %v571
        %664 = vrot.lane.b32.xlu0 %v658, 126
        %v665 = vpop.permute.xlu0 %664
        %666 = vrot.lane.b32.xlu0 %v659, 126
        %v667 = vpop.permute.xlu0 %666
        %668 = vrot.lane.b32.xlu0 %v660, 126
        %v669 = vpop.permute.xlu0 %668
        %v673 = vadd.f32 %v613, %v665
        %v674 = vadd.f32 %v614, %v667
        %v675 = vadd.f32 %v615, %v669
        %s676 = sld [smem:[#allocation2 + $0x23]]
        %v677 = vstv %s676
        %v678 = vmul.f32 %v677, %v569
        %v679 = vmul.f32 %v677, %v570
        %v680 = vmul.f32 %v677, %v571
        %684 = vrot.lane.b32.xlu0 %v678, 126
        %v685 = vpop.permute.xlu0 %684
        %686 = vrot.lane.b32.xlu0 %v679, 126
        %v687 = vpop.permute.xlu0 %686
        %688 = vrot.lane.b32.xlu0 %v680, 126
        %v689 = vpop.permute.xlu0 %688
        %v693 = vadd.f32 %v633, %v685
        %v694 = vadd.f32 %v634, %v687
        %v695 = vadd.f32 %v635, %v689
        %s696 = sld [smem:[#allocation2 + $0x3e]]
        %v697 = vstv %s696
        %v698 = vmul.f32 %v697, %v569
        %v699 = vmul.f32 %v697, %v570
        %v700 = vmul.f32 %v697, %v571
        %704 = vrot.lane.b32.xlu0 %v698, 126
        %v705 = vpop.permute.xlu0 %704
        %706 = vrot.lane.b32.xlu0 %v699, 126
        %v707 = vpop.permute.xlu0 %706
        %708 = vrot.lane.b32.xlu0 %v700, 126
        %v709 = vpop.permute.xlu0 %708
        %v713 = vadd.f32 %v653, %v705
        %v714 = vadd.f32 %v654, %v707
        %v715 = vadd.f32 %v655, %v709
        %s716 = scalar_lea.vmem %s274, 24
        %v717 = vld [vmem:[%s716 + $0x2] sm:$0xff]
        %v718 = vld [vmem:[%s716 + $0xa] sm:$0xff]
        %v719 = vld [vmem:[%s716 + $0x12] sm:$0x3]
        %s720 = sld [smem:[#allocation2 + $0x9]]
        %v721 = vstv %s720
        %v722 = vmul.f32 %v721, %v717
        %v723 = vmul.f32 %v721, %v718
        %v724 = vmul.f32 %v721, %v719
        %v725 = vadd.f32 %v673, %v722
        %v726 = vadd.f32 %v674, %v723
        %v727 = vadd.f32 %v675, %v724
        %s728 = sld [smem:[#allocation2 + $0x24]]
        %v729 = vstv %s728
        %v730 = vmul.f32 %v729, %v717
        %v731 = vmul.f32 %v729, %v718
        %v732 = vmul.f32 %v729, %v719
        %v733 = vadd.f32 %v693, %v730
        %v734 = vadd.f32 %v694, %v731
        %v735 = vadd.f32 %v695, %v732
        %s736 = sld [smem:[#allocation2 + $0x3f]]
        %v737 = vstv %s736
        %v738 = vmul.f32 %v737, %v717
        %v739 = vmul.f32 %v737, %v718
        %v740 = vmul.f32 %v737, %v719
        %v741 = vadd.f32 %v713, %v738
        %v742 = vadd.f32 %v714, %v739
        %v743 = vadd.f32 %v715, %v740
        %s744 = sld [smem:[#allocation2 + $0xa]]
        %v745 = vstv %s744
        %v746 = vmul.f32 %v745, %v717
        %v747 = vmul.f32 %v745, %v718
        %v748 = vmul.f32 %v745, %v719
        %752 = vrot.lane.b32.xlu0 %v746, 127
        %v753 = vpop.permute.xlu0 %752
        %754 = vrot.lane.b32.xlu0 %v747, 127
        %v755 = vpop.permute.xlu0 %754
        %756 = vrot.lane.b32.xlu0 %v748, 127
        %v757 = vpop.permute.xlu0 %756
        %v761 = vadd.f32 %v725, %v753
        %v762 = vadd.f32 %v726, %v755
        %v763 = vadd.f32 %v727, %v757
        %s764 = sld [smem:[#allocation2 + $0x25]]
        %v765 = vstv %s764
        %v766 = vmul.f32 %v765, %v717
        %v767 = vmul.f32 %v765, %v718
        %v768 = vmul.f32 %v765, %v719
        %772 = vrot.lane.b32.xlu0 %v766, 127
        %v773 = vpop.permute.xlu0 %772
        %774 = vrot.lane.b32.xlu0 %v767, 127
        %v775 = vpop.permute.xlu0 %774
        %776 = vrot.lane.b32.xlu0 %v768, 127
        %v777 = vpop.permute.xlu0 %776
        %v781 = vadd.f32 %v733, %v773
        %v782 = vadd.f32 %v734, %v775
        %v783 = vadd.f32 %v735, %v777
        %s784 = sld [smem:[#allocation2 + $0x40]]
        %v785 = vstv %s784
        %v786 = vmul.f32 %v785, %v717
        %v787 = vmul.f32 %v785, %v718
        %v788 = vmul.f32 %v785, %v719
        %792 = vrot.lane.b32.xlu0 %v786, 127
        %v793 = vpop.permute.xlu0 %792
        %794 = vrot.lane.b32.xlu0 %v787, 127
        %v795 = vpop.permute.xlu0 %794
        %796 = vrot.lane.b32.xlu0 %v788, 127
        %v797 = vpop.permute.xlu0 %796
        %v801 = vadd.f32 %v741, %v793
        %v802 = vadd.f32 %v742, %v795
        %v803 = vadd.f32 %v743, %v797
        %s804 = sld [smem:[#allocation2 + $0xb]]
        %v805 = vstv %s804
        %v806 = vmul.f32 %v805, %v717
        %v807 = vmul.f32 %v805, %v718
        %v808 = vmul.f32 %v805, %v719
        %812 = vrot.lane.b32.xlu0 %v806, 126
        %v813 = vpop.permute.xlu0 %812
        %814 = vrot.lane.b32.xlu0 %v807, 126
        %v815 = vpop.permute.xlu0 %814
        %816 = vrot.lane.b32.xlu0 %v808, 126
        %v817 = vpop.permute.xlu0 %816
        %v821 = vadd.f32 %v761, %v813
        %v822 = vadd.f32 %v762, %v815
        %v823 = vadd.f32 %v763, %v817
        %s824 = sld [smem:[#allocation2 + $0x26]]
        %v825 = vstv %s824
        %v826 = vmul.f32 %v825, %v717
        %v827 = vmul.f32 %v825, %v718
        %v828 = vmul.f32 %v825, %v719
        %832 = vrot.lane.b32.xlu0 %v826, 126
        %v833 = vpop.permute.xlu0 %832
        %834 = vrot.lane.b32.xlu0 %v827, 126
        %v835 = vpop.permute.xlu0 %834
        %836 = vrot.lane.b32.xlu0 %v828, 126
        %v837 = vpop.permute.xlu0 %836
        %v841 = vadd.f32 %v781, %v833
        %v842 = vadd.f32 %v782, %v835
        %v843 = vadd.f32 %v783, %v837
        %s844 = sld [smem:[#allocation2 + $0x41]]
        %v845 = vstv %s844
        %v846 = vmul.f32 %v845, %v717
        %v847 = vmul.f32 %v845, %v718
        %v848 = vmul.f32 %v845, %v719
        %852 = vrot.lane.b32.xlu0 %v846, 126
        %v853 = vpop.permute.xlu0 %852
        %854 = vrot.lane.b32.xlu0 %v847, 126
        %v855 = vpop.permute.xlu0 %854
        %856 = vrot.lane.b32.xlu0 %v848, 126
        %v857 = vpop.permute.xlu0 %856
        %v861 = vadd.f32 %v801, %v853
        %v862 = vadd.f32 %v802, %v855
        %v863 = vadd.f32 %v803, %v857
        %v864 = vld [vmem:[%s716 + $0x3] sm:$0xff]
        %v865 = vld [vmem:[%s716 + $0xb] sm:$0xff]
        %v866 = vld [vmem:[%s716 + $0x13] sm:$0x3]
        %s867 = sld [smem:[#allocation2 + $0xc]]
        %v868 = vstv %s867
        %v869 = vmul.f32 %v868, %v864
        %v870 = vmul.f32 %v868, %v865
        %v871 = vmul.f32 %v868, %v866
        %v872 = vadd.f32 %v821, %v869
        %v873 = vadd.f32 %v822, %v870
        %v874 = vadd.f32 %v823, %v871
        %s875 = sld [smem:[#allocation2 + $0x27]]
        %v876 = vstv %s875
        %v877 = vmul.f32 %v876, %v864
        %v878 = vmul.f32 %v876, %v865
        %v879 = vmul.f32 %v876, %v866
        %v880 = vadd.f32 %v841, %v877
        %v881 = vadd.f32 %v842, %v878
        %v882 = vadd.f32 %v843, %v879
        %s883 = sld [smem:[#allocation2 + $0x42]]
        %v884 = vstv %s883
        %v885 = vmul.f32 %v884, %v864
        %v886 = vmul.f32 %v884, %v865
        %v887 = vmul.f32 %v884, %v866
        %v888 = vadd.f32 %v861, %v885
        %v889 = vadd.f32 %v862, %v886
        %v890 = vadd.f32 %v863, %v887
        %s891 = sld [smem:[#allocation2 + $0xd]]
        %v892 = vstv %s891
        %v893 = vmul.f32 %v892, %v864
        %v894 = vmul.f32 %v892, %v865
        %v895 = vmul.f32 %v892, %v866
        %899 = vrot.lane.b32.xlu0 %v893, 127
        %v900 = vpop.permute.xlu0 %899
        %901 = vrot.lane.b32.xlu0 %v894, 127
        %v902 = vpop.permute.xlu0 %901
        %903 = vrot.lane.b32.xlu0 %v895, 127
        %v904 = vpop.permute.xlu0 %903
        %v908 = vadd.f32 %v872, %v900
        %v909 = vadd.f32 %v873, %v902
        %v910 = vadd.f32 %v874, %v904
        %s911 = sld [smem:[#allocation2 + $0x28]]
        %v912 = vstv %s911
        %v913 = vmul.f32 %v912, %v864
        %v914 = vmul.f32 %v912, %v865
        %v915 = vmul.f32 %v912, %v866
        %919 = vrot.lane.b32.xlu0 %v913, 127
        %v920 = vpop.permute.xlu0 %919
        %921 = vrot.lane.b32.xlu0 %v914, 127
        %v922 = vpop.permute.xlu0 %921
        %923 = vrot.lane.b32.xlu0 %v915, 127
        %v924 = vpop.permute.xlu0 %923
        %v928 = vadd.f32 %v880, %v920
        %v929 = vadd.f32 %v881, %v922
        %v930 = vadd.f32 %v882, %v924
        %s931 = sld [smem:[#allocation2 + $0x43]]
        %v932 = vstv %s931
        %v933 = vmul.f32 %v932, %v864
        %v934 = vmul.f32 %v932, %v865
        %v935 = vmul.f32 %v932, %v866
        %939 = vrot.lane.b32.xlu0 %v933, 127
        %v940 = vpop.permute.xlu0 %939
        %941 = vrot.lane.b32.xlu0 %v934, 127
        %v942 = vpop.permute.xlu0 %941
        %943 = vrot.lane.b32.xlu0 %v935, 127
        %v944 = vpop.permute.xlu0 %943
        %v948 = vadd.f32 %v888, %v940
        %v949 = vadd.f32 %v889, %v942
        %v950 = vadd.f32 %v890, %v944
        %s951 = sld [smem:[#allocation2 + $0xe]]
        %v952 = vstv %s951
        %v953 = vmul.f32 %v952, %v864
        %v954 = vmul.f32 %v952, %v865
        %v955 = vmul.f32 %v952, %v866
        %959 = vrot.lane.b32.xlu0 %v953, 126
        %v960 = vpop.permute.xlu0 %959
        %961 = vrot.lane.b32.xlu0 %v954, 126
        %v962 = vpop.permute.xlu0 %961
        %963 = vrot.lane.b32.xlu0 %v955, 126
        %v964 = vpop.permute.xlu0 %963
        %v968 = vadd.f32 %v908, %v960
        %v969 = vadd.f32 %v909, %v962
        %v970 = vadd.f32 %v910, %v964
        %s971 = sld [smem:[#allocation2 + $0x29]]
        %v972 = vstv %s971
        %v973 = vmul.f32 %v972, %v864
        %v974 = vmul.f32 %v972, %v865
        %v975 = vmul.f32 %v972, %v866
        %979 = vrot.lane.b32.xlu0 %v973, 126
        %v980 = vpop.permute.xlu0 %979
        %981 = vrot.lane.b32.xlu0 %v974, 126
        %v982 = vpop.permute.xlu0 %981
        %983 = vrot.lane.b32.xlu0 %v975, 126
        %v984 = vpop.permute.xlu0 %983
        %v988 = vadd.f32 %v928, %v980
        %v989 = vadd.f32 %v929, %v982
        %v990 = vadd.f32 %v930, %v984
        %s991 = sld [smem:[#allocation2 + $0x44]]
        %v992 = vstv %s991
        %v993 = vmul.f32 %v992, %v864
        %v994 = vmul.f32 %v992, %v865
        %v995 = vmul.f32 %v992, %v866
        %999 = vrot.lane.b32.xlu0 %v993, 126
        %v1000 = vpop.permute.xlu0 %999
        %1001 = vrot.lane.b32.xlu0 %v994, 126
        %v1002 = vpop.permute.xlu0 %1001
        %1003 = vrot.lane.b32.xlu0 %v995, 126
        %v1004 = vpop.permute.xlu0 %1003
        %v1008 = vadd.f32 %v948, %v1000
        %v1009 = vadd.f32 %v949, %v1002
        %v1010 = vadd.f32 %v950, %v1004
        %v1011 = vld [vmem:[%s716 + $0x4] sm:$0xff]
        %v1012 = vld [vmem:[%s716 + $0xc] sm:$0xff]
        %v1013 = vld [vmem:[%s716 + $0x14] sm:$0x3]
        %s1014 = sld [smem:[#allocation2 + $0xf]]
        %v1015 = vstv %s1014
        %v1016 = vmul.f32 %v1015, %v1011
        %v1017 = vmul.f32 %v1015, %v1012
        %v1018 = vmul.f32 %v1015, %v1013
        %v1019 = vadd.f32 %v968, %v1016
        %v1020 = vadd.f32 %v969, %v1017
        %v1021 = vadd.f32 %v970, %v1018
        %s1022 = sld [smem:[#allocation2 + $0x2a]]
        %v1023 = vstv %s1022
        %v1024 = vmul.f32 %v1023, %v1011
        %v1025 = vmul.f32 %v1023, %v1012
        %v1026 = vmul.f32 %v1023, %v1013
        %v1027 = vadd.f32 %v988, %v1024
        %v1028 = vadd.f32 %v989, %v1025
        %v1029 = vadd.f32 %v990, %v1026
        %s1030 = sld [smem:[#allocation2 + $0x45]]
        %v1031 = vstv %s1030
        %v1032 = vmul.f32 %v1031, %v1011
        %v1033 = vmul.f32 %v1031, %v1012
        %v1034 = vmul.f32 %v1031, %v1013
        %v1035 = vadd.f32 %v1008, %v1032
        %v1036 = vadd.f32 %v1009, %v1033
        %v1037 = vadd.f32 %v1010, %v1034
        %s1038 = sld [smem:[#allocation2 + $0x10]]
        %v1039 = vstv %s1038
        %v1040 = vmul.f32 %v1039, %v1011
        %v1041 = vmul.f32 %v1039, %v1012
        %v1042 = vmul.f32 %v1039, %v1013
        %1046 = vrot.lane.b32.xlu0 %v1040, 127
        %v1047 = vpop.permute.xlu0 %1046
        %1048 = vrot.lane.b32.xlu0 %v1041, 127
        %v1049 = vpop.permute.xlu0 %1048
        %1050 = vrot.lane.b32.xlu0 %v1042, 127
        %v1051 = vpop.permute.xlu0 %1050
        %v1055 = vadd.f32 %v1019, %v1047
        %v1056 = vadd.f32 %v1020, %v1049
        %v1057 = vadd.f32 %v1021, %v1051
        %s1058 = sld [smem:[#allocation2 + $0x2b]]
        %v1059 = vstv %s1058
        %v1060 = vmul.f32 %v1059, %v1011
        %v1061 = vmul.f32 %v1059, %v1012
        %v1062 = vmul.f32 %v1059, %v1013
        %1066 = vrot.lane.b32.xlu0 %v1060, 127
        %v1067 = vpop.permute.xlu0 %1066
        %1068 = vrot.lane.b32.xlu0 %v1061, 127
        %v1069 = vpop.permute.xlu0 %1068
        %1070 = vrot.lane.b32.xlu0 %v1062, 127
        %v1071 = vpop.permute.xlu0 %1070
        %v1075 = vadd.f32 %v1027, %v1067
        %v1076 = vadd.f32 %v1028, %v1069
        %v1077 = vadd.f32 %v1029, %v1071
        %s1078 = sld [smem:[#allocation2 + $0x46]]
        %v1079 = vstv %s1078
        %v1080 = vmul.f32 %v1079, %v1011
        %v1081 = vmul.f32 %v1079, %v1012
        %v1082 = vmul.f32 %v1079, %v1013
        %1086 = vrot.lane.b32.xlu0 %v1080, 127
        %v1087 = vpop.permute.xlu0 %1086
        %1088 = vrot.lane.b32.xlu0 %v1081, 127
        %v1089 = vpop.permute.xlu0 %1088
        %1090 = vrot.lane.b32.xlu0 %v1082, 127
        %v1091 = vpop.permute.xlu0 %1090
        %v1095 = vadd.f32 %v1035, %v1087
        %v1096 = vadd.f32 %v1036, %v1089
        %v1097 = vadd.f32 %v1037, %v1091
        %s1098 = sld [smem:[#allocation2 + $0x11]]
        %v1099 = vstv %s1098
        %v1100 = vmul.f32 %v1099, %v1011
        %v1101 = vmul.f32 %v1099, %v1012
        %v1102 = vmul.f32 %v1099, %v1013
        %1106 = vrot.lane.b32.xlu0 %v1100, 126
        %v1107 = vpop.permute.xlu0 %1106
        %1108 = vrot.lane.b32.xlu0 %v1101, 126
        %v1109 = vpop.permute.xlu0 %1108
        %1110 = vrot.lane.b32.xlu0 %v1102, 126
        %v1111 = vpop.permute.xlu0 %1110
        %v1115 = vadd.f32 %v1055, %v1107
        %v1116 = vadd.f32 %v1056, %v1109
        %v1117 = vadd.f32 %v1057, %v1111
        %s1118 = sld [smem:[#allocation2 + $0x2c]]
        %v1119 = vstv %s1118
        %v1120 = vmul.f32 %v1119, %v1011
        %v1121 = vmul.f32 %v1119, %v1012
        %v1122 = vmul.f32 %v1119, %v1013
        %1126 = vrot.lane.b32.xlu0 %v1120, 126
        %v1127 = vpop.permute.xlu0 %1126
        %1128 = vrot.lane.b32.xlu0 %v1121, 126
        %v1129 = vpop.permute.xlu0 %1128
        %1130 = vrot.lane.b32.xlu0 %v1122, 126
        %v1131 = vpop.permute.xlu0 %1130
        %v1135 = vadd.f32 %v1075, %v1127
        %v1136 = vadd.f32 %v1076, %v1129
        %v1137 = vadd.f32 %v1077, %v1131
        %s1138 = sld [smem:[#allocation2 + $0x47]]
        %v1139 = vstv %s1138
        %v1140 = vmul.f32 %v1139, %v1011
        %v1141 = vmul.f32 %v1139, %v1012
        %v1142 = vmul.f32 %v1139, %v1013
        %1146 = vrot.lane.b32.xlu0 %v1140, 126
        %v1147 = vpop.permute.xlu0 %1146
        %1148 = vrot.lane.b32.xlu0 %v1141, 126
        %v1149 = vpop.permute.xlu0 %1148
        %1150 = vrot.lane.b32.xlu0 %v1142, 126
        %v1151 = vpop.permute.xlu0 %1150
        %v1155 = vadd.f32 %v1095, %v1147
        %v1156 = vadd.f32 %v1096, %v1149
        %v1157 = vadd.f32 %v1097, %v1151
        %s1158 = scalar_lea.vmem %s274, 48
        %v1159 = vld [vmem:[%s1158 + $0x2] sm:$0xff]
        %v1160 = vld [vmem:[%s1158 + $0xa] sm:$0xff]
        %v1161 = vld [vmem:[%s1158 + $0x12] sm:$0x3]
        %s1162 = sld [smem:[#allocation2 + $0x12]]
        %v1163 = vstv %s1162
        %v1164 = vmul.f32 %v1163, %v1159
        %v1165 = vmul.f32 %v1163, %v1160
        %v1166 = vmul.f32 %v1163, %v1161
        %v1167 = vadd.f32 %v1115, %v1164
        %v1168 = vadd.f32 %v1116, %v1165
        %v1169 = vadd.f32 %v1117, %v1166
        %s1170 = sld [smem:[#allocation2 + $0x2d]]
        %v1171 = vstv %s1170
        %v1172 = vmul.f32 %v1171, %v1159
        %v1173 = vmul.f32 %v1171, %v1160
        %v1174 = vmul.f32 %v1171, %v1161
        %v1175 = vadd.f32 %v1135, %v1172
        %v1176 = vadd.f32 %v1136, %v1173
        %v1177 = vadd.f32 %v1137, %v1174
        %s1178 = sld [smem:[#allocation2 + $0x48]]
        %v1179 = vstv %s1178
        %v1180 = vmul.f32 %v1179, %v1159
        %v1181 = vmul.f32 %v1179, %v1160
        %v1182 = vmul.f32 %v1179, %v1161
        %v1183 = vadd.f32 %v1155, %v1180
        %v1184 = vadd.f32 %v1156, %v1181
        %v1185 = vadd.f32 %v1157, %v1182
        %s1186 = sld [smem:[#allocation2 + $0x13]]
        %v1187 = vstv %s1186
        %v1188 = vmul.f32 %v1187, %v1159
        %v1189 = vmul.f32 %v1187, %v1160
        %v1190 = vmul.f32 %v1187, %v1161
        %1194 = vrot.lane.b32.xlu0 %v1188, 127
        %v1195 = vpop.permute.xlu0 %1194
        %1196 = vrot.lane.b32.xlu0 %v1189, 127
        %v1197 = vpop.permute.xlu0 %1196
        %1198 = vrot.lane.b32.xlu0 %v1190, 127
        %v1199 = vpop.permute.xlu0 %1198
        %v1203 = vadd.f32 %v1167, %v1195
        %v1204 = vadd.f32 %v1168, %v1197
        %v1205 = vadd.f32 %v1169, %v1199
        %s1206 = sld [smem:[#allocation2 + $0x2e]]
        %v1207 = vstv %s1206
        %v1208 = vmul.f32 %v1207, %v1159
        %v1209 = vmul.f32 %v1207, %v1160
        %v1210 = vmul.f32 %v1207, %v1161
        %1214 = vrot.lane.b32.xlu0 %v1208, 127
        %v1215 = vpop.permute.xlu0 %1214
        %1216 = vrot.lane.b32.xlu0 %v1209, 127
        %v1217 = vpop.permute.xlu0 %1216
        %1218 = vrot.lane.b32.xlu0 %v1210, 127
        %v1219 = vpop.permute.xlu0 %1218
        %v1223 = vadd.f32 %v1175, %v1215
        %v1224 = vadd.f32 %v1176, %v1217
        %v1225 = vadd.f32 %v1177, %v1219
        %s1226 = sld [smem:[#allocation2 + $0x49]]
        %v1227 = vstv %s1226
        %v1228 = vmul.f32 %v1227, %v1159
        %v1229 = vmul.f32 %v1227, %v1160
        %v1230 = vmul.f32 %v1227, %v1161
        %1234 = vrot.lane.b32.xlu0 %v1228, 127
        %v1235 = vpop.permute.xlu0 %1234
        %1236 = vrot.lane.b32.xlu0 %v1229, 127
        %v1237 = vpop.permute.xlu0 %1236
        %1238 = vrot.lane.b32.xlu0 %v1230, 127
        %v1239 = vpop.permute.xlu0 %1238
        %v1243 = vadd.f32 %v1183, %v1235
        %v1244 = vadd.f32 %v1184, %v1237
        %v1245 = vadd.f32 %v1185, %v1239
        %s1246 = sld [smem:[#allocation2 + $0x14]]
        %v1247 = vstv %s1246
        %v1248 = vmul.f32 %v1247, %v1159
        %v1249 = vmul.f32 %v1247, %v1160
        %v1250 = vmul.f32 %v1247, %v1161
        %1254 = vrot.lane.b32.xlu0 %v1248, 126
        %v1255 = vpop.permute.xlu0 %1254
        %1256 = vrot.lane.b32.xlu0 %v1249, 126
        %v1257 = vpop.permute.xlu0 %1256
        %1258 = vrot.lane.b32.xlu0 %v1250, 126
        %v1259 = vpop.permute.xlu0 %1258
        %v1263 = vadd.f32 %v1203, %v1255
        %v1264 = vadd.f32 %v1204, %v1257
        %v1265 = vadd.f32 %v1205, %v1259
        %s1266 = sld [smem:[#allocation2 + $0x2f]]
        %v1267 = vstv %s1266
        %v1268 = vmul.f32 %v1267, %v1159
        %v1269 = vmul.f32 %v1267, %v1160
        %v1270 = vmul.f32 %v1267, %v1161
        %1274 = vrot.lane.b32.xlu0 %v1268, 126
        %v1275 = vpop.permute.xlu0 %1274
        %1276 = vrot.lane.b32.xlu0 %v1269, 126
        %v1277 = vpop.permute.xlu0 %1276
        %1278 = vrot.lane.b32.xlu0 %v1270, 126
        %v1279 = vpop.permute.xlu0 %1278
        %v1283 = vadd.f32 %v1223, %v1275
        %v1284 = vadd.f32 %v1224, %v1277
        %v1285 = vadd.f32 %v1225, %v1279
        %s1286 = sld [smem:[#allocation2 + $0x4a]]
        %v1287 = vstv %s1286
        %v1288 = vmul.f32 %v1287, %v1159
        %v1289 = vmul.f32 %v1287, %v1160
        %v1290 = vmul.f32 %v1287, %v1161
        %1294 = vrot.lane.b32.xlu0 %v1288, 126
        %v1295 = vpop.permute.xlu0 %1294
        %1296 = vrot.lane.b32.xlu0 %v1289, 126
        %v1297 = vpop.permute.xlu0 %1296
        %1298 = vrot.lane.b32.xlu0 %v1290, 126
        %v1299 = vpop.permute.xlu0 %1298
        %v1303 = vadd.f32 %v1243, %v1295
        %v1304 = vadd.f32 %v1244, %v1297
        %v1305 = vadd.f32 %v1245, %v1299
        %v1306 = vld [vmem:[%s1158 + $0x3] sm:$0xff]
        %v1307 = vld [vmem:[%s1158 + $0xb] sm:$0xff]
        %v1308 = vld [vmem:[%s1158 + $0x13] sm:$0x3]
        %s1309 = sld [smem:[#allocation2 + $0x15]]
        %v1310 = vstv %s1309
        %v1311 = vmul.f32 %v1310, %v1306
        %v1312 = vmul.f32 %v1310, %v1307
        %v1313 = vmul.f32 %v1310, %v1308
        %v1314 = vadd.f32 %v1263, %v1311
        %v1315 = vadd.f32 %v1264, %v1312
        %v1316 = vadd.f32 %v1265, %v1313
        %s1317 = sld [smem:[#allocation2 + $0x30]]
        %v1318 = vstv %s1317
        %v1319 = vmul.f32 %v1318, %v1306
        %v1320 = vmul.f32 %v1318, %v1307
        %v1321 = vmul.f32 %v1318, %v1308
        %v1322 = vadd.f32 %v1283, %v1319
        %v1323 = vadd.f32 %v1284, %v1320
        %v1324 = vadd.f32 %v1285, %v1321
        %s1325 = sld [smem:[#allocation2 + $0x4b]]
        %v1326 = vstv %s1325
        %v1327 = vmul.f32 %v1326, %v1306
        %v1328 = vmul.f32 %v1326, %v1307
        %v1329 = vmul.f32 %v1326, %v1308
        %v1330 = vadd.f32 %v1303, %v1327
        %v1331 = vadd.f32 %v1304, %v1328
        %v1332 = vadd.f32 %v1305, %v1329
        %s1333 = sld [smem:[#allocation2 + $0x16]]
        %v1334 = vstv %s1333
        %v1335 = vmul.f32 %v1334, %v1306
        %v1336 = vmul.f32 %v1334, %v1307
        %v1337 = vmul.f32 %v1334, %v1308
        %1341 = vrot.lane.b32.xlu0 %v1335, 127
        %v1342 = vpop.permute.xlu0 %1341
        %1343 = vrot.lane.b32.xlu0 %v1336, 127
        %v1344 = vpop.permute.xlu0 %1343
        %1345 = vrot.lane.b32.xlu0 %v1337, 127
        %v1346 = vpop.permute.xlu0 %1345
        %v1350 = vadd.f32 %v1314, %v1342
        %v1351 = vadd.f32 %v1315, %v1344
        %v1352 = vadd.f32 %v1316, %v1346
        %s1353 = sld [smem:[#allocation2 + $0x31]]
        %v1354 = vstv %s1353
        %v1355 = vmul.f32 %v1354, %v1306
        %v1356 = vmul.f32 %v1354, %v1307
        %v1357 = vmul.f32 %v1354, %v1308
        %1361 = vrot.lane.b32.xlu0 %v1355, 127
        %v1362 = vpop.permute.xlu0 %1361
        %1363 = vrot.lane.b32.xlu0 %v1356, 127
        %v1364 = vpop.permute.xlu0 %1363
        %1365 = vrot.lane.b32.xlu0 %v1357, 127
        %v1366 = vpop.permute.xlu0 %1365
        %v1370 = vadd.f32 %v1322, %v1362
        %v1371 = vadd.f32 %v1323, %v1364
        %v1372 = vadd.f32 %v1324, %v1366
        %s1373 = sld [smem:[#allocation2 + $0x4c]]
        %v1374 = vstv %s1373
        %v1375 = vmul.f32 %v1374, %v1306
        %v1376 = vmul.f32 %v1374, %v1307
        %v1377 = vmul.f32 %v1374, %v1308
        %1381 = vrot.lane.b32.xlu0 %v1375, 127
        %v1382 = vpop.permute.xlu0 %1381
        %1383 = vrot.lane.b32.xlu0 %v1376, 127
        %v1384 = vpop.permute.xlu0 %1383
        %1385 = vrot.lane.b32.xlu0 %v1377, 127
        %v1386 = vpop.permute.xlu0 %1385
        %v1390 = vadd.f32 %v1330, %v1382
        %v1391 = vadd.f32 %v1331, %v1384
        %v1392 = vadd.f32 %v1332, %v1386
        %s1393 = sld [smem:[#allocation2 + $0x17]]
        %v1394 = vstv %s1393
        %v1395 = vmul.f32 %v1394, %v1306
        %v1396 = vmul.f32 %v1394, %v1307
        %v1397 = vmul.f32 %v1394, %v1308
        %1401 = vrot.lane.b32.xlu0 %v1395, 126
        %v1402 = vpop.permute.xlu0 %1401
        %1403 = vrot.lane.b32.xlu0 %v1396, 126
        %v1404 = vpop.permute.xlu0 %1403
        %1405 = vrot.lane.b32.xlu0 %v1397, 126
        %v1406 = vpop.permute.xlu0 %1405
        %v1410 = vadd.f32 %v1350, %v1402
        %v1411 = vadd.f32 %v1351, %v1404
        %v1412 = vadd.f32 %v1352, %v1406
        %s1413 = sld [smem:[#allocation2 + $0x32]]
        %v1414 = vstv %s1413
        %v1415 = vmul.f32 %v1414, %v1306
        %v1416 = vmul.f32 %v1414, %v1307
        %v1417 = vmul.f32 %v1414, %v1308
        %1421 = vrot.lane.b32.xlu0 %v1415, 126
        %v1422 = vpop.permute.xlu0 %1421
        %1423 = vrot.lane.b32.xlu0 %v1416, 126
        %v1424 = vpop.permute.xlu0 %1423
        %1425 = vrot.lane.b32.xlu0 %v1417, 126
        %v1426 = vpop.permute.xlu0 %1425
        %v1430 = vadd.f32 %v1370, %v1422
        %v1431 = vadd.f32 %v1371, %v1424
        %v1432 = vadd.f32 %v1372, %v1426
        %s1433 = sld [smem:[#allocation2 + $0x4d]]
        %v1434 = vstv %s1433
        %v1435 = vmul.f32 %v1434, %v1306
        %v1436 = vmul.f32 %v1434, %v1307
        %v1437 = vmul.f32 %v1434, %v1308
        %1441 = vrot.lane.b32.xlu0 %v1435, 126
        %v1442 = vpop.permute.xlu0 %1441
        %1443 = vrot.lane.b32.xlu0 %v1436, 126
        %v1444 = vpop.permute.xlu0 %1443
        %1445 = vrot.lane.b32.xlu0 %v1437, 126
        %v1446 = vpop.permute.xlu0 %1445
        %v1450 = vadd.f32 %v1390, %v1442
        %v1451 = vadd.f32 %v1391, %v1444
        %v1452 = vadd.f32 %v1392, %v1446
        %v1453 = vld [vmem:[%s1158 + $0x4] sm:$0xff]
        %v1454 = vld [vmem:[%s1158 + $0xc] sm:$0xff]
        %v1455 = vld [vmem:[%s1158 + $0x14] sm:$0x3]
        %s1456 = sld [smem:[#allocation2 + $0x18]]
        %v1457 = vstv %s1456
        %v1458 = vmul.f32 %v1457, %v1453
        %v1459 = vmul.f32 %v1457, %v1454
        %v1460 = vmul.f32 %v1457, %v1455
        %v1461 = vadd.f32 %v1410, %v1458
        %v1462 = vadd.f32 %v1411, %v1459
        %v1463 = vadd.f32 %v1412, %v1460
        %s1464 = sld [smem:[#allocation2 + $0x33]]
        %v1465 = vstv %s1464
        %v1466 = vmul.f32 %v1465, %v1453
        %v1467 = vmul.f32 %v1465, %v1454
        %v1468 = vmul.f32 %v1465, %v1455
        %v1469 = vadd.f32 %v1430, %v1466
        %v1470 = vadd.f32 %v1431, %v1467
        %v1471 = vadd.f32 %v1432, %v1468
        %s1472 = sld [smem:[#allocation2 + $0x4e]]
        %v1473 = vstv %s1472
        %v1474 = vmul.f32 %v1473, %v1453
        %v1475 = vmul.f32 %v1473, %v1454
        %v1476 = vmul.f32 %v1473, %v1455
        %v1477 = vadd.f32 %v1450, %v1474
        %v1478 = vadd.f32 %v1451, %v1475
        %v1479 = vadd.f32 %v1452, %v1476
        %s1480 = sld [smem:[#allocation2 + $0x19]]
        %v1481 = vstv %s1480
        %v1482 = vmul.f32 %v1481, %v1453
        %v1483 = vmul.f32 %v1481, %v1454
        %v1484 = vmul.f32 %v1481, %v1455
        %1488 = vrot.lane.b32.xlu0 %v1482, 127
        %v1489 = vpop.permute.xlu0 %1488
        %1490 = vrot.lane.b32.xlu0 %v1483, 127
        %v1491 = vpop.permute.xlu0 %1490
        %1492 = vrot.lane.b32.xlu0 %v1484, 127
        %v1493 = vpop.permute.xlu0 %1492
        %v1497 = vadd.f32 %v1461, %v1489
        %v1498 = vadd.f32 %v1462, %v1491
        %v1499 = vadd.f32 %v1463, %v1493
        %s1500 = sld [smem:[#allocation2 + $0x34]]
        %v1501 = vstv %s1500
        %v1502 = vmul.f32 %v1501, %v1453
        %v1503 = vmul.f32 %v1501, %v1454
        %v1504 = vmul.f32 %v1501, %v1455
        %1508 = vrot.lane.b32.xlu0 %v1502, 127
        %v1509 = vpop.permute.xlu0 %1508
        %1510 = vrot.lane.b32.xlu0 %v1503, 127
        %v1511 = vpop.permute.xlu0 %1510
        %1512 = vrot.lane.b32.xlu0 %v1504, 127
        %v1513 = vpop.permute.xlu0 %1512
        %v1517 = vadd.f32 %v1469, %v1509
        %v1518 = vadd.f32 %v1470, %v1511
        %v1519 = vadd.f32 %v1471, %v1513
        %s1520 = sld [smem:[#allocation2 + $0x4f]]
        %v1521 = vstv %s1520
        %v1522 = vmul.f32 %v1521, %v1453
        %v1523 = vmul.f32 %v1521, %v1454
        %v1524 = vmul.f32 %v1521, %v1455
        %1528 = vrot.lane.b32.xlu0 %v1522, 127
        %v1529 = vpop.permute.xlu0 %1528
        %1530 = vrot.lane.b32.xlu0 %v1523, 127
        %v1531 = vpop.permute.xlu0 %1530
        %1532 = vrot.lane.b32.xlu0 %v1524, 127
        %v1533 = vpop.permute.xlu0 %1532
        %v1537 = vadd.f32 %v1477, %v1529
        %v1538 = vadd.f32 %v1478, %v1531
        %v1539 = vadd.f32 %v1479, %v1533
        %s1540 = sld [smem:[#allocation2 + $0x1a]]
        %v1541 = vstv %s1540
        %v1542 = vmul.f32 %v1541, %v1453
        %v1543 = vmul.f32 %v1541, %v1454
        %v1544 = vmul.f32 %v1541, %v1455
        %1548 = vrot.lane.b32.xlu0 %v1542, 126
        %v1549 = vpop.permute.xlu0 %1548
        %1550 = vrot.lane.b32.xlu0 %v1543, 126
        %v1551 = vpop.permute.xlu0 %1550
        %1552 = vrot.lane.b32.xlu0 %v1544, 126
        %v1553 = vpop.permute.xlu0 %1552
        %v1557 = vadd.f32 %v1497, %v1549
        %v1558 = vadd.f32 %v1498, %v1551
        %v1559 = vadd.f32 %v1499, %v1553
        %s1560 = sld [smem:[#allocation2 + $0x35]]
        %v1561 = vstv %s1560
        %v1562 = vmul.f32 %v1561, %v1453
        %v1563 = vmul.f32 %v1561, %v1454
        %v1564 = vmul.f32 %v1561, %v1455
        %1568 = vrot.lane.b32.xlu0 %v1562, 126
        %v1569 = vpop.permute.xlu0 %1568
        %1570 = vrot.lane.b32.xlu0 %v1563, 126
        %v1571 = vpop.permute.xlu0 %1570
        %1572 = vrot.lane.b32.xlu0 %v1564, 126
        %v1573 = vpop.permute.xlu0 %1572
        %v1577 = vadd.f32 %v1517, %v1569
        %v1578 = vadd.f32 %v1518, %v1571
        %v1579 = vadd.f32 %v1519, %v1573
        %s1580 = sld [smem:[#allocation2 + $0x50]]
        %v1581 = vstv %s1580
        %v1582 = vmul.f32 %v1581, %v1453
        %v1583 = vmul.f32 %v1581, %v1454
        %v1584 = vmul.f32 %v1581, %v1455
        %1588 = vrot.lane.b32.xlu0 %v1582, 126
        %v1589 = vpop.permute.xlu0 %1588
        %1590 = vrot.lane.b32.xlu0 %v1583, 126
        %v1591 = vpop.permute.xlu0 %1590
        %1592 = vrot.lane.b32.xlu0 %v1584, 126
        %v1593 = vpop.permute.xlu0 %1592
        %v1597 = vadd.f32 %v1537, %v1589
        %v1598 = vadd.f32 %v1538, %v1591
        %v1599 = vadd.f32 %v1539, %v1593
        %s1600 = sld [smem:[#allocation5]]
        %v1601 = vstv %s1600
        %v1602 = vadd.f32 %v1557, %v1601
        %v1603 = vadd.f32 %v1558, %v1601
        %v1604 = vadd.f32 %v1559, %v1601
        %s1605 = sld [smem:[#allocation5 + $0x1]]
        %v1606 = vstv %s1605
        %v1607 = vadd.f32 %v1577, %v1606
        %v1608 = vadd.f32 %v1578, %v1606
        %v1609 = vadd.f32 %v1579, %v1606
        %s1610 = sld [smem:[#allocation5 + $0x2]]
        %v1611 = vstv %s1610
        %v1612 = vadd.f32 %v1597, %v1611
        %v1613 = vadd.f32 %v1598, %v1611
        %v1614 = vadd.f32 %v1599, %v1611
        %s1615 = sld [smem:[#allocation7]]
        %v1616 = vstv %s1615
        %v1617 = vmul.f32 %v1616, %v1602
        %v1618 = vmul.f32 %v1616, %v1603
        %v1619 = vadd.f32 %v1617, 0.0
        %v1620 = vadd.f32 %v1618, 0.0
        %s1621 = sld [smem:[#allocation7 + $0x1b]]
        %v1622 = vstv %s1621
        %v1623 = vmul.f32 %v1622, %v1602
        %v1624 = vmul.f32 %v1622, %v1603
        %v1625 = vadd.f32 %v1623, 0.0
        %v1626 = vadd.f32 %v1624, 0.0
        %s1627 = sld [smem:[#allocation7 + $0x36]]
        %v1628 = vstv %s1627
        %v1629 = vmul.f32 %v1628, %v1602
        %v1630 = vmul.f32 %v1628, %v1603
        %v1631 = vadd.f32 %v1629, 0.0
        %v1632 = vadd.f32 %v1630, 0.0
        %s1633 = sld [smem:[#allocation7 + $0x1]]
        %v1634 = vstv %s1633
        %v1635 = vmul.f32 %v1634, %v1602
        %v1636 = vmul.f32 %v1634, %v1603
        %1639 = vrot.lane.b32.xlu0 %v1635, 127
        %v1640 = vpop.permute.xlu0 %1639
        %1641 = vrot.lane.b32.xlu0 %v1636, 127
        %v1642 = vpop.permute.xlu0 %1641
        %v1645 = vadd.f32 %v1619, %v1640
        %v1646 = vadd.f32 %v1620, %v1642
        %s1647 = sld [smem:[#allocation7 + $0x1c]]
        %v1648 = vstv %s1647
        %v1649 = vmul.f32 %v1648, %v1602
        %v1650 = vmul.f32 %v1648, %v1603
        %1653 = vrot.lane.b32.xlu0 %v1649, 127
        %v1654 = vpop.permute.xlu0 %1653
        %1655 = vrot.lane.b32.xlu0 %v1650, 127
        %v1656 = vpop.permute.xlu0 %1655
        %v1659 = vadd.f32 %v1625, %v1654
        %v1660 = vadd.f32 %v1626, %v1656
        %s1661 = sld [smem:[#allocation7 + $0x37]]
        %v1662 = vstv %s1661
        %v1663 = vmul.f32 %v1662, %v1602
        %v1664 = vmul.f32 %v1662, %v1603
        %1667 = vrot.lane.b32.xlu0 %v1663, 127
        %v1668 = vpop.permute.xlu0 %1667
        %1669 = vrot.lane.b32.xlu0 %v1664, 127
        %v1670 = vpop.permute.xlu0 %1669
        %v1673 = vadd.f32 %v1631, %v1668
        %v1674 = vadd.f32 %v1632, %v1670
        %s1675 = sld [smem:[#allocation7 + $0x2]]
        %v1676 = vstv %s1675
        %v1677 = vmul.f32 %v1676, %v1602
        %v1678 = vmul.f32 %v1676, %v1603
        %1681 = vrot.lane.b32.xlu0 %v1677, 126
        %v1682 = vpop.permute.xlu0 %1681
        %1683 = vrot.lane.b32.xlu0 %v1678, 126
        %v1684 = vpop.permute.xlu0 %1683
        %v1687 = vadd.f32 %v1645, %v1682
        %v1688 = vadd.f32 %v1646, %v1684
        %s1689 = sld [smem:[#allocation7 + $0x1d]]
        %v1690 = vstv %s1689
        %v1691 = vmul.f32 %v1690, %v1602
        %v1692 = vmul.f32 %v1690, %v1603
        %1695 = vrot.lane.b32.xlu0 %v1691, 126
        %v1696 = vpop.permute.xlu0 %1695
        %1697 = vrot.lane.b32.xlu0 %v1692, 126
        %v1698 = vpop.permute.xlu0 %1697
        %v1701 = vadd.f32 %v1659, %v1696
        %v1702 = vadd.f32 %v1660, %v1698
        %s1703 = sld [smem:[#allocation7 + $0x38]]
        %v1704 = vstv %s1703
        %v1705 = vmul.f32 %v1704, %v1602
        %v1706 = vmul.f32 %v1704, %v1603
        %1709 = vrot.lane.b32.xlu0 %v1705, 126
        %v1710 = vpop.permute.xlu0 %1709
        %1711 = vrot.lane.b32.xlu0 %v1706, 126
        %v1712 = vpop.permute.xlu0 %1711
        %v1715 = vadd.f32 %v1673, %v1710
        %v1716 = vadd.f32 %v1674, %v1712
        %s1717 = sld [smem:[#allocation7 + $0x3]]
        %v1718 = vstv %s1717
        %v1719 = vmul.f32 %v1718, %v1602
        %v1720 = vmul.f32 %v1718, %v1603
        %v1721 = vmul.f32 %v1718, %v1604
        %vm1725 = vcmask 1046528
        %v1726 = vrot.slane %v1719, 1
        %v1727 = vrot.slane %v1720, 1
        %v1728 = vsel %vm1725, %v1726, %v1727
        %v1729 = vrot.slane %v1721, 1
        %v1730 = vsel %vm1725, %v1727, %v1729
        %v1733 = vadd.f32 %v1687, %v1728
        %v1734 = vadd.f32 %v1688, %v1730
        %s1735 = sld [smem:[#allocation7 + $0x1e]]
        %v1736 = vstv %s1735
        %v1737 = vmul.f32 %v1736, %v1602
        %v1738 = vmul.f32 %v1736, %v1603
        %v1739 = vmul.f32 %v1736, %v1604
        %v1743 = vrot.slane %v1737, 1
        %v1744 = vrot.slane %v1738, 1
        %v1745 = vsel %vm1725, %v1743, %v1744
        %v1746 = vrot.slane %v1739, 1
        %v1747 = vsel %vm1725, %v1744, %v1746
        %v1750 = vadd.f32 %v1701, %v1745
        %v1751 = vadd.f32 %v1702, %v1747
        %s1752 = sld [smem:[#allocation7 + $0x39]]
        %v1753 = vstv %s1752
        %v1754 = vmul.f32 %v1753, %v1602
        %v1755 = vmul.f32 %v1753, %v1603
        %v1756 = vmul.f32 %v1753, %v1604
        %v1760 = vrot.slane %v1754, 1
        %v1761 = vrot.slane %v1755, 1
        %v1762 = vsel %vm1725, %v1760, %v1761
        %v1763 = vrot.slane %v1756, 1
        %v1764 = vsel %vm1725, %v1761, %v1763
        %v1767 = vadd.f32 %v1715, %v1762
        %v1768 = vadd.f32 %v1716, %v1764
        %s1769 = sld [smem:[#allocation7 + $0x4]]
        %v1770 = vstv %s1769
        %v1771 = vmul.f32 %v1770, %v1602
        %v1772 = vmul.f32 %v1770, %v1603
        %v1773 = vmul.f32 %v1770, %v1604
        %v1777 = vrot.slane %v1771, 1
        %v1778 = vrot.slane %v1772, 1
        %v1779 = vsel %vm1725, %v1777, %v1778
        %v1780 = vrot.slane %v1773, 1
        %v1781 = vsel %vm1725, %v1778, %v1780
        %1782 = vrot.lane.b32.xlu0 %v1779, 127
        %v1783 = vpop.permute.xlu0 %1782
        %1784 = vrot.lane.b32.xlu0 %v1781, 127
        %v1785 = vpop.permute.xlu0 %1784
        %v1788 = vadd.f32 %v1733, %v1783
        %v1789 = vadd.f32 %v1734, %v1785
        %s1790 = sld [smem:[#allocation7 + $0x1f]]
        %v1791 = vstv %s1790
        %v1792 = vmul.f32 %v1791, %v1602
        %v1793 = vmul.f32 %v1791, %v1603
        %v1794 = vmul.f32 %v1791, %v1604
        %v1798 = vrot.slane %v1792, 1
        %v1799 = vrot.slane %v1793, 1
        %v1800 = vsel %vm1725, %v1798, %v1799
        %v1801 = vrot.slane %v1794, 1
        %v1802 = vsel %vm1725, %v1799, %v1801
        %1803 = vrot.lane.b32.xlu0 %v1800, 127
        %v1804 = vpop.permute.xlu0 %1803
        %1805 = vrot.lane.b32.xlu0 %v1802, 127
        %v1806 = vpop.permute.xlu0 %1805
        %v1809 = vadd.f32 %v1750, %v1804
        %v1810 = vadd.f32 %v1751, %v1806
        %s1811 = sld [smem:[#allocation7 + $0x3a]]
        %v1812 = vstv %s1811
        %v1813 = vmul.f32 %v1812, %v1602
        %v1814 = vmul.f32 %v1812, %v1603
        %v1815 = vmul.f32 %v1812, %v1604
        %v1819 = vrot.slane %v1813, 1
        %v1820 = vrot.slane %v1814, 1
        %v1821 = vsel %vm1725, %v1819, %v1820
        %v1822 = vrot.slane %v1815, 1
        %v1823 = vsel %vm1725, %v1820, %v1822
        %1824 = vrot.lane.b32.xlu0 %v1821, 127
        %v1825 = vpop.permute.xlu0 %1824
        %1826 = vrot.lane.b32.xlu0 %v1823, 127
        %v1827 = vpop.permute.xlu0 %1826
        %v1830 = vadd.f32 %v1767, %v1825
        %v1831 = vadd.f32 %v1768, %v1827
        %s1832 = sld [smem:[#allocation7 + $0x5]]
        %v1833 = vstv %s1832
        %v1834 = vmul.f32 %v1833, %v1602
        %v1835 = vmul.f32 %v1833, %v1603
        %v1836 = vmul.f32 %v1833, %v1604
        %v1840 = vrot.slane %v1834, 1
        %v1841 = vrot.slane %v1835, 1
        %v1842 = vsel %vm1725, %v1840, %v1841
        %v1843 = vrot.slane %v1836, 1
        %v1844 = vsel %vm1725, %v1841, %v1843
        %1845 = vrot.lane.b32.xlu0 %v1842, 126
        %v1846 = vpop.permute.xlu0 %1845
        %1847 = vrot.lane.b32.xlu0 %v1844, 126
        %v1848 = vpop.permute.xlu0 %1847
        %v1851 = vadd.f32 %v1788, %v1846
        %v1852 = vadd.f32 %v1789, %v1848
        %s1853 = sld [smem:[#allocation7 + $0x20]]
        %v1854 = vstv %s1853
        %v1855 = vmul.f32 %v1854, %v1602
        %v1856 = vmul.f32 %v1854, %v1603
        %v1857 = vmul.f32 %v1854, %v1604
        %v1861 = vrot.slane %v1855, 1
        %v1862 = vrot.slane %v1856, 1
        %v1863 = vsel %vm1725, %v1861, %v1862
        %v1864 = vrot.slane %v1857, 1
        %v1865 = vsel %vm1725, %v1862, %v1864
        %1866 = vrot.lane.b32.xlu0 %v1863, 126
        %v1867 = vpop.permute.xlu0 %1866
        %1868 = vrot.lane.b32.xlu0 %v1865, 126
        %v1869 = vpop.permute.xlu0 %1868
        %v1872 = vadd.f32 %v1809, %v1867
        %v1873 = vadd.f32 %v1810, %v1869
        %s1874 = sld [smem:[#allocation7 + $0x3b]]
        %v1875 = vstv %s1874
        %v1876 = vmul.f32 %v1875, %v1602
        %v1877 = vmul.f32 %v1875, %v1603
        %v1878 = vmul.f32 %v1875, %v1604
        %v1882 = vrot.slane %v1876, 1
        %v1883 = vrot.slane %v1877, 1
        %v1884 = vsel %vm1725, %v1882, %v1883
        %v1885 = vrot.slane %v1878, 1
        %v1886 = vsel %vm1725, %v1883, %v1885
        %1887 = vrot.lane.b32.xlu0 %v1884, 126
        %v1888 = vpop.permute.xlu0 %1887
        %1889 = vrot.lane.b32.xlu0 %v1886, 126
        %v1890 = vpop.permute.xlu0 %1889
        %v1893 = vadd.f32 %v1830, %v1888
        %v1894 = vadd.f32 %v1831, %v1890
        %s1895 = sld [smem:[#allocation7 + $0x6]]
        %v1896 = vstv %s1895
        %v1897 = vmul.f32 %v1896, %v1602
        %v1898 = vmul.f32 %v1896, %v1603
        %v1899 = vmul.f32 %v1896, %v1604
        %vm1903 = vcmask 1045504
        %v1904 = vrot.slane %v1897, 2
        %v1905 = vrot.slane %v1898, 2
        %v1906 = vsel %vm1903, %v1904, %v1905
        %v1907 = vrot.slane %v1899, 2
        %v1908 = vsel %vm1903, %v1905, %v1907
        %v1911 = vadd.f32 %v1851, %v1906
        %v1912 = vadd.f32 %v1852, %v1908
        %s1913 = sld [smem:[#allocation7 + $0x21]]
        %v1914 = vstv %s1913
        %v1915 = vmul.f32 %v1914, %v1602
        %v1916 = vmul.f32 %v1914, %v1603
        %v1917 = vmul.f32 %v1914, %v1604
        %v1921 = vrot.slane %v1915, 2
        %v1922 = vrot.slane %v1916, 2
        %v1923 = vsel %vm1903, %v1921, %v1922
        %v1924 = vrot.slane %v1917, 2
        %v1925 = vsel %vm1903, %v1922, %v1924
        %v1928 = vadd.f32 %v1872, %v1923
        %v1929 = vadd.f32 %v1873, %v1925
        %s1930 = sld [smem:[#allocation7 + $0x3c]]
        %v1931 = vstv %s1930
        %v1932 = vmul.f32 %v1931, %v1602
        %v1933 = vmul.f32 %v1931, %v1603
        %v1934 = vmul.f32 %v1931, %v1604
        %v1938 = vrot.slane %v1932, 2
        %v1939 = vrot.slane %v1933, 2
        %v1940 = vsel %vm1903, %v1938, %v1939
        %v1941 = vrot.slane %v1934, 2
        %v1942 = vsel %vm1903, %v1939, %v1941
        %v1945 = vadd.f32 %v1893, %v1940
        %v1946 = vadd.f32 %v1894, %v1942
        %s1947 = sld [smem:[#allocation7 + $0x7]]
        %v1948 = vstv %s1947
        %v1949 = vmul.f32 %v1948, %v1602
        %v1950 = vmul.f32 %v1948, %v1603
        %v1951 = vmul.f32 %v1948, %v1604
        %v1955 = vrot.slane %v1949, 2
        %v1956 = vrot.slane %v1950, 2
        %v1957 = vsel %vm1903, %v1955, %v1956
        %v1958 = vrot.slane %v1951, 2
        %v1959 = vsel %vm1903, %v1956, %v1958
        %1960 = vrot.lane.b32.xlu0 %v1957, 127
        %v1961 = vpop.permute.xlu0 %1960
        %1962 = vrot.lane.b32.xlu0 %v1959, 127
        %v1963 = vpop.permute.xlu0 %1962
        %v1966 = vadd.f32 %v1911, %v1961
        %v1967 = vadd.f32 %v1912, %v1963
        %s1968 = sld [smem:[#allocation7 + $0x22]]
        %v1969 = vstv %s1968
        %v1970 = vmul.f32 %v1969, %v1602
        %v1971 = vmul.f32 %v1969, %v1603
        %v1972 = vmul.f32 %v1969, %v1604
        %v1976 = vrot.slane %v1970, 2
        %v1977 = vrot.slane %v1971, 2
        %v1978 = vsel %vm1903, %v1976, %v1977
        %v1979 = vrot.slane %v1972, 2
        %v1980 = vsel %vm1903, %v1977, %v1979
        %1981 = vrot.lane.b32.xlu0 %v1978, 127
        %v1982 = vpop.permute.xlu0 %1981
        %1983 = vrot.lane.b32.xlu0 %v1980, 127
        %v1984 = vpop.permute.xlu0 %1983
        %v1987 = vadd.f32 %v1928, %v1982
        %v1988 = vadd.f32 %v1929, %v1984
        %s1989 = sld [smem:[#allocation7 + $0x3d]]
        %v1990 = vstv %s1989
        %v1991 = vmul.f32 %v1990, %v1602
        %v1992 = vmul.f32 %v1990, %v1603
        %v1993 = vmul.f32 %v1990, %v1604
        %v1997 = vrot.slane %v1991, 2
        %v1998 = vrot.slane %v1992, 2
        %v1999 = vsel %vm1903, %v1997, %v1998
        %v2000 = vrot.slane %v1993, 2
        %v2001 = vsel %vm1903, %v1998, %v2000
        %2002 = vrot.lane.b32.xlu0 %v1999, 127
        %v2003 = vpop.permute.xlu0 %2002
        %2004 = vrot.lane.b32.xlu0 %v2001, 127
        %v2005 = vpop.permute.xlu0 %2004
        %v2008 = vadd.f32 %v1945, %v2003
        %v2009 = vadd.f32 %v1946, %v2005
        %s2010 = sld [smem:[#allocation7 + $0x8]]
        %v2011 = vstv %s2010
        %v2012 = vmul.f32 %v2011, %v1602
        %v2013 = vmul.f32 %v2011, %v1603
        %v2014 = vmul.f32 %v2011, %v1604
        %v2018 = vrot.slane %v2012, 2
        %v2019 = vrot.slane %v2013, 2
        %v2020 = vsel %vm1903, %v2018, %v2019
        %v2021 = vrot.slane %v2014, 2
        %v2022 = vsel %vm1903, %v2019, %v2021
        %2023 = vrot.lane.b32.xlu0 %v2020, 126
        %v2024 = vpop.permute.xlu0 %2023
        %2025 = vrot.lane.b32.xlu0 %v2022, 126
        %v2026 = vpop.permute.xlu0 %2025
        %v2029 = vadd.f32 %v1966, %v2024
        %v2030 = vadd.f32 %v1967, %v2026
        %s2031 = sld [smem:[#allocation7 + $0x23]]
        %v2032 = vstv %s2031
        %v2033 = vmul.f32 %v2032, %v1602
        %v2034 = vmul.f32 %v2032, %v1603
        %v2035 = vmul.f32 %v2032, %v1604
        %v2039 = vrot.slane %v2033, 2
        %v2040 = vrot.slane %v2034, 2
        %v2041 = vsel %vm1903, %v2039, %v2040
        %v2042 = vrot.slane %v2035, 2
        %v2043 = vsel %vm1903, %v2040, %v2042
        %2044 = vrot.lane.b32.xlu0 %v2041, 126
        %v2045 = vpop.permute.xlu0 %2044
        %2046 = vrot.lane.b32.xlu0 %v2043, 126
        %v2047 = vpop.permute.xlu0 %2046
        %v2050 = vadd.f32 %v1987, %v2045
        %v2051 = vadd.f32 %v1988, %v2047
        %s2052 = sld [smem:[#allocation7 + $0x3e]]
        %v2053 = vstv %s2052
        %v2054 = vmul.f32 %v2053, %v1602
        %v2055 = vmul.f32 %v2053, %v1603
        %v2056 = vmul.f32 %v2053, %v1604
        %v2060 = vrot.slane %v2054, 2
        %v2061 = vrot.slane %v2055, 2
        %v2062 = vsel %vm1903, %v2060, %v2061
        %v2063 = vrot.slane %v2056, 2
        %v2064 = vsel %vm1903, %v2061, %v2063
        %2065 = vrot.lane.b32.xlu0 %v2062, 126
        %v2066 = vpop.permute.xlu0 %2065
        %2067 = vrot.lane.b32.xlu0 %v2064, 126
        %v2068 = vpop.permute.xlu0 %2067
        %v2071 = vadd.f32 %v2008, %v2066
        %v2072 = vadd.f32 %v2009, %v2068
        %s2073 = sld [smem:[#allocation7 + $0x9]]
        %v2074 = vstv %s2073
        %v2075 = vmul.f32 %v2074, %v1607
        %v2076 = vmul.f32 %v2074, %v1608
        %v2077 = vadd.f32 %v2029, %v2075
        %v2078 = vadd.f32 %v2030, %v2076
        %s2079 = sld [smem:[#allocation7 + $0x24]]
        %v2080 = vstv %s2079
        %v2081 = vmul.f32 %v2080, %v1607
        %v2082 = vmul.f32 %v2080, %v1608
        %v2083 = vadd.f32 %v2050, %v2081
        %v2084 = vadd.f32 %v2051, %v2082
        %s2085 = sld [smem:[#allocation7 + $0x3f]]
        %v2086 = vstv %s2085
        %v2087 = vmul.f32 %v2086, %v1607
        %v2088 = vmul.f32 %v2086, %v1608
        %v2089 = vadd.f32 %v2071, %v2087
        %v2090 = vadd.f32 %v2072, %v2088
        %s2091 = sld [smem:[#allocation7 + $0xa]]
        %v2092 = vstv %s2091
        %v2093 = vmul.f32 %v2092, %v1607
        %v2094 = vmul.f32 %v2092, %v1608
        %2097 = vrot.lane.b32.xlu0 %v2093, 127
        %v2098 = vpop.permute.xlu0 %2097
        %2099 = vrot.lane.b32.xlu0 %v2094, 127
        %v2100 = vpop.permute.xlu0 %2099
        %v2103 = vadd.f32 %v2077, %v2098
        %v2104 = vadd.f32 %v2078, %v2100
        %s2105 = sld [smem:[#allocation7 + $0x25]]
        %v2106 = vstv %s2105
        %v2107 = vmul.f32 %v2106, %v1607
        %v2108 = vmul.f32 %v2106, %v1608
        %2111 = vrot.lane.b32.xlu0 %v2107, 127
        %v2112 = vpop.permute.xlu0 %2111
        %2113 = vrot.lane.b32.xlu0 %v2108, 127
        %v2114 = vpop.permute.xlu0 %2113
        %v2117 = vadd.f32 %v2083, %v2112
        %v2118 = vadd.f32 %v2084, %v2114
        %s2119 = sld [smem:[#allocation7 + $0x40]]
        %v2120 = vstv %s2119
        %v2121 = vmul.f32 %v2120, %v1607
        %v2122 = vmul.f32 %v2120, %v1608
        %2125 = vrot.lane.b32.xlu0 %v2121, 127
        %v2126 = vpop.permute.xlu0 %2125
        %2127 = vrot.lane.b32.xlu0 %v2122, 127
        %v2128 = vpop.permute.xlu0 %2127
        %v2131 = vadd.f32 %v2089, %v2126
        %v2132 = vadd.f32 %v2090, %v2128
        %s2133 = sld [smem:[#allocation7 + $0xb]]
        %v2134 = vstv %s2133
        %v2135 = vmul.f32 %v2134, %v1607
        %v2136 = vmul.f32 %v2134, %v1608
        %2139 = vrot.lane.b32.xlu0 %v2135, 126
        %v2140 = vpop.permute.xlu0 %2139
        %2141 = vrot.lane.b32.xlu0 %v2136, 126
        %v2142 = vpop.permute.xlu0 %2141
        %v2145 = vadd.f32 %v2103, %v2140
        %v2146 = vadd.f32 %v2104, %v2142
        %s2147 = sld [smem:[#allocation7 + $0x26]]
        %v2148 = vstv %s2147
        %v2149 = vmul.f32 %v2148, %v1607
        %v2150 = vmul.f32 %v2148, %v1608
        %2153 = vrot.lane.b32.xlu0 %v2149, 126
        %v2154 = vpop.permute.xlu0 %2153
        %2155 = vrot.lane.b32.xlu0 %v2150, 126
        %v2156 = vpop.permute.xlu0 %2155
        %v2159 = vadd.f32 %v2117, %v2154
        %v2160 = vadd.f32 %v2118, %v2156
        %s2161 = sld [smem:[#allocation7 + $0x41]]
        %v2162 = vstv %s2161
        %v2163 = vmul.f32 %v2162, %v1607
        %v2164 = vmul.f32 %v2162, %v1608
        %2167 = vrot.lane.b32.xlu0 %v2163, 126
        %v2168 = vpop.permute.xlu0 %2167
        %2169 = vrot.lane.b32.xlu0 %v2164, 126
        %v2170 = vpop.permute.xlu0 %2169
        %v2173 = vadd.f32 %v2131, %v2168
        %v2174 = vadd.f32 %v2132, %v2170
        %s2175 = sld [smem:[#allocation7 + $0xc]]
        %v2176 = vstv %s2175
        %v2177 = vmul.f32 %v2176, %v1607
        %v2178 = vmul.f32 %v2176, %v1608
        %v2179 = vmul.f32 %v2176, %v1609
        %v2183 = vrot.slane %v2177, 1
        %v2184 = vrot.slane %v2178, 1
        %v2185 = vsel %vm1725, %v2183, %v2184
        %v2186 = vrot.slane %v2179, 1
        %v2187 = vsel %vm1725, %v2184, %v2186
        %v2190 = vadd.f32 %v2145, %v2185
        %v2191 = vadd.f32 %v2146, %v2187
        %s2192 = sld [smem:[#allocation7 + $0x27]]
        %v2193 = vstv %s2192
        %v2194 = vmul.f32 %v2193, %v1607
        %v2195 = vmul.f32 %v2193, %v1608
        %v2196 = vmul.f32 %v2193, %v1609
        %v2200 = vrot.slane %v2194, 1
        %v2201 = vrot.slane %v2195, 1
        %v2202 = vsel %vm1725, %v2200, %v2201
        %v2203 = vrot.slane %v2196, 1
        %v2204 = vsel %vm1725, %v2201, %v2203
        %v2207 = vadd.f32 %v2159, %v2202
        %v2208 = vadd.f32 %v2160, %v2204
        %s2209 = sld [smem:[#allocation7 + $0x42]]
        %v2210 = vstv %s2209
        %v2211 = vmul.f32 %v2210, %v1607
        %v2212 = vmul.f32 %v2210, %v1608
        %v2213 = vmul.f32 %v2210, %v1609
        %v2217 = vrot.slane %v2211, 1
        %v2218 = vrot.slane %v2212, 1
        %v2219 = vsel %vm1725, %v2217, %v2218
        %v2220 = vrot.slane %v2213, 1
        %v2221 = vsel %vm1725, %v2218, %v2220
        %v2224 = vadd.f32 %v2173, %v2219
        %v2225 = vadd.f32 %v2174, %v2221
        %s2226 = sld [smem:[#allocation7 + $0xd]]
        %v2227 = vstv %s2226
        %v2228 = vmul.f32 %v2227, %v1607
        %v2229 = vmul.f32 %v2227, %v1608
        %v2230 = vmul.f32 %v2227, %v1609
        %v2234 = vrot.slane %v2228, 1
        %v2235 = vrot.slane %v2229, 1
        %v2236 = vsel %vm1725, %v2234, %v2235
        %v2237 = vrot.slane %v2230, 1
        %v2238 = vsel %vm1725, %v2235, %v2237
        %2239 = vrot.lane.b32.xlu0 %v2236, 127
        %v2240 = vpop.permute.xlu0 %2239
        %2241 = vrot.lane.b32.xlu0 %v2238, 127
        %v2242 = vpop.permute.xlu0 %2241
        %v2245 = vadd.f32 %v2190, %v2240
        %v2246 = vadd.f32 %v2191, %v2242
        %s2247 = sld [smem:[#allocation7 + $0x28]]
        %v2248 = vstv %s2247
        %v2249 = vmul.f32 %v2248, %v1607
        %v2250 = vmul.f32 %v2248, %v1608
        %v2251 = vmul.f32 %v2248, %v1609
        %v2255 = vrot.slane %v2249, 1
        %v2256 = vrot.slane %v2250, 1
        %v2257 = vsel %vm1725, %v2255, %v2256
        %v2258 = vrot.slane %v2251, 1
        %v2259 = vsel %vm1725, %v2256, %v2258
        %2260 = vrot.lane.b32.xlu0 %v2257, 127
        %v2261 = vpop.permute.xlu0 %2260
        %2262 = vrot.lane.b32.xlu0 %v2259, 127
        %v2263 = vpop.permute.xlu0 %2262
        %v2266 = vadd.f32 %v2207, %v2261
        %v2267 = vadd.f32 %v2208, %v2263
        %s2268 = sld [smem:[#allocation7 + $0x43]]
        %v2269 = vstv %s2268
        %v2270 = vmul.f32 %v2269, %v1607
        %v2271 = vmul.f32 %v2269, %v1608
        %v2272 = vmul.f32 %v2269, %v1609
        %v2276 = vrot.slane %v2270, 1
        %v2277 = vrot.slane %v2271, 1
        %v2278 = vsel %vm1725, %v2276, %v2277
        %v2279 = vrot.slane %v2272, 1
        %v2280 = vsel %vm1725, %v2277, %v2279
        %2281 = vrot.lane.b32.xlu0 %v2278, 127
        %v2282 = vpop.permute.xlu0 %2281
        %2283 = vrot.lane.b32.xlu0 %v2280, 127
        %v2284 = vpop.permute.xlu0 %2283
        %v2287 = vadd.f32 %v2224, %v2282
        %v2288 = vadd.f32 %v2225, %v2284
        %s2289 = sld [smem:[#allocation7 + $0xe]]
        %v2290 = vstv %s2289
        %v2291 = vmul.f32 %v2290, %v1607
        %v2292 = vmul.f32 %v2290, %v1608
        %v2293 = vmul.f32 %v2290, %v1609
        %v2297 = vrot.slane %v2291, 1
        %v2298 = vrot.slane %v2292, 1
        %v2299 = vsel %vm1725, %v2297, %v2298
        %v2300 = vrot.slane %v2293, 1
        %v2301 = vsel %vm1725, %v2298, %v2300
        %2302 = vrot.lane.b32.xlu0 %v2299, 126
        %v2303 = vpop.permute.xlu0 %2302
        %2304 = vrot.lane.b32.xlu0 %v2301, 126
        %v2305 = vpop.permute.xlu0 %2304
        %v2308 = vadd.f32 %v2245, %v2303
        %v2309 = vadd.f32 %v2246, %v2305
        %s2310 = sld [smem:[#allocation7 + $0x29]]
        %v2311 = vstv %s2310
        %v2312 = vmul.f32 %v2311, %v1607
        %v2313 = vmul.f32 %v2311, %v1608
        %v2314 = vmul.f32 %v2311, %v1609
        %v2318 = vrot.slane %v2312, 1
        %v2319 = vrot.slane %v2313, 1
        %v2320 = vsel %vm1725, %v2318, %v2319
        %v2321 = vrot.slane %v2314, 1
        %v2322 = vsel %vm1725, %v2319, %v2321
        %2323 = vrot.lane.b32.xlu0 %v2320, 126
        %v2324 = vpop.permute.xlu0 %2323
        %2325 = vrot.lane.b32.xlu0 %v2322, 126
        %v2326 = vpop.permute.xlu0 %2325
        %v2329 = vadd.f32 %v2266, %v2324
        %v2330 = vadd.f32 %v2267, %v2326
        %s2331 = sld [smem:[#allocation7 + $0x44]]
        %v2332 = vstv %s2331
        %v2333 = vmul.f32 %v2332, %v1607
        %v2334 = vmul.f32 %v2332, %v1608
        %v2335 = vmul.f32 %v2332, %v1609
        %v2339 = vrot.slane %v2333, 1
        %v2340 = vrot.slane %v2334, 1
        %v2341 = vsel %vm1725, %v2339, %v2340
        %v2342 = vrot.slane %v2335, 1
        %v2343 = vsel %vm1725, %v2340, %v2342
        %2344 = vrot.lane.b32.xlu0 %v2341, 126
        %v2345 = vpop.permute.xlu0 %2344
        %2346 = vrot.lane.b32.xlu0 %v2343, 126
        %v2347 = vpop.permute.xlu0 %2346
        %v2350 = vadd.f32 %v2287, %v2345
        %v2351 = vadd.f32 %v2288, %v2347
        %s2352 = sld [smem:[#allocation7 + $0xf]]
        %v2353 = vstv %s2352
        %v2354 = vmul.f32 %v2353, %v1607
        %v2355 = vmul.f32 %v2353, %v1608
        %v2356 = vmul.f32 %v2353, %v1609
        %v2360 = vrot.slane %v2354, 2
        %v2361 = vrot.slane %v2355, 2
        %v2362 = vsel %vm1903, %v2360, %v2361
        %v2363 = vrot.slane %v2356, 2
        %v2364 = vsel %vm1903, %v2361, %v2363
        %v2367 = vadd.f32 %v2308, %v2362
        %v2368 = vadd.f32 %v2309, %v2364
        %s2369 = sld [smem:[#allocation7 + $0x2a]]
        %v2370 = vstv %s2369
        %v2371 = vmul.f32 %v2370, %v1607
        %v2372 = vmul.f32 %v2370, %v1608
        %v2373 = vmul.f32 %v2370, %v1609
        %v2377 = vrot.slane %v2371, 2
        %v2378 = vrot.slane %v2372, 2
        %v2379 = vsel %vm1903, %v2377, %v2378
        %v2380 = vrot.slane %v2373, 2
        %v2381 = vsel %vm1903, %v2378, %v2380
        %v2384 = vadd.f32 %v2329, %v2379
        %v2385 = vadd.f32 %v2330, %v2381
        %s2386 = sld [smem:[#allocation7 + $0x45]]
        %v2387 = vstv %s2386
        %v2388 = vmul.f32 %v2387, %v1607
        %v2389 = vmul.f32 %v2387, %v1608
        %v2390 = vmul.f32 %v2387, %v1609
        %v2394 = vrot.slane %v2388, 2
        %v2395 = vrot.slane %v2389, 2
        %v2396 = vsel %vm1903, %v2394, %v2395
        %v2397 = vrot.slane %v2390, 2
        %v2398 = vsel %vm1903, %v2395, %v2397
        %v2401 = vadd.f32 %v2350, %v2396
        %v2402 = vadd.f32 %v2351, %v2398
        %s2403 = sld [smem:[#allocation7 + $0x10]]
        %v2404 = vstv %s2403
        %v2405 = vmul.f32 %v2404, %v1607
        %v2406 = vmul.f32 %v2404, %v1608
        %v2407 = vmul.f32 %v2404, %v1609
        %v2411 = vrot.slane %v2405, 2
        %v2412 = vrot.slane %v2406, 2
        %v2413 = vsel %vm1903, %v2411, %v2412
        %v2414 = vrot.slane %v2407, 2
        %v2415 = vsel %vm1903, %v2412, %v2414
        %2416 = vrot.lane.b32.xlu0 %v2413, 127
        %v2417 = vpop.permute.xlu0 %2416
        %2418 = vrot.lane.b32.xlu0 %v2415, 127
        %v2419 = vpop.permute.xlu0 %2418
        %v2422 = vadd.f32 %v2367, %v2417
        %v2423 = vadd.f32 %v2368, %v2419
        %s2424 = sld [smem:[#allocation7 + $0x2b]]
        %v2425 = vstv %s2424
        %v2426 = vmul.f32 %v2425, %v1607
        %v2427 = vmul.f32 %v2425, %v1608
        %v2428 = vmul.f32 %v2425, %v1609
        %v2432 = vrot.slane %v2426, 2
        %v2433 = vrot.slane %v2427, 2
        %v2434 = vsel %vm1903, %v2432, %v2433
        %v2435 = vrot.slane %v2428, 2
        %v2436 = vsel %vm1903, %v2433, %v2435
        %2437 = vrot.lane.b32.xlu0 %v2434, 127
        %v2438 = vpop.permute.xlu0 %2437
        %2439 = vrot.lane.b32.xlu0 %v2436, 127
        %v2440 = vpop.permute.xlu0 %2439
        %v2443 = vadd.f32 %v2384, %v2438
        %v2444 = vadd.f32 %v2385, %v2440
        %s2445 = sld [smem:[#allocation7 + $0x46]]
        %v2446 = vstv %s2445
        %v2447 = vmul.f32 %v2446, %v1607
        %v2448 = vmul.f32 %v2446, %v1608
        %v2449 = vmul.f32 %v2446, %v1609
        %v2453 = vrot.slane %v2447, 2
        %v2454 = vrot.slane %v2448, 2
        %v2455 = vsel %vm1903, %v2453, %v2454
        %v2456 = vrot.slane %v2449, 2
        %v2457 = vsel %vm1903, %v2454, %v2456
        %2458 = vrot.lane.b32.xlu0 %v2455, 127
        %v2459 = vpop.permute.xlu0 %2458
        %2460 = vrot.lane.b32.xlu0 %v2457, 127
        %v2461 = vpop.permute.xlu0 %2460
        %v2464 = vadd.f32 %v2401, %v2459
        %v2465 = vadd.f32 %v2402, %v2461
        %s2466 = sld [smem:[#allocation7 + $0x11]]
        %v2467 = vstv %s2466
        %v2468 = vmul.f32 %v2467, %v1607
        %v2469 = vmul.f32 %v2467, %v1608
        %v2470 = vmul.f32 %v2467, %v1609
        %v2474 = vrot.slane %v2468, 2
        %v2475 = vrot.slane %v2469, 2
        %v2476 = vsel %vm1903, %v2474, %v2475
        %v2477 = vrot.slane %v2470, 2
        %v2478 = vsel %vm1903, %v2475, %v2477
        %2479 = vrot.lane.b32.xlu0 %v2476, 126
        %v2480 = vpop.permute.xlu0 %2479
        %2481 = vrot.lane.b32.xlu0 %v2478, 126
        %v2482 = vpop.permute.xlu0 %2481
        %v2485 = vadd.f32 %v2422, %v2480
        %v2486 = vadd.f32 %v2423, %v2482
        %s2487 = sld [smem:[#allocation7 + $0x2c]]
        %v2488 = vstv %s2487
        %v2489 = vmul.f32 %v2488, %v1607
        %v2490 = vmul.f32 %v2488, %v1608
        %v2491 = vmul.f32 %v2488, %v1609
        %v2495 = vrot.slane %v2489, 2
        %v2496 = vrot.slane %v2490, 2
        %v2497 = vsel %vm1903, %v2495, %v2496
        %v2498 = vrot.slane %v2491, 2
        %v2499 = vsel %vm1903, %v2496, %v2498
        %2500 = vrot.lane.b32.xlu0 %v2497, 126
        %v2501 = vpop.permute.xlu0 %2500
        %2502 = vrot.lane.b32.xlu0 %v2499, 126
        %v2503 = vpop.permute.xlu0 %2502
        %v2506 = vadd.f32 %v2443, %v2501
        %v2507 = vadd.f32 %v2444, %v2503
        %s2508 = sld [smem:[#allocation7 + $0x47]]
        %v2509 = vstv %s2508
        %v2510 = vmul.f32 %v2509, %v1607
        %v2511 = vmul.f32 %v2509, %v1608
        %v2512 = vmul.f32 %v2509, %v1609
        %v2516 = vrot.slane %v2510, 2
        %v2517 = vrot.slane %v2511, 2
        %v2518 = vsel %vm1903, %v2516, %v2517
        %v2519 = vrot.slane %v2512, 2
        %v2520 = vsel %vm1903, %v2517, %v2519
        %2521 = vrot.lane.b32.xlu0 %v2518, 126
        %v2522 = vpop.permute.xlu0 %2521
        %2523 = vrot.lane.b32.xlu0 %v2520, 126
        %v2524 = vpop.permute.xlu0 %2523
        %v2527 = vadd.f32 %v2464, %v2522
        %v2528 = vadd.f32 %v2465, %v2524
        %s2529 = sld [smem:[#allocation7 + $0x12]]
        %v2530 = vstv %s2529
        %v2531 = vmul.f32 %v2530, %v1612
        %v2532 = vmul.f32 %v2530, %v1613
        %v2533 = vadd.f32 %v2485, %v2531
        %v2534 = vadd.f32 %v2486, %v2532
        %s2535 = sld [smem:[#allocation7 + $0x2d]]
        %v2536 = vstv %s2535
        %v2537 = vmul.f32 %v2536, %v1612
        %v2538 = vmul.f32 %v2536, %v1613
        %v2539 = vadd.f32 %v2506, %v2537
        %v2540 = vadd.f32 %v2507, %v2538
        %s2541 = sld [smem:[#allocation7 + $0x48]]
        %v2542 = vstv %s2541
        %v2543 = vmul.f32 %v2542, %v1612
        %v2544 = vmul.f32 %v2542, %v1613
        %v2545 = vadd.f32 %v2527, %v2543
        %v2546 = vadd.f32 %v2528, %v2544
        %s2547 = sld [smem:[#allocation7 + $0x13]]
        %v2548 = vstv %s2547
        %v2549 = vmul.f32 %v2548, %v1612
        %v2550 = vmul.f32 %v2548, %v1613
        %2553 = vrot.lane.b32.xlu0 %v2549, 127
        %v2554 = vpop.permute.xlu0 %2553
        %2555 = vrot.lane.b32.xlu0 %v2550, 127
        %v2556 = vpop.permute.xlu0 %2555
        %v2559 = vadd.f32 %v2533, %v2554
        %v2560 = vadd.f32 %v2534, %v2556
        %s2561 = sld [smem:[#allocation7 + $0x2e]]
        %v2562 = vstv %s2561
        %v2563 = vmul.f32 %v2562, %v1612
        %v2564 = vmul.f32 %v2562, %v1613
        %2567 = vrot.lane.b32.xlu0 %v2563, 127
        %v2568 = vpop.permute.xlu0 %2567
        %2569 = vrot.lane.b32.xlu0 %v2564, 127
        %v2570 = vpop.permute.xlu0 %2569
        %v2573 = vadd.f32 %v2539, %v2568
        %v2574 = vadd.f32 %v2540, %v2570
        %s2575 = sld [smem:[#allocation7 + $0x49]]
        %v2576 = vstv %s2575
        %v2577 = vmul.f32 %v2576, %v1612
        %v2578 = vmul.f32 %v2576, %v1613
        %2581 = vrot.lane.b32.xlu0 %v2577, 127
        %v2582 = vpop.permute.xlu0 %2581
        %2583 = vrot.lane.b32.xlu0 %v2578, 127
        %v2584 = vpop.permute.xlu0 %2583
        %v2587 = vadd.f32 %v2545, %v2582
        %v2588 = vadd.f32 %v2546, %v2584
        %s2589 = sld [smem:[#allocation7 + $0x14]]
        %v2590 = vstv %s2589
        %v2591 = vmul.f32 %v2590, %v1612
        %v2592 = vmul.f32 %v2590, %v1613
        %2595 = vrot.lane.b32.xlu0 %v2591, 126
        %v2596 = vpop.permute.xlu0 %2595
        %2597 = vrot.lane.b32.xlu0 %v2592, 126
        %v2598 = vpop.permute.xlu0 %2597
        %v2601 = vadd.f32 %v2559, %v2596
        %v2602 = vadd.f32 %v2560, %v2598
        %s2603 = sld [smem:[#allocation7 + $0x2f]]
        %v2604 = vstv %s2603
        %v2605 = vmul.f32 %v2604, %v1612
        %v2606 = vmul.f32 %v2604, %v1613
        %2609 = vrot.lane.b32.xlu0 %v2605, 126
        %v2610 = vpop.permute.xlu0 %2609
        %2611 = vrot.lane.b32.xlu0 %v2606, 126
        %v2612 = vpop.permute.xlu0 %2611
        %v2615 = vadd.f32 %v2573, %v2610
        %v2616 = vadd.f32 %v2574, %v2612
        %s2617 = sld [smem:[#allocation7 + $0x4a]]
        %v2618 = vstv %s2617
        %v2619 = vmul.f32 %v2618, %v1612
        %v2620 = vmul.f32 %v2618, %v1613
        %2623 = vrot.lane.b32.xlu0 %v2619, 126
        %v2624 = vpop.permute.xlu0 %2623
        %2625 = vrot.lane.b32.xlu0 %v2620, 126
        %v2626 = vpop.permute.xlu0 %2625
        %v2629 = vadd.f32 %v2587, %v2624
        %v2630 = vadd.f32 %v2588, %v2626
        %s2631 = sld [smem:[#allocation7 + $0x15]]
        %v2632 = vstv %s2631
        %v2633 = vmul.f32 %v2632, %v1612
        %v2634 = vmul.f32 %v2632, %v1613
        %v2635 = vmul.f32 %v2632, %v1614
        %v2639 = vrot.slane %v2633, 1
        %v2640 = vrot.slane %v2634, 1
        %v2641 = vsel %vm1725, %v2639, %v2640
        %v2642 = vrot.slane %v2635, 1
        %v2643 = vsel %vm1725, %v2640, %v2642
        %v2646 = vadd.f32 %v2601, %v2641
        %v2647 = vadd.f32 %v2602, %v2643
        %s2648 = sld [smem:[#allocation7 + $0x30]]
        %v2649 = vstv %s2648
        %v2650 = vmul.f32 %v2649, %v1612
        %v2651 = vmul.f32 %v2649, %v1613
        %v2652 = vmul.f32 %v2649, %v1614
        %v2656 = vrot.slane %v2650, 1
        %v2657 = vrot.slane %v2651, 1
        %v2658 = vsel %vm1725, %v2656, %v2657
        %v2659 = vrot.slane %v2652, 1
        %v2660 = vsel %vm1725, %v2657, %v2659
        %v2663 = vadd.f32 %v2615, %v2658
        %v2664 = vadd.f32 %v2616, %v2660
        %s2665 = sld [smem:[#allocation7 + $0x4b]]
        %v2666 = vstv %s2665
        %v2667 = vmul.f32 %v2666, %v1612
        %v2668 = vmul.f32 %v2666, %v1613
        %v2669 = vmul.f32 %v2666, %v1614
        %v2673 = vrot.slane %v2667, 1
        %v2674 = vrot.slane %v2668, 1
        %v2675 = vsel %vm1725, %v2673, %v2674
        %v2676 = vrot.slane %v2669, 1
        %v2677 = vsel %vm1725, %v2674, %v2676
        %v2680 = vadd.f32 %v2629, %v2675
        %v2681 = vadd.f32 %v2630, %v2677
        %s2682 = sld [smem:[#allocation7 + $0x16]]
        %v2683 = vstv %s2682
        %v2684 = vmul.f32 %v2683, %v1612
        %v2685 = vmul.f32 %v2683, %v1613
        %v2686 = vmul.f32 %v2683, %v1614
        %v2690 = vrot.slane %v2684, 1
        %v2691 = vrot.slane %v2685, 1
        %v2692 = vsel %vm1725, %v2690, %v2691
        %v2693 = vrot.slane %v2686, 1
        %v2694 = vsel %vm1725, %v2691, %v2693
        %2695 = vrot.lane.b32.xlu0 %v2692, 127
        %v2696 = vpop.permute.xlu0 %2695
        %2697 = vrot.lane.b32.xlu0 %v2694, 127
        %v2698 = vpop.permute.xlu0 %2697
        %v2701 = vadd.f32 %v2646, %v2696
        %v2702 = vadd.f32 %v2647, %v2698
        %s2703 = sld [smem:[#allocation7 + $0x31]]
        %v2704 = vstv %s2703
        %v2705 = vmul.f32 %v2704, %v1612
        %v2706 = vmul.f32 %v2704, %v1613
        %v2707 = vmul.f32 %v2704, %v1614
        %v2711 = vrot.slane %v2705, 1
        %v2712 = vrot.slane %v2706, 1
        %v2713 = vsel %vm1725, %v2711, %v2712
        %v2714 = vrot.slane %v2707, 1
        %v2715 = vsel %vm1725, %v2712, %v2714
        %2716 = vrot.lane.b32.xlu0 %v2713, 127
        %v2717 = vpop.permute.xlu0 %2716
        %2718 = vrot.lane.b32.xlu0 %v2715, 127
        %v2719 = vpop.permute.xlu0 %2718
        %v2722 = vadd.f32 %v2663, %v2717
        %v2723 = vadd.f32 %v2664, %v2719
        %s2724 = sld [smem:[#allocation7 + $0x4c]]
        %v2725 = vstv %s2724
        %v2726 = vmul.f32 %v2725, %v1612
        %v2727 = vmul.f32 %v2725, %v1613
        %v2728 = vmul.f32 %v2725, %v1614
        %v2732 = vrot.slane %v2726, 1
        %v2733 = vrot.slane %v2727, 1
        %v2734 = vsel %vm1725, %v2732, %v2733
        %v2735 = vrot.slane %v2728, 1
        %v2736 = vsel %vm1725, %v2733, %v2735
        %2737 = vrot.lane.b32.xlu0 %v2734, 127
        %v2738 = vpop.permute.xlu0 %2737
        %2739 = vrot.lane.b32.xlu0 %v2736, 127
        %v2740 = vpop.permute.xlu0 %2739
        %v2743 = vadd.f32 %v2680, %v2738
        %v2744 = vadd.f32 %v2681, %v2740
        %s2745 = sld [smem:[#allocation7 + $0x17]]
        %v2746 = vstv %s2745
        %v2747 = vmul.f32 %v2746, %v1612
        %v2748 = vmul.f32 %v2746, %v1613
        %v2749 = vmul.f32 %v2746, %v1614
        %v2753 = vrot.slane %v2747, 1
        %v2754 = vrot.slane %v2748, 1
        %v2755 = vsel %vm1725, %v2753, %v2754
        %v2756 = vrot.slane %v2749, 1
        %v2757 = vsel %vm1725, %v2754, %v2756
        %2758 = vrot.lane.b32.xlu0 %v2755, 126
        %v2759 = vpop.permute.xlu0 %2758
        %2760 = vrot.lane.b32.xlu0 %v2757, 126
        %v2761 = vpop.permute.xlu0 %2760
        %v2764 = vadd.f32 %v2701, %v2759
        %v2765 = vadd.f32 %v2702, %v2761
        %s2766 = sld [smem:[#allocation7 + $0x32]]
        %v2767 = vstv %s2766
        %v2768 = vmul.f32 %v2767, %v1612
        %v2769 = vmul.f32 %v2767, %v1613
        %v2770 = vmul.f32 %v2767, %v1614
        %v2774 = vrot.slane %v2768, 1
        %v2775 = vrot.slane %v2769, 1
        %v2776 = vsel %vm1725, %v2774, %v2775
        %v2777 = vrot.slane %v2770, 1
        %v2778 = vsel %vm1725, %v2775, %v2777
        %2779 = vrot.lane.b32.xlu0 %v2776, 126
        %v2780 = vpop.permute.xlu0 %2779
        %2781 = vrot.lane.b32.xlu0 %v2778, 126
        %v2782 = vpop.permute.xlu0 %2781
        %v2785 = vadd.f32 %v2722, %v2780
        %v2786 = vadd.f32 %v2723, %v2782
        %s2787 = sld [smem:[#allocation7 + $0x4d]]
        %v2788 = vstv %s2787
        %v2789 = vmul.f32 %v2788, %v1612
        %v2790 = vmul.f32 %v2788, %v1613
        %v2791 = vmul.f32 %v2788, %v1614
        %v2795 = vrot.slane %v2789, 1
        %v2796 = vrot.slane %v2790, 1
        %v2797 = vsel %vm1725, %v2795, %v2796
        %v2798 = vrot.slane %v2791, 1
        %v2799 = vsel %vm1725, %v2796, %v2798
        %2800 = vrot.lane.b32.xlu0 %v2797, 126
        %v2801 = vpop.permute.xlu0 %2800
        %2802 = vrot.lane.b32.xlu0 %v2799, 126
        %v2803 = vpop.permute.xlu0 %2802
        %v2806 = vadd.f32 %v2743, %v2801
        %v2807 = vadd.f32 %v2744, %v2803
        %s2808 = sld [smem:[#allocation7 + $0x18]]
        %v2809 = vstv %s2808
        %v2810 = vmul.f32 %v2809, %v1612
        %v2811 = vmul.f32 %v2809, %v1613
        %v2812 = vmul.f32 %v2809, %v1614
        %v2816 = vrot.slane %v2810, 2
        %v2817 = vrot.slane %v2811, 2
        %v2818 = vsel %vm1903, %v2816, %v2817
        %v2819 = vrot.slane %v2812, 2
        %v2820 = vsel %vm1903, %v2817, %v2819
        %v2823 = vadd.f32 %v2764, %v2818
        %v2824 = vadd.f32 %v2765, %v2820
        %s2825 = sld [smem:[#allocation7 + $0x33]]
        %v2826 = vstv %s2825
        %v2827 = vmul.f32 %v2826, %v1612
        %v2828 = vmul.f32 %v2826, %v1613
        %v2829 = vmul.f32 %v2826, %v1614
        %v2833 = vrot.slane %v2827, 2
        %v2834 = vrot.slane %v2828, 2
        %v2835 = vsel %vm1903, %v2833, %v2834
        %v2836 = vrot.slane %v2829, 2
        %v2837 = vsel %vm1903, %v2834, %v2836
        %v2840 = vadd.f32 %v2785, %v2835
        %v2841 = vadd.f32 %v2786, %v2837
        %s2842 = sld [smem:[#allocation7 + $0x4e]]
        %v2843 = vstv %s2842
        %v2844 = vmul.f32 %v2843, %v1612
        %v2845 = vmul.f32 %v2843, %v1613
        %v2846 = vmul.f32 %v2843, %v1614
        %v2850 = vrot.slane %v2844, 2
        %v2851 = vrot.slane %v2845, 2
        %v2852 = vsel %vm1903, %v2850, %v2851
        %v2853 = vrot.slane %v2846, 2
        %v2854 = vsel %vm1903, %v2851, %v2853
        %v2857 = vadd.f32 %v2806, %v2852
        %v2858 = vadd.f32 %v2807, %v2854
        %s2859 = sld [smem:[#allocation7 + $0x19]]
        %v2860 = vstv %s2859
        %v2861 = vmul.f32 %v2860, %v1612
        %v2862 = vmul.f32 %v2860, %v1613
        %v2863 = vmul.f32 %v2860, %v1614
        %v2867 = vrot.slane %v2861, 2
        %v2868 = vrot.slane %v2862, 2
        %v2869 = vsel %vm1903, %v2867, %v2868
        %v2870 = vrot.slane %v2863, 2
        %v2871 = vsel %vm1903, %v2868, %v2870
        %2872 = vrot.lane.b32.xlu0 %v2869, 127
        %v2873 = vpop.permute.xlu0 %2872
        %2874 = vrot.lane.b32.xlu0 %v2871, 127
        %v2875 = vpop.permute.xlu0 %2874
        %v2878 = vadd.f32 %v2823, %v2873
        %v2879 = vadd.f32 %v2824, %v2875
        %s2880 = sld [smem:[#allocation7 + $0x34]]
        %v2881 = vstv %s2880
        %v2882 = vmul.f32 %v2881, %v1612
        %v2883 = vmul.f32 %v2881, %v1613
        %v2884 = vmul.f32 %v2881, %v1614
        %v2888 = vrot.slane %v2882, 2
        %v2889 = vrot.slane %v2883, 2
        %v2890 = vsel %vm1903, %v2888, %v2889
        %v2891 = vrot.slane %v2884, 2
        %v2892 = vsel %vm1903, %v2889, %v2891
        %2893 = vrot.lane.b32.xlu0 %v2890, 127
        %v2894 = vpop.permute.xlu0 %2893
        %2895 = vrot.lane.b32.xlu0 %v2892, 127
        %v2896 = vpop.permute.xlu0 %2895
        %v2899 = vadd.f32 %v2840, %v2894
        %v2900 = vadd.f32 %v2841, %v2896
        %s2901 = sld [smem:[#allocation7 + $0x4f]]
        %v2902 = vstv %s2901
        %v2903 = vmul.f32 %v2902, %v1612
        %v2904 = vmul.f32 %v2902, %v1613
        %v2905 = vmul.f32 %v2902, %v1614
        %v2909 = vrot.slane %v2903, 2
        %v2910 = vrot.slane %v2904, 2
        %v2911 = vsel %vm1903, %v2909, %v2910
        %v2912 = vrot.slane %v2905, 2
        %v2913 = vsel %vm1903, %v2910, %v2912
        %2914 = vrot.lane.b32.xlu0 %v2911, 127
        %v2915 = vpop.permute.xlu0 %2914
        %2916 = vrot.lane.b32.xlu0 %v2913, 127
        %v2917 = vpop.permute.xlu0 %2916
        %v2920 = vadd.f32 %v2857, %v2915
        %v2921 = vadd.f32 %v2858, %v2917
        %s2922 = sld [smem:[#allocation7 + $0x1a]]
        %v2923 = vstv %s2922
        %v2924 = vmul.f32 %v2923, %v1612
        %v2925 = vmul.f32 %v2923, %v1613
        %v2926 = vmul.f32 %v2923, %v1614
        %v2930 = vrot.slane %v2924, 2
        %v2931 = vrot.slane %v2925, 2
        %v2932 = vsel %vm1903, %v2930, %v2931
        %v2933 = vrot.slane %v2926, 2
        %v2934 = vsel %vm1903, %v2931, %v2933
        %2935 = vrot.lane.b32.xlu0 %v2932, 126
        %v2936 = vpop.permute.xlu0 %2935
        %2937 = vrot.lane.b32.xlu0 %v2934, 126
        %v2938 = vpop.permute.xlu0 %2937
        %v2941 = vadd.f32 %v2878, %v2936
        %v2942 = vadd.f32 %v2879, %v2938
        %s2943 = sld [smem:[#allocation7 + $0x35]]
        %v2944 = vstv %s2943
        %v2945 = vmul.f32 %v2944, %v1612
        %v2946 = vmul.f32 %v2944, %v1613
        %v2947 = vmul.f32 %v2944, %v1614
        %v2951 = vrot.slane %v2945, 2
        %v2952 = vrot.slane %v2946, 2
        %v2953 = vsel %vm1903, %v2951, %v2952
        %v2954 = vrot.slane %v2947, 2
        %v2955 = vsel %vm1903, %v2952, %v2954
        %2956 = vrot.lane.b32.xlu0 %v2953, 126
        %v2957 = vpop.permute.xlu0 %2956
        %2958 = vrot.lane.b32.xlu0 %v2955, 126
        %v2959 = vpop.permute.xlu0 %2958
        %v2962 = vadd.f32 %v2899, %v2957
        %v2963 = vadd.f32 %v2900, %v2959
        %s2964 = sld [smem:[#allocation7 + $0x50]]
        %v2965 = vstv %s2964
        %v2966 = vmul.f32 %v2965, %v1612
        %v2967 = vmul.f32 %v2965, %v1613
        %v2968 = vmul.f32 %v2965, %v1614
        %v2972 = vrot.slane %v2966, 2
        %v2973 = vrot.slane %v2967, 2
        %v2974 = vsel %vm1903, %v2972, %v2973
        %v2975 = vrot.slane %v2968, 2
        %v2976 = vsel %vm1903, %v2973, %v2975
        %2977 = vrot.lane.b32.xlu0 %v2974, 126
        %v2978 = vpop.permute.xlu0 %2977
        %2979 = vrot.lane.b32.xlu0 %v2976, 126
        %v2980 = vpop.permute.xlu0 %2979
        %v2983 = vadd.f32 %v2920, %v2978
        %v2984 = vadd.f32 %v2921, %v2980
        %v2985 = vld [vmem:[%s274 + $0x4] sm:$0xff]
        %v2986 = vld [vmem:[%s274 + $0xc] sm:$0xff]
        %2989 = vrot.lane.b32.xlu0 %v2941, 2
        %v2990 = vpop.permute.xlu0 %2989
        %2991 = vrot.lane.b32.xlu0 %v2942, 2
        %v2992 = vpop.permute.xlu0 %2991
        %v2995 = vadd.f32 %v2985, %v2990
        %v2996 = vadd.f32 %v2986, %v2992
        %s2997 = sld [smem:[#allocation8]]
        %v2998 = vstv %s2997
        %v2999 = vadd.f32 %v2995, %v2998
        %v3000 = vadd.f32 %v2996, %v2998
        %v3001 = vmax.f32 %v2999, -1.0
        %v3002 = vmax.f32 %v3000, -1.0
        %v3003 = vmin.f32 %v3001, 1.0
        %v3004 = vmin.f32 %v3002, 1.0
        %3007 = vrot.lane.b32.xlu0 %v3003, 124
        %v3008 = vpop.permute.xlu0 %3007
        %3009 = vrot.lane.b32.xlu0 %v3004, 124
        %v3010 = vpop.permute.xlu0 %3009
        %vm3013 = vcmask 130048
        %3014 = vst.msk [vmem:[%s269] sm:$0xff] %vm3013, %v3008
        %3015 = vst.msk [vmem:[%s269 + $0x8] sm:$0xff] %vm3013, %v3010
        %v3016 = vld [vmem:[%s716 + $0x4] sm:$0xff]
        %v3017 = vld [vmem:[%s716 + $0xc] sm:$0xff]
        %3020 = vrot.lane.b32.xlu0 %v2962, 2
        %v3021 = vpop.permute.xlu0 %3020
        %3022 = vrot.lane.b32.xlu0 %v2963, 2
        %v3023 = vpop.permute.xlu0 %3022
        %v3026 = vadd.f32 %v3016, %v3021
        %v3027 = vadd.f32 %v3017, %v3023
        %s3028 = sld [smem:[#allocation8 + $0x1]]
        %v3029 = vstv %s3028
        %v3030 = vadd.f32 %v3026, %v3029
        %v3031 = vadd.f32 %v3027, %v3029
        %v3032 = vmax.f32 %v3030, -1.0
        %v3033 = vmax.f32 %v3031, -1.0
        %v3034 = vmin.f32 %v3032, 1.0
        %v3035 = vmin.f32 %v3033, 1.0
        %3038 = vrot.lane.b32.xlu0 %v3034, 124
        %v3039 = vpop.permute.xlu0 %3038
        %3040 = vrot.lane.b32.xlu0 %v3035, 124
        %v3041 = vpop.permute.xlu0 %3040
        %s3044 = scalar_lea.vmem %s269, 16 [#allocation10]
        %3045 = vst.msk [vmem:[%s3044] sm:$0xff] %vm3013, %v3039
        %3046 = vst.msk [vmem:[%s3044 + $0x8] sm:$0xff] %vm3013, %v3041
        %v3047 = vld [vmem:[%s1158 + $0x4] sm:$0xff]
        %v3048 = vld [vmem:[%s1158 + $0xc] sm:$0xff]
        %3051 = vrot.lane.b32.xlu0 %v2983, 2
        %v3052 = vpop.permute.xlu0 %3051
        %3053 = vrot.lane.b32.xlu0 %v2984, 2
        %v3054 = vpop.permute.xlu0 %3053
        %v3057 = vadd.f32 %v3047, %v3052
        %v3058 = vadd.f32 %v3048, %v3054
        %s3059 = sld [smem:[#allocation8 + $0x2]]
        %v3060 = vstv %s3059
        %v3061 = vadd.f32 %v3057, %v3060
        %v3062 = vadd.f32 %v3058, %v3060
        %v3063 = vmax.f32 %v3061, -1.0
        %v3064 = vmax.f32 %v3062, -1.0
        %v3065 = vmin.f32 %v3063, 1.0
        %v3066 = vmin.f32 %v3064, 1.0
        %3069 = vrot.lane.b32.xlu0 %v3065, 124
        %v3070 = vpop.permute.xlu0 %3069
        %3071 = vrot.lane.b32.xlu0 %v3066, 124
        %v3072 = vpop.permute.xlu0 %3071
        %s3075 = scalar_lea.vmem %s269, 32 [#allocation10]
        %3076 = vst.msk [vmem:[%s3075] sm:$0xff] %vm3013, %v3070
        %3077 = vst.msk [vmem:[%s3075 + $0x8] sm:$0xff] %vm3013, %v3072
        %s3078 = sand.u32 %s140, 1
        %s3079 = scalar_lea.sflag [#allocation3], %s3078
        %s3080 = sand.u32 %s140, 1
        %s3081 = smul.addr %s3080, 48
        %s3082 = scalar_lea.vmem [#allocation10], %s3081
        // Predicated region
        $region57: #{naive_ae_4decode_forward.3} parent=39 // pred_check
          %p3083 = pneg %p150
        $region58: #{naive_ae_4decode_forward.3} parent=39 // pred_check_branch
          %3085 = sbr.rel (%p3083) target = $region60
        $region59: #{naive_ae_4decode_forward.3} parent=39 // pred_region
          %3087 = vsyncadd %s3079, 0
          %s3088 = smul.addr %s22, 6
          %s3089 = smul.addr %s3088, 8
          %s3090 = scalar_lea.hbm %s5, %s3089
          %s3091 = sshll.u32 %s3082, 4
          %s3092 = int_to_ptr.vmem [resolvable:$true] %s3091
          %s3093 = sshll.u32 %s3090, 4
          %s3094 = int_to_ptr.hbm [resolvable:$true] %s3093
          %3099 = dma.vmem_to_hbm [thread:$0]  %s3092, 768, %s3094, %s3079, 128, 128, 8
        $region60: #{naive_ae_4decode_forward.3} parent=39 // pred_fallthru
          _
      $region40: #{naive_ae_4decode_forward.3} parent=5 // pred_fallthru
        _
      %p3100 = scmp.le.s32.totalorder 2, %s17
      // Predicated region
      $region61: #{naive_ae_4decode_forward.3} parent=5 // pred_check
        %p3101 = pneg %p3100
      $region62: #{naive_ae_4decode_forward.3} parent=5 // pred_check_branch
        %3103 = sbr.rel (%p3101) target = $region64
      $region63: #{naive_ae_4decode_forward.3} parent=5 // pred_region
        %s3104 = ssub.s32 %s17, 2
        // Predicated region
        $region65: #{naive_ae_4decode_forward.3} parent=63 // pred_check
          %p3105 = pneg %p156
        $region66: #{naive_ae_4decode_forward.3} parent=63 // pred_check_branch
          %3107 = sbr.rel (%p3105) target = $region68
        $region67: #{naive_ae_4decode_forward.3} parent=63 // pred_region
          %s3108 = sand.u32 %s141, 1
          %s3109 = scalar_lea.sflag [#allocation3], %s3108
          %s3110 = sand.u32 %s141, 1
          %s3111 = smul.addr %s3110, 48
          %s3112 = scalar_lea.vmem [#allocation10], %s3111
          %3114 = dma.done %s3109, 768
        $region68: #{naive_ae_4decode_forward.3} parent=63 // pred_fallthru
          _
      $region64: #{naive_ae_4decode_forward.3} parent=5 // pred_fallthru
        _
    $region6: #{naive_ae_4decode_forward.3} parent=1 // loop_footer
      %s21 = sadd.s32 1, %s17
    $region7: #{naive_ae_4decode_forward.3} parent=1 // loop_footer_branch
      %16 = sbr.rel target = $region3
    $region8: #{naive_ae_4decode_forward.3} parent=1 // loop_exit
      _
    %3115 = vsyncpa [#allocation3], 1
    %s3116 = scalar_lea.sflag [#allocation3], 1
    %3117 = vsyncpa %s3116, 1
    %3118 = vsyncpa [#allocation4], 1
    %s3119 = scalar_lea.sflag [#allocation4], 1
    %3120 = vsyncpa %s3119, 1
    %3121 = vsyncpa [#allocation6], 1
    %3122 = vsyncpa [#allocation9], 1

</llo_original>
